<compile_context>
chip_gen: v7x
topology: tpu7x:2x2x1
jax: 0.10.0
libtpu: 0.0.40
codegen_flags: <defaults>
</compile_context>

<pallas_src>
import functools

import jax
import jax.numpy as jnp
from jax.experimental import pallas as pl
from jax.experimental.pallas import tpu as pltpu

EPS = 1e-4  # matches epsilon=0.0001 in the PyTorch module


# ---------------------------------------------------------------------------
# Fused kernel: attention -> dilated conv (9 per-tap GEMMs) -> weighted sum
#   grid = (batch_tiles, L); output block resident across the (innermost) L.
# ---------------------------------------------------------------------------
def _bifpn_fused_kernel(x_ref, w1_ref, b1_ref, w2_ref, b2_ref, cw_ref, cb_ref,
                        out_ref, xp_ref, *, H, W, C, nb):
    l = pl.program_id(1)

    x = x_ref[0]                                                  # (nb,H,W,C) f32

    # --- AttentionModule: global avg+max pool, two 1x1 convs, sigmoid scale.
    # TODO(synk): for large production H,W hoist this global pool + sigmoid into
    # a tiny pre-pass producing (L,N,C) scales so the main kernel can tile H/W.
    pooled = jnp.mean(x, axis=(1, 2)) + jnp.max(x, axis=(1, 2))   # (nb, C)
    h = jnp.dot(pooled, w1_ref[l],
                preferred_element_type=jnp.float32) + b1_ref[l]   # (nb, Chp)
    s = jnp.dot(h, w2_ref[l],
                preferred_element_type=jnp.float32) + b2_ref[l]   # (nb, C)
    att = x * jax.nn.sigmoid(s)[:, None, None, :]                 # (nb,H,W,C)

    # --- Zero-padded attended map lives only in a bf16 VMEM scratch.
    #     Only the 4 border strips ever need zeroing (once per batch tile);
    #     the interior is fully rewritten on every l.
    @pl.when(l == 0)
    def _():
        z_row = jnp.zeros((nb, 2, W + 4, C), jnp.bfloat16)
        z_col = jnp.zeros((nb, H, 2, C), jnp.bfloat16)
        xp_ref[:, 0:2, :, :] = z_row
        xp_ref[:, H + 2:H + 4, :, :] = z_row
        xp_ref[:, 2:H + 2, 0:2, :] = z_col
        xp_ref[:, 2:H + 2, W + 2:W + 4, :] = z_col

    xp_ref[:, 2:2 + H, 2:2 + W, :] = att.astype(jnp.bfloat16)

    # --- DilatedConvModule: 3x3, dilation=2, padding=2 as 9 per-tap K=C GEMMs
    #     (bf16 x bf16 -> f32 accumulation). No im2col concat / 9C matrix.
    # TODO(synk): try pltpu.roll (XLU slot) for the W-direction +/-2 shifts and
    # tap pairing (K=2C) on v6e/v7x if the vld/copy path shows up in profiles.
    acc = jnp.zeros((nb * H * W, C), jnp.float32)
    for tap in range(9):
        kh, kw = tap // 3, tap % 3
        patch = xp_ref[:, 2 * kh:2 * kh + H, 2 * kw:2 * kw + W, :]  # (nb,H,W,C)
        acc = acc + jnp.dot(patch.reshape(nb * H * W, C),
                            cw_ref[l * 9 + tap],
                            preferred_element_type=jnp.float32)
    conv = acc.reshape(nb, H, W, C) + cb_ref[l]        # cb already nw-scaled

    # --- AdaptiveWeighting + sum over L: nw is folded into cw/cb in the
    #     wrapper, so this is a plain accumulation into the resident output.
    @pl.when(l == 0)
    def _():
        out_ref[...] = conv

    @pl.when(l != 0)
    def _():
        out_ref[...] = out_ref[...] + conv


# ---------------------------------------------------------------------------
# Wrapper
# ---------------------------------------------------------------------------
def _auto_batch_tile(N, H, W, C):
    """Largest divisor of N that (a) keeps >= 2 tiles on the parallel axis when
    N >= 2 (v7x dual-TC) and (b) keeps the big per-step f32 tensors ~< 8 MiB."""
    per_batch = H * W * C * 4 * 8          # x, att, acc, conv, out + headroom
    cap = max(1, (8 << 20) // per_batch)
    best = 1
    for nb in range(1, N + 1):
        if N % nb or nb > cap:
            continue
        if N >= 2 and N // nb < 2:
            continue
        best = nb
    return best


def enhanced_bifpn(x, params, *, batch_tile=None):
    """x: (L, N, H, W, C) float32; params = (w1, b1, w2, b2, cw, cb, wvec)."""
    L, N, H, W, C = x.shape
    Ch = C // 2
    w1, b1, w2, b2, cw, cb, wvec = params

    nb = _auto_batch_tile(N, H, W, C) if batch_tile is None else batch_tile
    # TODO(synk): remainder batch tiles (pl.cdiv + masking) are not handled.
    assert N % nb == 0
    Hp, Wp = H + 4, W + 4

    # Fast-normalized fusion weights (matches the module: no ReLU on `weight`).
    nw = (wvec / (jnp.sum(wvec) + EPS)).astype(jnp.float32)

    # Pad attention hidden dim to a lane-dense multiple of 128 (exact: the
    # extra hidden units are 0 and multiply zero rows of w2).
    Chp = ((max(Ch, 1) + 127) // 128) * 128
    w1p = jnp.zeros((L, C, Chp), jnp.float32).at[:, :, :Ch].set(w1)
    b1p = jnp.zeros((L, 1, Chp), jnp.float32).at[:, :, :Ch].set(b1)
    w2p = jnp.zeros((L, Chp, C), jnp.float32).at[:, :Ch, :].set(w2)

    # Fold nw into the conv weight (f32 scale, then bf16 cast) and bias.
    cw_s = (cw.reshape(L, 9, C, C) * nw[:, None, None, None]).astype(jnp.bfloat16)
    cw_s = cw_s.reshape(L * 9, C, C)
    cb_s = (cb * nw[:, None, None]).astype(jnp.float32)          # (L, 1, C)

    # Explicit VMEM budget (v7x: 64 MiB physical, 32 MiB scoped default).
    weight_bytes = (w1p.size + b1p.size + w2p.size + b2.size + cb_s.size) * 4 \
        + cw_s.size * 2
    tile_f32 = nb * H * W * C * 4
    vmem_needed = weight_bytes + 4 * tile_f32          # 2x in + 2x out buffers
    vmem_needed += nb * Hp * Wp * C * 2                # xp scratch (bf16)
    vmem_needed += 4 * tile_f32                        # att/acc/conv live values
    vmem_limit = int(min(64 << 20, max(16 << 20, 2 * vmem_needed)))

    kernel = functools.partial(_bifpn_fused_kernel, H=H, W=W, C=C, nb=nb)

    return pl.pallas_call(
        kernel,
        out_shape=jax.ShapeDtypeStruct((N, H, W, C), jnp.float32),
        grid=(N // nb, L),
        in_specs=[
            # streamed activations: one (level, batch-tile) block per grid step
            pl.BlockSpec((1, nb, H, W, C), lambda t, l: (l, t, 0, 0, 0)),
            # parameters: constant block index -> DMA'd exactly once, resident
            # in VMEM across the whole grid, indexed with [l] inside the kernel
            pl.BlockSpec((L, C, Chp), lambda t, l: (0, 0, 0)),     # w1 (padded)
            pl.BlockSpec((L, 1, Chp), lambda t, l: (0, 0, 0)),     # b1 (padded)
            pl.BlockSpec((L, Chp, C), lambda t, l: (0, 0, 0)),     # w2 (padded)
            pl.BlockSpec((L, 1, C), lambda t, l: (0, 0, 0)),       # b2
            pl.BlockSpec((L * 9, C, C), lambda t, l: (0, 0, 0)),   # nw*cw, bf16
            pl.BlockSpec((L, 1, C), lambda t, l: (0, 0, 0)),       # nw*cb
        ],
        out_specs=pl.BlockSpec((nb, H, W, C), lambda t, l: (t, 0, 0, 0)),
        scratch_shapes=[pltpu.VMEM((nb, Hp, Wp, C), jnp.bfloat16)],
        compiler_params=pltpu.CompilerParams(
            dimension_semantics=("parallel", "arbitrary"),
            vmem_limit_bytes=vmem_limit),
    )(x, w1p, b1p, w2p, b2, cw_s, cb_s)


# ---------------------------------------------------------------------------
# Pure-JAX reference (same NHWC layout, same bf16 conv precision) for checking
# ---------------------------------------------------------------------------
def reference(x, params):
    L, N, H, W, C = x.shape
    w1, b1, w2, b2, cw, cb, wvec = params
    outs = []
    for i in range(L):
        xi = x[i]
        pooled = jnp.mean(xi, axis=(1, 2)) + jnp.max(xi, axis=(1, 2))
        h = pooled @ w1[i] + b1[i, 0]
        s = h @ w2[i] + b2[i, 0]
        att = xi * jax.nn.sigmoid(s)[:, None, None, :]
        conv = jax.lax.conv_general_dilated(
            att.astype(jnp.bfloat16), cw[i].astype(jnp.bfloat16),
            window_strides=(1, 1), padding=((2, 2), (2, 2)),
            rhs_dilation=(2, 2),
            dimension_numbers=("NHWC", "HWIO", "NHWC"),
            preferred_element_type=jnp.float32) + cb[i, 0]
        outs.append(conv)
    nw = wvec / (jnp.sum(wvec) + EPS)
    res = jnp.zeros_like(outs[0])
    for i in range(L):
        res = res + nw[i] * outs[i]
    return res


if __name__ == "__main__":
    # length=3 feature maps, in_channels=128 (lane-dense), batch=2, spatial=16x16
    L, N, C, H, W = 3, 2, 128, 16, 16
    Ch = C // 2

    key = jax.random.PRNGKey(0)
    ks = jax.random.split(key, 7)
    x = jax.random.normal(ks[0], (L, N, H, W, C), jnp.float32)

    # deterministic parameter init (shapes follow the PyTorch module __init__)
    w1 = jax.random.normal(ks[1], (L, C, Ch), jnp.float32) * 0.1    # conv1 1x1 (C -> C/2)
    b1 = jax.random.normal(ks[2], (L, 1, Ch), jnp.float32) * 0.1
    w2 = jax.random.normal(ks[3], (L, Ch, C), jnp.float32) * 0.1    # conv2 1x1 (C/2 -> C)
    b2 = jax.random.normal(ks[4], (L, 1, C), jnp.float32) * 0.1
    cw = jax.random.normal(ks[5], (L, 3, 3, C, C), jnp.float32) * 0.05  # dilated 3x3, HWIO
    cb = jax.random.normal(ks[6], (L, 1, C), jnp.float32) * 0.1
    wvec = jnp.ones((L,), jnp.float32)          # nn.Parameter(torch.ones(length))

    params = (w1, b1, w2, b2, cw, cb, wvec)

    out = jax.block_until_ready(enhanced_bifpn(x, params))
    ref = jax.block_until_ready(reference(x, params))

    assert out.shape == (N, H, W, C)
    max_err = float(jnp.max(jnp.abs(out - ref)))
    assert jnp.allclose(out, ref, atol=3e-2, rtol=3e-2), f"max_err={max_err}"

    print("KERNEL_OK")
</pallas_src>

<mosaic_0001>
module attributes {stable_mosaic.version = 11 : i64} {
  func.func @_bifpn_fused_kernel(%arg0: i32, %arg1: i32, %arg2: memref<1x1x16x16x128xf32, #tpu.memory_space<vmem>>, %arg3: memref<3x128x128xf32, #tpu.memory_space<vmem>>, %arg4: memref<3x1x128xf32, #tpu.memory_space<vmem>>, %arg5: memref<3x128x128xf32, #tpu.memory_space<vmem>>, %arg6: memref<3x1x128xf32, #tpu.memory_space<vmem>>, %arg7: memref<27x128x128xbf16, #tpu.memory_space<vmem>>, %arg8: memref<3x1x128xf32, #tpu.memory_space<vmem>>, %arg9: memref<1x16x16x128xf32, #tpu.memory_space<vmem>>, %arg10: memref<1x20x20x128xbf16, #tpu.memory_space<vmem>>) attributes {dimension_semantics = [#tpu.dimension_semantics<parallel>, #tpu.dimension_semantics<arbitrary>], iteration_bounds = array<i64: 2, 3>, scalar_prefetch = 0 : i64, scratch_operands = 1 : i64, tpu.core_type = #tpu.core_type<tc>, window_params = [{transform_indices = @transform_0, window_bounds = array<i64: 1, 1, 16, 16, 128>}, {pipeline_mode = #tpu.pipeline_mode<synchronous>, transform_indices = @transform_1, window_bounds = array<i64: 3, 128, 128>}, {pipeline_mode = #tpu.pipeline_mode<synchronous>, transform_indices = @transform_2, window_bounds = array<i64: 3, 1, 128>}, {pipeline_mode = #tpu.pipeline_mode<synchronous>, transform_indices = @transform_3, window_bounds = array<i64: 3, 128, 128>}, {pipeline_mode = #tpu.pipeline_mode<synchronous>, transform_indices = @transform_4, window_bounds = array<i64: 3, 1, 128>}, {pipeline_mode = #tpu.pipeline_mode<synchronous>, transform_indices = @transform_5, window_bounds = array<i64: 27, 128, 128>}, {pipeline_mode = #tpu.pipeline_mode<synchronous>, transform_indices = @transform_6, window_bounds = array<i64: 3, 1, 128>}, {transform_indices = @transform_7, window_bounds = array<i64: 1, 16, 16, 128>}]} {
    %c0 = arith.constant 0 : index
    %c0_0 = arith.constant 0 : index
    %c0_1 = arith.constant 0 : index
    %c0_2 = arith.constant 0 : index
    %c0_3 = arith.constant 0 : index
    %0 = vector.load %arg2[%c0, %c0_0, %c0_1, %c0_2, %c0_3] : memref<1x1x16x16x128xf32, #tpu.memory_space<vmem>>, vector<1x1x16x16x128xf32>
    %1 = vector.shape_cast %0 : vector<1x1x16x16x128xf32> to vector<1x16x16x128xf32>
    %cst = arith.constant dense<0.000000e+00> : vector<1x128xf32>
    %2 = vector.multi_reduction <add>, %1, %cst [1, 2] : vector<1x16x16x128xf32> to vector<1x128xf32>
    %cst_4 = arith.constant 2.560000e+02 : f32
    %3 = vector.broadcast %cst_4 : f32 to vector<1x128xf32>
    %4 = arith.divf %2, %3 : vector<1x128xf32>
    %cst_5 = arith.constant dense<0xFF800000> : vector<1x128xf32>
    %5 = vector.multi_reduction <maximumf>, %1, %cst_5 [1, 2] : vector<1x16x16x128xf32> to vector<1x128xf32>
    %6 = arith.addf %4, %5 : vector<1x128xf32>
    %7 = arith.index_cast %arg1 : i32 to index
    %c0_6 = arith.constant 0 : index
    %c0_7 = arith.constant 0 : index
    %8 = vector.load %arg3[%7, %c0_6, %c0_7] : memref<3x128x128xf32, #tpu.memory_space<vmem>>, vector<1x128x128xf32>
    %9 = vector.shape_cast %8 : vector<1x128x128xf32> to vector<128x128xf32>
    %cst_8 = arith.constant dense<0.000000e+00> : vector<1x128xf32>
    %10 = tpu.matmul %6, %9, %cst_8 {dimension_numbers = #tpu.dot_dimension_numbers<[1], [0], [0], [1], [0, 0, 1, 1], [], []>} : vector<1x128xf32>, vector<128x128xf32>, vector<1x128xf32> -> vector<1x128xf32>
    %11 = arith.index_cast %arg1 : i32 to index
    %c0_9 = arith.constant 0 : index
    %c0_10 = arith.constant 0 : index
    %12 = vector.load %arg4[%11, %c0_9, %c0_10] : memref<3x1x128xf32, #tpu.memory_space<vmem>>, vector<1x1x128xf32>
    %13 = vector.shape_cast %12 : vector<1x1x128xf32> to vector<1x128xf32>
    %14 = arith.addf %10, %13 : vector<1x128xf32>
    %15 = arith.index_cast %arg1 : i32 to index
    %c0_11 = arith.constant 0 : index
    %c0_12 = arith.constant 0 : index
    %16 = vector.load %arg5[%15, %c0_11, %c0_12] : memref<3x128x128xf32, #tpu.memory_space<vmem>>, vector<1x128x128xf32>
    %17 = vector.shape_cast %16 : vector<1x128x128xf32> to vector<128x128xf32>
    %cst_13 = arith.constant dense<0.000000e+00> : vector<1x128xf32>
    %18 = tpu.matmul %14, %17, %cst_13 {dimension_numbers = #tpu.dot_dimension_numbers<[1], [0], [0], [1], [0, 0, 1, 1], [], []>} : vector<1x128xf32>, vector<128x128xf32>, vector<1x128xf32> -> vector<1x128xf32>
    %19 = arith.index_cast %arg1 : i32 to index
    %c0_14 = arith.constant 0 : index
    %c0_15 = arith.constant 0 : index
    %20 = vector.load %arg6[%19, %c0_14, %c0_15] : memref<3x1x128xf32, #tpu.memory_space<vmem>>, vector<1x1x128xf32>
    %21 = vector.shape_cast %20 : vector<1x1x128xf32> to vector<1x128xf32>
    %22 = arith.addf %18, %21 : vector<1x128xf32>
    %23 = arith.negf %22 : vector<1x128xf32>
    %24 = math.exp %23 : vector<1x128xf32>
    %cst_16 = arith.constant 1.000000e+00 : f32
    %25 = vector.broadcast %cst_16 : f32 to vector<1x128xf32>
    %26 = arith.addf %25, %24 : vector<1x128xf32>
    %27 = arith.divf %25, %26 : vector<1x128xf32>
    %28 = vector.shape_cast %27 : vector<1x128xf32> to vector<1x1x1x128xf32>
    %29 = vector.broadcast %28 : vector<1x1x1x128xf32> to vector<1x16x16x128xf32>
    %30 = arith.mulf %1, %29 : vector<1x16x16x128xf32>
    %c0_i32 = arith.constant 0 : i32
    %31 = arith.cmpi eq, %arg1, %c0_i32 : i32
    %32 = arith.extui %31 : i1 to i32
    %c0_i32_17 = arith.constant 0 : i32
    %33 = arith.cmpi ne, %32, %c0_i32_17 : i32
    scf.if %33 {
      %cst_99 = arith.constant 0.000000e+00 : bf16
      %131 = vector.broadcast %cst_99 : bf16 to vector<1x2x20x128xbf16>
      %cst_100 = arith.constant 0.000000e+00 : bf16
      %132 = vector.broadcast %cst_100 : bf16 to vector<1x16x2x128xbf16>
      %c0_101 = arith.constant 0 : index
      %c0_102 = arith.constant 0 : index
      %c0_103 = arith.constant 0 : index
      %c0_104 = arith.constant 0 : index
      %133 = vector.load %arg10[%c0_101, %c0_102, %c0_103, %c0_104] : memref<1x20x20x128xbf16, #tpu.memory_space<vmem>>, vector<1x2x20x128xbf16>
      tpu.vector_store %arg10[%c0_101, %c0_102, %c0_103, %c0_104], %131 {strides = array<i32>} : memref<1x20x20x128xbf16, #tpu.memory_space<vmem>>, vector<1x2x20x128xbf16>,
      %c0_105 = arith.constant 0 : index
      %c18 = arith.constant 18 : index
      %c0_106 = arith.constant 0 : index
      %c0_107 = arith.constant 0 : index
      %134 = vector.load %arg10[%c0_105, %c18, %c0_106, %c0_107] : memref<1x20x20x128xbf16, #tpu.memory_space<vmem>>, vector<1x2x20x128xbf16>
      tpu.vector_store %arg10[%c0_105, %c18, %c0_106, %c0_107], %131 {strides = array<i32>} : memref<1x20x20x128xbf16, #tpu.memory_space<vmem>>, vector<1x2x20x128xbf16>,
      %c0_108 = arith.constant 0 : index
      %c2_109 = arith.constant 2 : index
      %c0_110 = arith.constant 0 : index
      %c0_111 = arith.constant 0 : index
      %135 = vector.load %arg10[%c0_108, %c2_109, %c0_110, %c0_111] : memref<1x20x20x128xbf16, #tpu.memory_space<vmem>>, vector<1x16x2x128xbf16>
      tpu.vector_store %arg10[%c0_108, %c2_109, %c0_110, %c0_111], %132 {strides = array<i32>} : memref<1x20x20x128xbf16, #tpu.memory_space<vmem>>, vector<1x16x2x128xbf16>,
      %c0_112 = arith.constant 0 : index
      %c2_113 = arith.constant 2 : index
      %c18_114 = arith.constant 18 : index
      %c0_115 = arith.constant 0 : index
      %136 = vector.load %arg10[%c0_112, %c2_113, %c18_114, %c0_115] : memref<1x20x20x128xbf16, #tpu.memory_space<vmem>>, vector<1x16x2x128xbf16>
      tpu.vector_store %arg10[%c0_112, %c2_113, %c18_114, %c0_115], %132 {strides = array<i32>} : memref<1x20x20x128xbf16, #tpu.memory_space<vmem>>, vector<1x16x2x128xbf16>,
    } else {
    }
    %34 = arith.truncf %30 : vector<1x16x16x128xf32> to vector<1x16x16x128xbf16>
    %c0_18 = arith.constant 0 : index
    %c2 = arith.constant 2 : index
    %c2_19 = arith.constant 2 : index
    %c0_20 = arith.constant 0 : index
    %35 = vector.load %arg10[%c0_18, %c2, %c2_19, %c0_20] : memref<1x20x20x128xbf16, #tpu.memory_space<vmem>>, vector<1x16x16x128xbf16>
    tpu.vector_store %arg10[%c0_18, %c2, %c2_19, %c0_20], %34 {strides = array<i32>} : memref<1x20x20x128xbf16, #tpu.memory_space<vmem>>, vector<1x16x16x128xbf16>,
    %cst_21 = arith.constant 0.000000e+00 : f32
    %36 = vector.broadcast %cst_21 : f32 to vector<256x128xf32>
    %c0_22 = arith.constant 0 : index
    %c0_23 = arith.constant 0 : index
    %c0_24 = arith.constant 0 : index
    %c0_25 = arith.constant 0 : index
    %37 = vector.load %arg10[%c0_22, %c0_23, %c0_24, %c0_25] : memref<1x20x20x128xbf16, #tpu.memory_space<vmem>>, vector<1x16x16x128xbf16>
    %38 = vector.shape_cast %37 : vector<1x16x16x128xbf16> to vector<256x128xbf16>
    %c9_i32 = arith.constant 9 : i32
    %39 = arith.muli %arg1, %c9_i32 : i32
    %c0_i32_26 = arith.constant 0 : i32
    %40 = arith.addi %39, %c0_i32_26 : i32
    %41 = arith.index_cast %40 : i32 to index
    %c0_27 = arith.constant 0 : index
    %c0_28 = arith.constant 0 : index
    %42 = vector.load %arg7[%41, %c0_27, %c0_28] : memref<27x128x128xbf16, #tpu.memory_space<vmem>>, vector<1x128x128xbf16>
    %43 = vector.shape_cast %42 : vector<1x128x128xbf16> to vector<128x128xbf16>
    %cst_29 = arith.constant dense<0.000000e+00> : vector<256x128xf32>
    %44 = tpu.matmul %38, %43, %cst_29 {dimension_numbers = #tpu.dot_dimension_numbers<[1], [0], [0], [1], [0, 0, 1, 1], [], []>} : vector<256x128xbf16>, vector<128x128xbf16>, vector<256x128xf32> -> vector<256x128xf32>
    %45 = arith.addf %36, %44 : vector<256x128xf32>
    %c0_30 = arith.constant 0 : index
    %c0_31 = arith.constant 0 : index
    %c2_32 = arith.constant 2 : index
    %c0_33 = arith.constant 0 : index
    %46 = vector.load %arg10[%c0_30, %c0_31, %c2_32, %c0_33] : memref<1x20x20x128xbf16, #tpu.memory_space<vmem>>, vector<1x16x16x128xbf16>
    %47 = vector.shape_cast %46 : vector<1x16x16x128xbf16> to vector<256x128xbf16>
    %c9_i32_34 = arith.constant 9 : i32
    %48 = arith.muli %arg1, %c9_i32_34 : i32
    %c1_i32 = arith.constant 1 : i32
    %49 = arith.addi %48, %c1_i32 : i32
    %50 = arith.index_cast %49 : i32 to index
    %c0_35 = arith.constant 0 : index
    %c0_36 = arith.constant 0 : index
    %51 = vector.load %arg7[%50, %c0_35, %c0_36] : memref<27x128x128xbf16, #tpu.memory_space<vmem>>, vector<1x128x128xbf16>
    %52 = vector.shape_cast %51 : vector<1x128x128xbf16> to vector<128x128xbf16>
    %cst_37 = arith.constant dense<0.000000e+00> : vector<256x128xf32>
    %53 = tpu.matmul %47, %52, %cst_37 {dimension_numbers = #tpu.dot_dimension_numbers<[1], [0], [0], [1], [0, 0, 1, 1], [], []>} : vector<256x128xbf16>, vector<128x128xbf16>, vector<256x128xf32> -> vector<256x128xf32>
    %54 = arith.addf %45, %53 : vector<256x128xf32>
    %c0_38 = arith.constant 0 : index
    %c0_39 = arith.constant 0 : index
    %c4 = arith.constant 4 : index
    %c0_40 = arith.constant 0 : index
    %55 = vector.load %arg10[%c0_38, %c0_39, %c4, %c0_40] : memref<1x20x20x128xbf16, #tpu.memory_space<vmem>>, vector<1x16x16x128xbf16>
    %56 = vector.shape_cast %55 : vector<1x16x16x128xbf16> to vector<256x128xbf16>
    %c9_i32_41 = arith.constant 9 : i32
    %57 = arith.muli %arg1, %c9_i32_41 : i32
    %c2_i32 = arith.constant 2 : i32
    %58 = arith.addi %57, %c2_i32 : i32
    %59 = arith.index_cast %58 : i32 to index
    %c0_42 = arith.constant 0 : index
    %c0_43 = arith.constant 0 : index
    %60 = vector.load %arg7[%59, %c0_42, %c0_43] : memref<27x128x128xbf16, #tpu.memory_space<vmem>>, vector<1x128x128xbf16>
    %61 = vector.shape_cast %60 : vector<1x128x128xbf16> to vector<128x128xbf16>
    %cst_44 = arith.constant dense<0.000000e+00> : vector<256x128xf32>
    %62 = tpu.matmul %56, %61, %cst_44 {dimension_numbers = #tpu.dot_dimension_numbers<[1], [0], [0], [1], [0, 0, 1, 1], [], []>} : vector<256x128xbf16>, vector<128x128xbf16>, vector<256x128xf32> -> vector<256x128xf32>
    %63 = arith.addf %54, %62 : vector<256x128xf32>
    %c0_45 = arith.constant 0 : index
    %c2_46 = arith.constant 2 : index
    %c0_47 = arith.constant 0 : index
    %c0_48 = arith.constant 0 : index
    %64 = vector.load %arg10[%c0_45, %c2_46, %c0_47, %c0_48] : memref<1x20x20x128xbf16, #tpu.memory_space<vmem>>, vector<1x16x16x128xbf16>
    %65 = vector.shape_cast %64 : vector<1x16x16x128xbf16> to vector<256x128xbf16>
    %c9_i32_49 = arith.constant 9 : i32
    %66 = arith.muli %arg1, %c9_i32_49 : i32
    %c3_i32 = arith.constant 3 : i32
    %67 = arith.addi %66, %c3_i32 : i32
    %68 = arith.index_cast %67 : i32 to index
    %c0_50 = arith.constant 0 : index
    %c0_51 = arith.constant 0 : index
    %69 = vector.load %arg7[%68, %c0_50, %c0_51] : memref<27x128x128xbf16, #tpu.memory_space<vmem>>, vector<1x128x128xbf16>
    %70 = vector.shape_cast %69 : vector<1x128x128xbf16> to vector<128x128xbf16>
    %cst_52 = arith.constant dense<0.000000e+00> : vector<256x128xf32>
    %71 = tpu.matmul %65, %70, %cst_52 {dimension_numbers = #tpu.dot_dimension_numbers<[1], [0], [0], [1], [0, 0, 1, 1], [], []>} : vector<256x128xbf16>, vector<128x128xbf16>, vector<256x128xf32> -> vector<256x128xf32>
    %72 = arith.addf %63, %71 : vector<256x128xf32>
    %c0_53 = arith.constant 0 : index
    %c2_54 = arith.constant 2 : index
    %c2_55 = arith.constant 2 : index
    %c0_56 = arith.constant 0 : index
    %73 = vector.load %arg10[%c0_53, %c2_54, %c2_55, %c0_56] : memref<1x20x20x128xbf16, #tpu.memory_space<vmem>>, vector<1x16x16x128xbf16>
    %74 = vector.shape_cast %73 : vector<1x16x16x128xbf16> to vector<256x128xbf16>
    %c9_i32_57 = arith.constant 9 : i32
    %75 = arith.muli %arg1, %c9_i32_57 : i32
    %c4_i32 = arith.constant 4 : i32
    %76 = arith.addi %75, %c4_i32 : i32
    %77 = arith.index_cast %76 : i32 to index
    %c0_58 = arith.constant 0 : index
    %c0_59 = arith.constant 0 : index
    %78 = vector.load %arg7[%77, %c0_58, %c0_59] : memref<27x128x128xbf16, #tpu.memory_space<vmem>>, vector<1x128x128xbf16>
    %79 = vector.shape_cast %78 : vector<1x128x128xbf16> to vector<128x128xbf16>
    %cst_60 = arith.constant dense<0.000000e+00> : vector<256x128xf32>
    %80 = tpu.matmul %74, %79, %cst_60 {dimension_numbers = #tpu.dot_dimension_numbers<[1], [0], [0], [1], [0, 0, 1, 1], [], []>} : vector<256x128xbf16>, vector<128x128xbf16>, vector<256x128xf32> -> vector<256x128xf32>
    %81 = arith.addf %72, %80 : vector<256x128xf32>
    %c0_61 = arith.constant 0 : index
    %c2_62 = arith.constant 2 : index
    %c4_63 = arith.constant 4 : index
    %c0_64 = arith.constant 0 : index
    %82 = vector.load %arg10[%c0_61, %c2_62, %c4_63, %c0_64] : memref<1x20x20x128xbf16, #tpu.memory_space<vmem>>, vector<1x16x16x128xbf16>
    %83 = vector.shape_cast %82 : vector<1x16x16x128xbf16> to vector<256x128xbf16>
    %c9_i32_65 = arith.constant 9 : i32
    %84 = arith.muli %arg1, %c9_i32_65 : i32
    %c5_i32 = arith.constant 5 : i32
    %85 = arith.addi %84, %c5_i32 : i32
    %86 = arith.index_cast %85 : i32 to index
    %c0_66 = arith.constant 0 : index
    %c0_67 = arith.constant 0 : index
    %87 = vector.load %arg7[%86, %c0_66, %c0_67] : memref<27x128x128xbf16, #tpu.memory_space<vmem>>, vector<1x128x128xbf16>
    %88 = vector.shape_cast %87 : vector<1x128x128xbf16> to vector<128x128xbf16>
    %cst_68 = arith.constant dense<0.000000e+00> : vector<256x128xf32>
    %89 = tpu.matmul %83, %88, %cst_68 {dimension_numbers = #tpu.dot_dimension_numbers<[1], [0], [0], [1], [0, 0, 1, 1], [], []>} : vector<256x128xbf16>, vector<128x128xbf16>, vector<256x128xf32> -> vector<256x128xf32>
    %90 = arith.addf %81, %89 : vector<256x128xf32>
    %c0_69 = arith.constant 0 : index
    %c4_70 = arith.constant 4 : index
    %c0_71 = arith.constant 0 : index
    %c0_72 = arith.constant 0 : index
    %91 = vector.load %arg10[%c0_69, %c4_70, %c0_71, %c0_72] : memref<1x20x20x128xbf16, #tpu.memory_space<vmem>>, vector<1x16x16x128xbf16>
    %92 = vector.shape_cast %91 : vector<1x16x16x128xbf16> to vector<256x128xbf16>
    %c9_i32_73 = arith.constant 9 : i32
    %93 = arith.muli %arg1, %c9_i32_73 : i32
    %c6_i32 = arith.constant 6 : i32
    %94 = arith.addi %93, %c6_i32 : i32
    %95 = arith.index_cast %94 : i32 to index
    %c0_74 = arith.constant 0 : index
    %c0_75 = arith.constant 0 : index
    %96 = vector.load %arg7[%95, %c0_74, %c0_75] : memref<27x128x128xbf16, #tpu.memory_space<vmem>>, vector<1x128x128xbf16>
    %97 = vector.shape_cast %96 : vector<1x128x128xbf16> to vector<128x128xbf16>
    %cst_76 = arith.constant dense<0.000000e+00> : vector<256x128xf32>
    %98 = tpu.matmul %92, %97, %cst_76 {dimension_numbers = #tpu.dot_dimension_numbers<[1], [0], [0], [1], [0, 0, 1, 1], [], []>} : vector<256x128xbf16>, vector<128x128xbf16>, vector<256x128xf32> -> vector<256x128xf32>
    %99 = arith.addf %90, %98 : vector<256x128xf32>
    %c0_77 = arith.constant 0 : index
    %c4_78 = arith.constant 4 : index
    %c2_79 = arith.constant 2 : index
    %c0_80 = arith.constant 0 : index
    %100 = vector.load %arg10[%c0_77, %c4_78, %c2_79, %c0_80] : memref<1x20x20x128xbf16, #tpu.memory_space<vmem>>, vector<1x16x16x128xbf16>
    %101 = vector.shape_cast %100 : vector<1x16x16x128xbf16> to vector<256x128xbf16>
    %c9_i32_81 = arith.constant 9 : i32
    %102 = arith.muli %arg1, %c9_i32_81 : i32
    %c7_i32 = arith.constant 7 : i32
    %103 = arith.addi %102, %c7_i32 : i32
    %104 = arith.index_cast %103 : i32 to index
    %c0_82 = arith.constant 0 : index
    %c0_83 = arith.constant 0 : index
    %105 = vector.load %arg7[%104, %c0_82, %c0_83] : memref<27x128x128xbf16, #tpu.memory_space<vmem>>, vector<1x128x128xbf16>
    %106 = vector.shape_cast %105 : vector<1x128x128xbf16> to vector<128x128xbf16>
    %cst_84 = arith.constant dense<0.000000e+00> : vector<256x128xf32>
    %107 = tpu.matmul %101, %106, %cst_84 {dimension_numbers = #tpu.dot_dimension_numbers<[1], [0], [0], [1], [0, 0, 1, 1], [], []>} : vector<256x128xbf16>, vector<128x128xbf16>, vector<256x128xf32> -> vector<256x128xf32>
    %108 = arith.addf %99, %107 : vector<256x128xf32>
    %c0_85 = arith.constant 0 : index
    %c4_86 = arith.constant 4 : index
    %c4_87 = arith.constant 4 : index
    %c0_88 = arith.constant 0 : index
    %109 = vector.load %arg10[%c0_85, %c4_86, %c4_87, %c0_88] : memref<1x20x20x128xbf16, #tpu.memory_space<vmem>>, vector<1x16x16x128xbf16>
    %110 = vector.shape_cast %109 : vector<1x16x16x128xbf16> to vector<256x128xbf16>
    %c9_i32_89 = arith.constant 9 : i32
    %111 = arith.muli %arg1, %c9_i32_89 : i32
    %c8_i32 = arith.constant 8 : i32
    %112 = arith.addi %111, %c8_i32 : i32
    %113 = arith.index_cast %112 : i32 to index
    %c0_90 = arith.constant 0 : index
    %c0_91 = arith.constant 0 : index
    %114 = vector.load %arg7[%113, %c0_90, %c0_91] : memref<27x128x128xbf16, #tpu.memory_space<vmem>>, vector<1x128x128xbf16>
    %115 = vector.shape_cast %114 : vector<1x128x128xbf16> to vector<128x128xbf16>
    %cst_92 = arith.constant dense<0.000000e+00> : vector<256x128xf32>
    %116 = tpu.matmul %110, %115, %cst_92 {dimension_numbers = #tpu.dot_dimension_numbers<[1], [0], [0], [1], [0, 0, 1, 1], [], []>} : vector<256x128xbf16>, vector<128x128xbf16>, vector<256x128xf32> -> vector<256x128xf32>
    %117 = arith.addf %108, %116 : vector<256x128xf32>
    %118 = vector.shape_cast %117 : vector<256x128xf32> to vector<1x16x16x128xf32>
    %119 = arith.index_cast %arg1 : i32 to index
    %c0_93 = arith.constant 0 : index
    %c0_94 = arith.constant 0 : index
    %120 = vector.load %arg8[%119, %c0_93, %c0_94] : memref<3x1x128xf32, #tpu.memory_space<vmem>>, vector<1x1x128xf32>
    %121 = vector.shape_cast %120 : vector<1x1x128xf32> to vector<1x128xf32>
    %122 = vector.shape_cast %121 : vector<1x128xf32> to vector<1x1x1x128xf32>
    %123 = vector.broadcast %122 : vector<1x1x1x128xf32> to vector<1x16x16x128xf32>
    %124 = arith.addf %118, %123 : vector<1x16x16x128xf32>
    %c0_i32_95 = arith.constant 0 : i32
    %125 = arith.cmpi eq, %arg1, %c0_i32_95 : i32
    %126 = arith.extui %125 : i1 to i32
    %c0_i32_96 = arith.constant 0 : i32
    %127 = arith.cmpi ne, %126, %c0_i32_96 : i32
    scf.if %127 {
      %c0_99 = arith.constant 0 : index
      %c0_100 = arith.constant 0 : index
      %c0_101 = arith.constant 0 : index
      %c0_102 = arith.constant 0 : index
      %131 = vector.load %arg9[%c0_99, %c0_100, %c0_101, %c0_102] : memref<1x16x16x128xf32, #tpu.memory_space<vmem>>, vector<1x16x16x128xf32>
      tpu.vector_store %arg9[%c0_99, %c0_100, %c0_101, %c0_102], %124 {strides = array<i32>} : memref<1x16x16x128xf32, #tpu.memory_space<vmem>>, vector<1x16x16x128xf32>,
    } else {
    }
    %c0_i32_97 = arith.constant 0 : i32
    %128 = arith.cmpi ne, %arg1, %c0_i32_97 : i32
    %129 = arith.extui %128 : i1 to i32
    %c0_i32_98 = arith.constant 0 : i32
    %130 = arith.cmpi ne, %129, %c0_i32_98 : i32
    scf.if %130 {
      %c0_99 = arith.constant 0 : index
      %c0_100 = arith.constant 0 : index
      %c0_101 = arith.constant 0 : index
      %c0_102 = arith.constant 0 : index
      %131 = vector.load %arg9[%c0_99, %c0_100, %c0_101, %c0_102] : memref<1x16x16x128xf32, #tpu.memory_space<vmem>>, vector<1x16x16x128xf32>
      %132 = arith.addf %131, %124 : vector<1x16x16x128xf32>
      %c0_103 = arith.constant 0 : index
      %c0_104 = arith.constant 0 : index
      %c0_105 = arith.constant 0 : index
      %c0_106 = arith.constant 0 : index
      %133 = vector.load %arg9[%c0_103, %c0_104, %c0_105, %c0_106] : memref<1x16x16x128xf32, #tpu.memory_space<vmem>>, vector<1x16x16x128xf32>
      tpu.vector_store %arg9[%c0_103, %c0_104, %c0_105, %c0_106], %132 {strides = array<i32>} : memref<1x16x16x128xf32, #tpu.memory_space<vmem>>, vector<1x16x16x128xf32>,
    } else {
    }
    return
  }
  func.func @transform_0(%arg0: i32, %arg1: i32) -> (i32, i32, i32, i32, i32) {
    %c0_i32 = arith.constant 0 : i32
    %c0_i32_0 = arith.constant 0 : i32
    %c0_i32_1 = arith.constant 0 : i32
    %c0_i32_2 = arith.constant 0 : i32
    return %arg1, %arg0, %c0_i32, %c0_i32_0, %c0_i32_1 : i32, i32, i32, i32, i32
  }
  func.func @transform_1(%arg0: i32, %arg1: i32) -> (i32, i32, i32) {
    %c0_i32 = arith.constant 0 : i32
    %c0_i32_0 = arith.constant 0 : i32
    %c0_i32_1 = arith.constant 0 : i32
    %c0_i32_2 = arith.constant 0 : i32
    return %c0_i32, %c0_i32_0, %c0_i32_1 : i32, i32, i32
  }
  func.func @transform_2(%arg0: i32, %arg1: i32) -> (i32, i32, i32) {
    %c0_i32 = arith.constant 0 : i32
    %c0_i32_0 = arith.constant 0 : i32
    %c0_i32_1 = arith.constant 0 : i32
    %c0_i32_2 = arith.constant 0 : i32
    return %c0_i32, %c0_i32_0, %c0_i32_1 : i32, i32, i32
  }
  func.func @transform_3(%arg0: i32, %arg1: i32) -> (i32, i32, i32) {
    %c0_i32 = arith.constant 0 : i32
    %c0_i32_0 = arith.constant 0 : i32
    %c0_i32_1 = arith.constant 0 : i32
    %c0_i32_2 = arith.constant 0 : i32
    return %c0_i32, %c0_i32_0, %c0_i32_1 : i32, i32, i32
  }
  func.func @transform_4(%arg0: i32, %arg1: i32) -> (i32, i32, i32) {
    %c0_i32 = arith.constant 0 : i32
    %c0_i32_0 = arith.constant 0 : i32
    %c0_i32_1 = arith.constant 0 : i32
    %c0_i32_2 = arith.constant 0 : i32
    return %c0_i32, %c0_i32_0, %c0_i32_1 : i32, i32, i32
  }
  func.func @transform_5(%arg0: i32, %arg1: i32) -> (i32, i32, i32) {
    %c0_i32 = arith.constant 0 : i32
    %c0_i32_0 = arith.constant 0 : i32
    %c0_i32_1 = arith.constant 0 : i32
    %c0_i32_2 = arith.constant 0 : i32
    return %c0_i32, %c0_i32_0, %c0_i32_1 : i32, i32, i32
  }
  func.func @transform_6(%arg0: i32, %arg1: i32) -> (i32, i32, i32) {
    %c0_i32 = arith.constant 0 : i32
    %c0_i32_0 = arith.constant 0 : i32
    %c0_i32_1 = arith.constant 0 : i32
    %c0_i32_2 = arith.constant 0 : i32
    return %c0_i32, %c0_i32_0, %c0_i32_1 : i32, i32, i32
  }
  func.func @transform_7(%arg0: i32, %arg1: i32) -> (i32, i32, i32, i32) {
    %c0_i32 = arith.constant 0 : i32
    %c0_i32_0 = arith.constant 0 : i32
    %c0_i32_1 = arith.constant 0 : i32
    %c0_i32_2 = arith.constant 0 : i32
    return %arg0, %c0_i32, %c0_i32_0, %c0_i32_1 : i32, i32, i32, i32
  }
}

</mosaic_0001>

<llo_original>
// kernel: tpu_custom_call.1
$region0: #{tpu_custom_call.1}
  #allocation0 [shape = 'u32[]', space=smem, size = 0x4, offset = 0x4, fixed_abs, tag = 'smem constant byte address 0x4 - core index']
  #allocation1 [shape = 'u32[144,128]{1,0:T(1,128)}', space=vmem, size = 0x12000, scoped, tag = 'internal scratch']
  #allocation2 [shape = 'bf16[1,20,20,128]{3,2,1,0:T(8,128)(2,1)}', space=vmem, size = 0x1e000, scoped, tag = 'scratch operand']
  %s0 = inlined_call_operand.hbm [shape: f32[3,2,16,16,128], index: 0, kind: input, shape index: {}]
  %s1 = inlined_call_operand.hbm [shape: f32[3,128,128], index: 1, kind: input, shape index: {}]
  %s2 = inlined_call_operand.vmem [shape: f32[3,1,128], index: 2, kind: input, shape index: {}]
  %s3 = inlined_call_operand.hbm [shape: f32[3,128,128], index: 3, kind: input, shape index: {}]
  %s4 = inlined_call_operand.vmem [shape: f32[3,1,128], index: 4, kind: input, shape index: {}]
  %s5 = inlined_call_operand.hbm [shape: bf16[27,128,128], index: 5, kind: input, shape index: {}]
  %s6 = inlined_call_operand.vmem [shape: f32[3,1,128], index: 6, kind: input, shape index: {}]
  %s7 = inlined_call_operand.hbm [shape: f32[2,16,16,128], index: 7, kind: output, shape index: {}]
  %s8 = sld [smem:[#allocation0]]
  $region89: #{tpu_custom_call.1} parent=0
    _
  %s10 = ssub.s32 1, %s8
  %s11 = scalar_select 0, %s10, %s8
  $region1: #{tpu_custom_call.1} parent=0
    #allocation3 [shape = 'u8[262144]{0}', space=vmem, size = 0x40000, scoped, tag = 'input window, operand 0']
    #allocation4 [shape = 's32[2]{0}', space=sflag, size = 0x8, scoped, tag = 'scoped memory for tpu_custom_call.1']
    #allocation5 [shape = 's32[2]{0}', space=sflag, size = 0x8, scoped, tag = 'scoped memory for tpu_custom_call.1']
    #allocation6 [shape = 'u8[196608]{0}', space=vmem, size = 0x30000, scoped, tag = 'input window, operand 1, single buffered']
    #allocation7 [shape = 's32[1]{0}', space=sflag, size = 0x4, scoped, tag = 'scoped memory for tpu_custom_call.1']
    #allocation8 [shape = 'u8[196608]{0}', space=vmem, size = 0x30000, scoped, tag = 'input window, operand 3, single buffered']
    #allocation9 [shape = 'u8[884736]{0}', space=vmem, size = 0xd8000, scoped, tag = 'input window, operand 5, single buffered']
    #allocation10 [shape = 's32[1]{0}', space=sflag, size = 0x4, scoped, tag = 'scoped memory for tpu_custom_call.1']
    #allocation11 [shape = 'u8[262144]{0}', space=vmem, size = 0x40000, scoped, tag = 'output window, operand 0']
    %12 = vsyncpa [#allocation4], 0
    %s13 = scalar_lea.sflag [#allocation4], 1
    %14 = vsyncpa %s13, 0
    %15 = vsyncpa [#allocation7], 0
    %16 = vsyncpa [#allocation10], 0
    %17 = vsyncpa [#allocation5], 0
    %s18 = scalar_lea.sflag [#allocation5], 1
    %19 = vsyncpa %s18, 0
    loop: start=0, step=1, limit=8
    $region2: #{tpu_custom_call.1} parent=1 // loop_pre_header
      _
    $region3: #{tpu_custom_call.1} parent=1 // loop_header
      %s21 = sphi 0, %s25
      %p22 = scmp.ge.s32.totalorder %s21, 8
      %s28 = sphi 0, %s40
      %s29 = sphi 0, %s36
      %s30 = sphi 0, %s28
      %s31 = sphi 0, %s29
      %s32 = sphi 0, %s30
      %s33 = sphi 0, %s31
      %s45 = sphi 0, %s47
      %s48 = sphi 0, %s45
      %s49 = sphi 0, %s48
      %s65 = sphi 0, %s49
      %s69 = sphi 0, %s69
      %s71 = sphi 0, %s69
      %s72 = sphi 0, %s71
      %s86 = sphi 0, %s72
      %s90 = sphi 0, %s90
      %s92 = sphi 0, %s90
      %s93 = sphi 0, %s92
      %s107 = sphi 0, %s93
      %s111 = sphi 0, %s111
      %s113 = sphi 0, %s111
      %s114 = sphi 0, %s113
      %s128 = sphi 0, %s114
      %s132 = sphi 0, %s132
      %s134 = sphi 0, %s132
      %s135 = sphi 0, %s134
      %s149 = sphi 0, %s135
      %s153 = sphi 0, %s153
      %s155 = sphi 0, %s153
      %s156 = sphi 0, %s155
      %s170 = sphi 0, %s156
      %s174 = sphi 0, %s174
      %s176 = sphi 0, %s174
      %s177 = sphi 0, %s176
      %s191 = sphi 0, %s177
      %s197 = sphi 0, %s199
      %s200 = sphi 0, %s197
      %s201 = sphi 0, %s200
      %s217 = sphi 0, %s201
    $region4: #{tpu_custom_call.1} parent=1 // loop_header_branch
      %24 = sbr.rel (%p22) target = $region8
    $region5: #{tpu_custom_call.1} parent=1 // loop_body
      %s26 = ssub.s32 %s21, 1
      %s27 = ssub.s32 %s21, 2
      %s34 = sadd.s32 1, %s29
      %p35 = scmp.ge.s32.totalorder %s34, 3
      %s36 = scalar_select %p35, 0, %s34
      %s37 = sadd.s32 1, %s28
      %s38 = scalar_select %p35, %s37, %s28
      %p39 = scmp.ge.s32.totalorder %s38, 2
      %s40 = scalar_select %p39, 0, %s38
      %s41 = ssub.s32 %s29, %s36
      %s42 = ssub.s32 %s28, %s40
      %s43 = sor.u32 %s41, %s42
      %p44 = scmp.eq.s32.totalorder %s43, 0
      %s46 = sadd.s32 %s45, 1
      %s47 = scalar_select %p44, %s45, %s46
      %p50 = pneg %p44
      %p51 = scmp.eq.s32.totalorder %s21, 5
      %p52 = por %p50, %p51
      %p53 = scmp.ne.s32.totalorder %s45, %s48
      %p54 = scmp.eq.s32.totalorder %s21, 0
      %p55 = por %p53, %p54
      %p56 = scmp.ne.s32.totalorder %s45, %s48
      %p57 = scmp.eq.s32.totalorder %s26, 5
      %p58 = por %p56, %p57
      %p59 = scmp.ne.s32.totalorder %s48, %s49
      %p60 = scmp.eq.s32.totalorder %s26, 0
      %p61 = por %p59, %p60
      %p62 = scmp.ne.s32.totalorder %s48, %s49
      %p63 = scmp.eq.s32.totalorder %s27, 5
      %p64 = por %p62, %p63
      %p66 = scmp.ne.s32.totalorder %s49, %s65
      %p67 = scmp.eq.s32.totalorder %s27, 0
      %p68 = por %p66, %p67
      %s70 = sadd.s32 %s69, 1
      %p73 = scmp.eq.s32.totalorder %s21, 5
      %p74 = scmp.ne.s32.totalorder %s69, %s71
      %p75 = scmp.eq.s32.totalorder %s21, 0
      %p76 = por %p74, %p75
      %p77 = scmp.ne.s32.totalorder %s69, %s71
      %p78 = scmp.eq.s32.totalorder %s26, 5
      %p79 = por %p77, %p78
      %p80 = scmp.ne.s32.totalorder %s71, %s72
      %p81 = scmp.eq.s32.totalorder %s26, 0
      %p82 = por %p80, %p81
      %p83 = scmp.ne.s32.totalorder %s71, %s72
      %p84 = scmp.eq.s32.totalorder %s27, 5
      %p85 = por %p83, %p84
      %p87 = scmp.ne.s32.totalorder %s72, %s86
      %p88 = scmp.eq.s32.totalorder %s27, 0
      %p89 = por %p87, %p88
      %s91 = sadd.s32 %s90, 1
      %p94 = scmp.eq.s32.totalorder %s21, 5
      %p95 = scmp.ne.s32.totalorder %s90, %s92
      %p96 = scmp.eq.s32.totalorder %s21, 0
      %p97 = por %p95, %p96
      %p98 = scmp.ne.s32.totalorder %s90, %s92
      %p99 = scmp.eq.s32.totalorder %s26, 5
      %p100 = por %p98, %p99
      %p101 = scmp.ne.s32.totalorder %s92, %s93
      %p102 = scmp.eq.s32.totalorder %s26, 0
      %p103 = por %p101, %p102
      %p104 = scmp.ne.s32.totalorder %s92, %s93
      %p105 = scmp.eq.s32.totalorder %s27, 5
      %p106 = por %p104, %p105
      %p108 = scmp.ne.s32.totalorder %s93, %s107
      %p109 = scmp.eq.s32.totalorder %s27, 0
      %p110 = por %p108, %p109
      %s112 = sadd.s32 %s111, 1
      %p115 = scmp.eq.s32.totalorder %s21, 5
      %p116 = scmp.ne.s32.totalorder %s111, %s113
      %p117 = scmp.eq.s32.totalorder %s21, 0
      %p118 = por %p116, %p117
      %p119 = scmp.ne.s32.totalorder %s111, %s113
      %p120 = scmp.eq.s32.totalorder %s26, 5
      %p121 = por %p119, %p120
      %p122 = scmp.ne.s32.totalorder %s113, %s114
      %p123 = scmp.eq.s32.totalorder %s26, 0
      %p124 = por %p122, %p123
      %p125 = scmp.ne.s32.totalorder %s113, %s114
      %p126 = scmp.eq.s32.totalorder %s27, 5
      %p127 = por %p125, %p126
      %p129 = scmp.ne.s32.totalorder %s114, %s128
      %p130 = scmp.eq.s32.totalorder %s27, 0
      %p131 = por %p129, %p130
      %s133 = sadd.s32 %s132, 1
      %p136 = scmp.eq.s32.totalorder %s21, 5
      %p137 = scmp.ne.s32.totalorder %s132, %s134
      %p138 = scmp.eq.s32.totalorder %s21, 0
      %p139 = por %p137, %p138
      %p140 = scmp.ne.s32.totalorder %s132, %s134
      %p141 = scmp.eq.s32.totalorder %s26, 5
      %p142 = por %p140, %p141
      %p143 = scmp.ne.s32.totalorder %s134, %s135
      %p144 = scmp.eq.s32.totalorder %s26, 0
      %p145 = por %p143, %p144
      %p146 = scmp.ne.s32.totalorder %s134, %s135
      %p147 = scmp.eq.s32.totalorder %s27, 5
      %p148 = por %p146, %p147
      %p150 = scmp.ne.s32.totalorder %s135, %s149
      %p151 = scmp.eq.s32.totalorder %s27, 0
      %p152 = por %p150, %p151
      %s154 = sadd.s32 %s153, 1
      %p157 = scmp.eq.s32.totalorder %s21, 5
      %p158 = scmp.ne.s32.totalorder %s153, %s155
      %p159 = scmp.eq.s32.totalorder %s21, 0
      %p160 = por %p158, %p159
      %p161 = scmp.ne.s32.totalorder %s153, %s155
      %p162 = scmp.eq.s32.totalorder %s26, 5
      %p163 = por %p161, %p162
      %p164 = scmp.ne.s32.totalorder %s155, %s156
      %p165 = scmp.eq.s32.totalorder %s26, 0
      %p166 = por %p164, %p165
      %p167 = scmp.ne.s32.totalorder %s155, %s156
      %p168 = scmp.eq.s32.totalorder %s27, 5
      %p169 = por %p167, %p168
      %p171 = scmp.ne.s32.totalorder %s156, %s170
      %p172 = scmp.eq.s32.totalorder %s27, 0
      %p173 = por %p171, %p172
      %s175 = sadd.s32 %s174, 1
      %p178 = scmp.eq.s32.totalorder %s21, 5
      %p179 = scmp.ne.s32.totalorder %s174, %s176
      %p180 = scmp.eq.s32.totalorder %s21, 0
      %p181 = por %p179, %p180
      %p182 = scmp.ne.s32.totalorder %s174, %s176
      %p183 = scmp.eq.s32.totalorder %s26, 5
      %p184 = por %p182, %p183
      %p185 = scmp.ne.s32.totalorder %s176, %s177
      %p186 = scmp.eq.s32.totalorder %s26, 0
      %p187 = por %p185, %p186
      %p188 = scmp.ne.s32.totalorder %s176, %s177
      %p189 = scmp.eq.s32.totalorder %s27, 5
      %p190 = por %p188, %p189
      %p192 = scmp.ne.s32.totalorder %s177, %s191
      %p193 = scmp.eq.s32.totalorder %s27, 0
      %p194 = por %p192, %p193
      %s195 = ssub.s32 %s28, %s40
      %p196 = scmp.eq.s32.totalorder %s195, 0
      %s198 = sadd.s32 %s197, 1
      %s199 = scalar_select %p196, %s197, %s198
      %p202 = pneg %p196
      %p203 = scmp.eq.s32.totalorder %s21, 5
      %p204 = por %p202, %p203
      %p205 = scmp.ne.s32.totalorder %s197, %s200
      %p206 = scmp.eq.s32.totalorder %s21, 0
      %p207 = por %p205, %p206
      %p208 = scmp.ne.s32.totalorder %s197, %s200
      %p209 = scmp.eq.s32.totalorder %s26, 5
      %p210 = por %p208, %p209
      %p211 = scmp.ne.s32.totalorder %s200, %s201
      %p212 = scmp.eq.s32.totalorder %s26, 0
      %p213 = por %p211, %p212
      %p214 = scmp.ne.s32.totalorder %s200, %s201
      %p215 = scmp.eq.s32.totalorder %s27, 5
      %p216 = por %p214, %p215
      %p218 = scmp.ne.s32.totalorder %s201, %s217
      %p219 = scmp.eq.s32.totalorder %s27, 0
      %p220 = por %p218, %p219
      %p221 = scmp.le.s32.totalorder 1, %s21
      %p222 = scmp.lt.s32.totalorder %s21, 7
      %p223 = pnand %p221, %p222
      %p224 = pneg %p223
      // Predicated region
      $region9: #{tpu_custom_call.1} parent=5 // pred_check
        _
      $region10: #{tpu_custom_call.1} parent=5 // pred_check_branch
        %226 = sbr.rel (%p223) target = $region12
      $region11: #{tpu_custom_call.1} parent=5 // pred_region
        %s227 = ssub.s32 %s21, 1
        // Predicated region
        $region13: #{tpu_custom_call.1} parent=11 // pred_check
          %p228 = pneg %p82
        $region14: #{tpu_custom_call.1} parent=11 // pred_check_branch
          %230 = sbr.rel (%p228) target = $region16
        $region15: #{tpu_custom_call.1} parent=11 // pred_region
          %s232 = ssub.s32 6144, 6144
          %233 = vsyncadd [#allocation7], %s232
          %s234 = sshll.u32 [#allocation6], 4
          %s235 = int_to_ptr.vmem [resolvable:$true] %s234
          %240 = dma.hbm_to_vmem [thread:$0]  %s1, 6144, %s235, [#allocation7], 128, 128, 8
        $region16: #{tpu_custom_call.1} parent=11 // pred_fallthru
          _
        // Predicated region
        $region17: #{tpu_custom_call.1} parent=11 // pred_check
          %p241 = pneg %p103
        $region18: #{tpu_custom_call.1} parent=11 // pred_check_branch
          %243 = sbr.rel (%p241) target = $region20
        $region19: #{tpu_custom_call.1} parent=11 // pred_region
          _
        $region20: #{tpu_custom_call.1} parent=11 // pred_fallthru
          _
        // Predicated region
        $region21: #{tpu_custom_call.1} parent=11 // pred_check
          %p244 = pneg %p124
        $region22: #{tpu_custom_call.1} parent=11 // pred_check_branch
          %246 = sbr.rel (%p244) target = $region24
        $region23: #{tpu_custom_call.1} parent=11 // pred_region
          %s248 = ssub.s32 6144, 6144
          %249 = vsyncadd [#allocation7], %s248
          %s250 = sshll.u32 [#allocation8], 4
          %s251 = int_to_ptr.vmem [resolvable:$true] %s250
          %256 = dma.hbm_to_vmem [thread:$0]  %s3, 6144, %s251, [#allocation7], 128, 128, 8
        $region24: #{tpu_custom_call.1} parent=11 // pred_fallthru
          _
        // Predicated region
        $region25: #{tpu_custom_call.1} parent=11 // pred_check
          %p257 = pneg %p145
        $region26: #{tpu_custom_call.1} parent=11 // pred_check_branch
          %259 = sbr.rel (%p257) target = $region28
        $region27: #{tpu_custom_call.1} parent=11 // pred_region
          _
        $region28: #{tpu_custom_call.1} parent=11 // pred_fallthru
          _
        // Predicated region
        $region29: #{tpu_custom_call.1} parent=11 // pred_check
          %p260 = pneg %p166
        $region30: #{tpu_custom_call.1} parent=11 // pred_check_branch
          %262 = sbr.rel (%p260) target = $region32
        $region31: #{tpu_custom_call.1} parent=11 // pred_region
          %s264 = ssub.s32 27648, 27648
          %265 = vsyncadd [#allocation10], %s264
          %s266 = sshll.u32 [#allocation9], 4
          %s267 = int_to_ptr.vmem [resolvable:$true] %s266
          %272 = dma.hbm_to_vmem [thread:$0]  %s5, 27648, %s267, [#allocation10], 64, 64, 4
        $region32: #{tpu_custom_call.1} parent=11 // pred_fallthru
          _
        // Predicated region
        $region33: #{tpu_custom_call.1} parent=11 // pred_check
          %p273 = pneg %p187
        $region34: #{tpu_custom_call.1} parent=11 // pred_check_branch
          %275 = sbr.rel (%p273) target = $region36
        $region35: #{tpu_custom_call.1} parent=11 // pred_region
          _
        $region36: #{tpu_custom_call.1} parent=11 // pred_fallthru
          _
      $region12: #{tpu_custom_call.1} parent=5 // pred_fallthru
        _
      %p276 = scmp.lt.s32.totalorder %s21, 6
      // Predicated region
      $region37: #{tpu_custom_call.1} parent=5 // pred_check
        %p277 = pneg %p276
      $region38: #{tpu_custom_call.1} parent=5 // pred_check_branch
        %279 = sbr.rel (%p277) target = $region40
      $region39: #{tpu_custom_call.1} parent=5 // pred_region
        // Predicated region
        $region41: #{tpu_custom_call.1} parent=39 // pred_check
          %p280 = pneg %p55
        $region42: #{tpu_custom_call.1} parent=39 // pred_check_branch
          %282 = sbr.rel (%p280) target = $region44
        $region43: #{tpu_custom_call.1} parent=39 // pred_region
          %s283 = sand.u32 %s45, 1
          %s284 = scalar_lea.sflag [#allocation4], %s283
          %s285 = sand.u32 %s45, 1
          %s286 = smul.addr %s285, 256
          %s287 = scalar_lea.vmem [#allocation3], %s286
          %s289 = ssub.s32 4096, 4096
          %290 = vsyncadd %s284, %s289
          %s291 = smul.addr %s28, 32
          %s292 = smul.addr %s29, 64
          %s293 = sadd.s32 %s291, %s292
          %s294 = smul.addr %s293, 128
          %s295 = scalar_lea.hbm %s0, %s294
          %s296 = sshll.u32 %s287, 4
          %s297 = int_to_ptr.vmem [resolvable:$true] %s296
          %302 = dma.hbm_to_vmem [thread:$0]  %s295, 4096, %s297, %s284, 128, 128, 8
        $region44: #{tpu_custom_call.1} parent=39 // pred_fallthru
          _
      $region40: #{tpu_custom_call.1} parent=5 // pred_fallthru
        _
      %p303 = scmp.le.s32.totalorder 1, %s21
      %p304 = scmp.lt.s32.totalorder %s21, 7
      %p305 = pnand %p303, %p304
      %p306 = pneg %p305
      // Predicated region
      $region45: #{tpu_custom_call.1} parent=5 // pred_check
        _
      $region46: #{tpu_custom_call.1} parent=5 // pred_check_branch
        %308 = sbr.rel (%p305) target = $region48
      $region47: #{tpu_custom_call.1} parent=5 // pred_region
        %s309 = ssub.s32 %s21, 1
        %s310 = sand.u32 %s48, 1
        %s311 = scalar_lea.sflag [#allocation4], %s310
        %s312 = sand.u32 %s48, 1
        %s313 = smul.addr %s312, 256
        %s314 = scalar_lea.vmem [#allocation3], %s313
        // Predicated region
        $region49: #{tpu_custom_call.1} parent=47 // pred_check
          %p315 = pneg %p61
        $region50: #{tpu_custom_call.1} parent=47 // pred_check_branch
          %317 = sbr.rel (%p315) target = $region52
        $region51: #{tpu_custom_call.1} parent=47 // pred_region
          %318 = dma.done %s311, 4096
        $region52: #{tpu_custom_call.1} parent=47 // pred_fallthru
          _
        // Predicated region
        $region53: #{tpu_custom_call.1} parent=47 // pred_check
          %p319 = pneg %p82
        $region54: #{tpu_custom_call.1} parent=47 // pred_check_branch
          %321 = sbr.rel (%p319) target = $region56
        $region55: #{tpu_custom_call.1} parent=47 // pred_region
          %322 = dma.done [#allocation7], 6144
        $region56: #{tpu_custom_call.1} parent=47 // pred_fallthru
          _
        // Predicated region
        $region57: #{tpu_custom_call.1} parent=47 // pred_check
          %p323 = pneg %p124
        $region58: #{tpu_custom_call.1} parent=47 // pred_check_branch
          %325 = sbr.rel (%p323) target = $region60
        $region59: #{tpu_custom_call.1} parent=47 // pred_region
          %326 = dma.done [#allocation7], 6144
        $region60: #{tpu_custom_call.1} parent=47 // pred_fallthru
          _
        // Predicated region
        $region61: #{tpu_custom_call.1} parent=47 // pred_check
          %p327 = pneg %p166
        $region62: #{tpu_custom_call.1} parent=47 // pred_check_branch
          %329 = sbr.rel (%p327) target = $region64
        $region63: #{tpu_custom_call.1} parent=47 // pred_region
          %330 = dma.done [#allocation10], 27648
        $region64: #{tpu_custom_call.1} parent=47 // pred_fallthru
          _
        %s331 = sand.u32 %s48, 1
        %s332 = scalar_lea.sflag [#allocation4], %s331
        %s333 = sand.u32 %s48, 1
        %s334 = smul.addr %s333, 256
        %s335 = scalar_lea.vmem [#allocation3], %s334
        %p336 = pneg %p61
        %p337 = pneg %p58
        %p338 = pneg %p82
        %p339 = pneg %p79
        %p340 = pneg %p103
        %p341 = pneg %p100
        %p342 = pneg %p124
        %p343 = pneg %p121
        %p344 = pneg %p145
        %p345 = pneg %p142
        %p346 = pneg %p166
        %p347 = pneg %p163
        %p348 = pneg %p187
        %p349 = pneg %p184
        %p350 = pneg %p213
        %p351 = pneg %p210
        %s352 = sand.u32 %s200, 1
        %s353 = scalar_lea.sflag [#allocation5], %s352
        %s354 = sand.u32 %s200, 1
        %s355 = smul.addr %s354, 256
        %s356 = scalar_lea.vmem [#allocation11], %s355
        %v358 = vld [vmem:[%s314] sm:$0xff]
        %v359 = vld [vmem:[%s314 + $0x8] sm:$0xff]
        %v360 = vld [vmem:[%s314 + $0x10] sm:$0xff]
        %v361 = vld [vmem:[%s314 + $0x18] sm:$0xff]
        %v362 = vld [vmem:[%s314 + $0x20] sm:$0xff]
        %v363 = vld [vmem:[%s314 + $0x28] sm:$0xff]
        %v364 = vld [vmem:[%s314 + $0x30] sm:$0xff]
        %v365 = vld [vmem:[%s314 + $0x38] sm:$0xff]
        %v366 = vld [vmem:[%s314 + $0x40] sm:$0xff]
        %v367 = vld [vmem:[%s314 + $0x48] sm:$0xff]
        %v368 = vld [vmem:[%s314 + $0x50] sm:$0xff]
        %v369 = vld [vmem:[%s314 + $0x58] sm:$0xff]
        %v370 = vld [vmem:[%s314 + $0x60] sm:$0xff]
        %v371 = vld [vmem:[%s314 + $0x68] sm:$0xff]
        %v372 = vld [vmem:[%s314 + $0x70] sm:$0xff]
        %v373 = vld [vmem:[%s314 + $0x78] sm:$0xff]
        %v374 = vld [vmem:[%s314 + $0x80] sm:$0xff]
        %v375 = vld [vmem:[%s314 + $0x88] sm:$0xff]
        %v376 = vld [vmem:[%s314 + $0x90] sm:$0xff]
        %v377 = vld [vmem:[%s314 + $0x98] sm:$0xff]
        %v378 = vld [vmem:[%s314 + $0xa0] sm:$0xff]
        %v379 = vld [vmem:[%s314 + $0xa8] sm:$0xff]
        %v380 = vld [vmem:[%s314 + $0xb0] sm:$0xff]
        %v381 = vld [vmem:[%s314 + $0xb8] sm:$0xff]
        %v382 = vld [vmem:[%s314 + $0xc0] sm:$0xff]
        %v383 = vld [vmem:[%s314 + $0xc8] sm:$0xff]
        %v384 = vld [vmem:[%s314 + $0xd0] sm:$0xff]
        %v385 = vld [vmem:[%s314 + $0xd8] sm:$0xff]
        %v386 = vld [vmem:[%s314 + $0xe0] sm:$0xff]
        %v387 = vld [vmem:[%s314 + $0xe8] sm:$0xff]
        %v388 = vld [vmem:[%s314 + $0xf0] sm:$0xff]
        %v389 = vld [vmem:[%s314 + $0xf8] sm:$0xff]
        %v390 = vadd.f32 %v358, %v359
        %v391 = vadd.f32 %v390, %v360
        %v392 = vadd.f32 %v391, %v361
        %v393 = vadd.f32 %v392, %v362
        %v394 = vadd.f32 %v393, %v363
        %v395 = vadd.f32 %v394, %v364
        %v396 = vadd.f32 %v395, %v365
        %v397 = vadd.f32 %v396, %v366
        %v398 = vadd.f32 %v397, %v367
        %v399 = vadd.f32 %v398, %v368
        %v400 = vadd.f32 %v399, %v369
        %v401 = vadd.f32 %v400, %v370
        %v402 = vadd.f32 %v401, %v371
        %v403 = vadd.f32 %v402, %v372
        %v404 = vadd.f32 %v403, %v373
        %v405 = vadd.f32 %v404, %v374
        %v406 = vadd.f32 %v405, %v375
        %v407 = vadd.f32 %v406, %v376
        %v408 = vadd.f32 %v407, %v377
        %v409 = vadd.f32 %v408, %v378
        %v410 = vadd.f32 %v409, %v379
        %v411 = vadd.f32 %v410, %v380
        %v412 = vadd.f32 %v411, %v381
        %v413 = vadd.f32 %v412, %v382
        %v414 = vadd.f32 %v413, %v383
        %v415 = vadd.f32 %v414, %v384
        %v416 = vadd.f32 %v415, %v385
        %v417 = vadd.f32 %v416, %v386
        %v418 = vadd.f32 %v417, %v387
        %v419 = vadd.f32 %v418, %v388
        %v420 = vadd.f32 %v419, %v389
        %v421 = vrot.slane %v420, 4
        %v422 = vadd.f32 %v420, %v421
        %v423 = vrot.slane %v422, 2
        %v424 = vadd.f32 %v422, %v423
        %v425 = vrot.slane %v424, 1
        %v426 = vadd.f32 %v424, %v425
        %v427 = vrcp.pop 256.0
        %v428 = vmul.f32 %v426, %v427
        %v429 = vmax.f32 %v358, %v362
        %v430 = vmax.f32 %v359, %v363
        %v431 = vmax.f32 %v360, %v364
        %v432 = vmax.f32 %v361, %v365
        %v433 = vmax.f32 %v429, %v366
        %v434 = vmax.f32 %v430, %v367
        %v435 = vmax.f32 %v431, %v368
        %v436 = vmax.f32 %v432, %v369
        %v437 = vmax.f32 %v433, %v370
        %v438 = vmax.f32 %v434, %v371
        %v439 = vmax.f32 %v435, %v372
        %v440 = vmax.f32 %v436, %v373
        %v441 = vmax.f32 %v437, %v374
        %v442 = vmax.f32 %v438, %v375
        %v443 = vmax.f32 %v439, %v376
        %v444 = vmax.f32 %v440, %v377
        %v445 = vmax.f32 %v441, %v378
        %v446 = vmax.f32 %v442, %v379
        %v447 = vmax.f32 %v443, %v380
        %v448 = vmax.f32 %v444, %v381
        %v449 = vmax.f32 %v445, %v382
        %v450 = vmax.f32 %v446, %v383
        %v451 = vmax.f32 %v447, %v384
        %v452 = vmax.f32 %v448, %v385
        %v453 = vmax.f32 %v449, %v386
        %v454 = vmax.f32 %v450, %v387
        %v455 = vmax.f32 %v451, %v388
        %v456 = vmax.f32 %v452, %v389
        %v457 = vmax.f32 %v453, %v454
        %v458 = vmax.f32 %v455, %v456
        %v459 = vmax.f32 %v457, %v458
        %v460 = vrot.slane %v459, 4
        %v461 = vmax.f32 %v459, %v460
        %v462 = vrot.slane %v461, 2
        %v463 = vmax.f32 %v461, %v462
        %v464 = vrot.slane %v463, 1
        %v465 = vmax.f32 %v463, %v464
        %v466 = vadd.f32 %v428, %v465
        %s467 = smul.u32 %s31, 128
        %s468 = scalar_lea.vmem [#allocation6], %s467
        %v469 = vld [vmem:[%s468] sm:$0xff]
        %v470 = vld [vmem:[%s468 + $0x8] sm:$0xff]
        %v471 = vld [vmem:[%s468 + $0x10] sm:$0xff]
        %v472 = vld [vmem:[%s468 + $0x18] sm:$0xff]
        %v473 = vld [vmem:[%s468 + $0x20] sm:$0xff]
        %v474 = vld [vmem:[%s468 + $0x28] sm:$0xff]
        %v475 = vld [vmem:[%s468 + $0x30] sm:$0xff]
        %v476 = vld [vmem:[%s468 + $0x38] sm:$0xff]
        %v477 = vld [vmem:[%s468 + $0x40] sm:$0xff]
        %v478 = vld [vmem:[%s468 + $0x48] sm:$0xff]
        %v479 = vld [vmem:[%s468 + $0x50] sm:$0xff]
        %v480 = vld [vmem:[%s468 + $0x58] sm:$0xff]
        %v481 = vld [vmem:[%s468 + $0x60] sm:$0xff]
        %v482 = vld [vmem:[%s468 + $0x68] sm:$0xff]
        %v483 = vld [vmem:[%s468 + $0x70] sm:$0xff]
        %v484 = vld [vmem:[%s468 + $0x78] sm:$0xff]
        %s485 = scalar_lea.vmem %s2, %s31
        %v486 = vld [vmem:[%s485] sm:$0x1]
        %487 = vmatprep.subr.mxu0 0.0
        %488 = vmatpush1.msra.mxu0 %v469
        %489 = vmatprep.subr.mxu0 0.0
        %490 = vmatpush1.msra.mxu0 %v470
        %491 = vmatprep.subr.mxu0 0.0
        %492 = vmatpush1.msra.mxu0 %v471
        %493 = vmatprep.subr.mxu0 0.0
        %494 = vmatpush1.msra.mxu0 %v472
        %495 = vmatprep.subr.mxu0 0.0
        %496 = vmatpush1.msra.mxu0 %v473
        %497 = vmatprep.subr.mxu0 0.0
        %498 = vmatpush1.msra.mxu0 %v474
        %499 = vmatprep.subr.mxu0 0.0
        %500 = vmatpush1.msra.mxu0 %v475
        %501 = vmatprep.subr.mxu0 0.0
        %502 = vmatpush1.msra.mxu0 %v476
        %503 = vmatprep.subr.mxu0 0.0
        %504 = vmatpush1.msra.mxu0 %v477
        %505 = vmatprep.subr.mxu0 0.0
        %506 = vmatpush1.msra.mxu0 %v478
        %507 = vmatprep.subr.mxu0 0.0
        %508 = vmatpush1.msra.mxu0 %v479
        %509 = vmatprep.subr.mxu0 0.0
        %510 = vmatpush1.msra.mxu0 %v480
        %511 = vmatprep.subr.mxu0 0.0
        %512 = vmatpush1.msra.mxu0 %v481
        %513 = vmatprep.subr.mxu0 0.0
        %514 = vmatpush1.msra.mxu0 %v482
        %515 = vmatprep.subr.mxu0 0.0
        %516 = vmatpush1.msra.mxu0 %v483
        %517 = vmatprep.subr.mxu0 0.0
        %518 = vmatpush1.msra.mxu0 %v484
        %519 = vmatprep.subr.mxu0 0.0
        %520 = vmatpush1.msra.mxu0 0.0
        %521 = vmatprep.subr.mxu0 0.0
        %522 = vmatpush1.msra.mxu0 0.0
        %523 = vmatprep.subr.mxu0 0.0
        %524 = vmatpush1.msra.mxu0 0.0
        %525 = vmatprep.subr.mxu0 0.0
        %526 = vmatpush1.msra.mxu0 0.0
        %527 = vmatprep.subr.mxu0 0.0
        %528 = vmatpush1.msra.mxu0 0.0
        %529 = vmatprep.subr.mxu0 0.0
        %530 = vmatpush1.msra.mxu0 0.0
        %531 = vmatprep.subr.mxu0 0.0
        %532 = vmatpush1.msra.mxu0 0.0
        %533 = vmatprep.subr.mxu0 0.0
        %534 = vmatpush1.msra.mxu0 0.0
        %535 = vmatprep.subr.mxu0 0.0
        %536 = vmatpush1.msra.mxu0 0.0
        %537 = vmatprep.subr.mxu0 0.0
        %538 = vmatpush1.msra.mxu0 0.0
        %539 = vmatprep.subr.mxu0 0.0
        %540 = vmatpush1.msra.mxu0 0.0
        %541 = vmatprep.subr.mxu0 0.0
        %542 = vmatpush1.msra.mxu0 0.0
        %543 = vmatprep.subr.mxu0 0.0
        %544 = vmatpush1.msra.mxu0 0.0
        %545 = vmatprep.subr.mxu0 0.0
        %546 = vmatpush1.msra.mxu0 0.0
        %547 = vmatprep.subr.mxu0 0.0
        %548 = vmatpush1.msra.mxu0 0.0
        %549 = vmatprep.subr.mxu0 0.0
        %550 = vmatpush1.msra.mxu0 0.0
        %551 = vmatprep.mubr.f32.mxu0 0.0
        %552 = vmatmul.mubr.f32.gmra.mrb[0].mxu0 %v466
        %v553 = vpop.f32.mrb[0].mxu0
        %v554 = vadd.f32 %v486, %v553
        %v555 = vpop.f32.mrb[0].mxu0
        %556 = vdwg.mxu0
        %s557 = scalar_lea.vmem [#allocation8], %s467
        %v558 = vld [vmem:[%s557] sm:$0xff]
        %v559 = vld [vmem:[%s557 + $0x8] sm:$0xff]
        %v560 = vld [vmem:[%s557 + $0x10] sm:$0xff]
        %v561 = vld [vmem:[%s557 + $0x18] sm:$0xff]
        %v562 = vld [vmem:[%s557 + $0x20] sm:$0xff]
        %v563 = vld [vmem:[%s557 + $0x28] sm:$0xff]
        %v564 = vld [vmem:[%s557 + $0x30] sm:$0xff]
        %v565 = vld [vmem:[%s557 + $0x38] sm:$0xff]
        %v566 = vld [vmem:[%s557 + $0x40] sm:$0xff]
        %v567 = vld [vmem:[%s557 + $0x48] sm:$0xff]
        %v568 = vld [vmem:[%s557 + $0x50] sm:$0xff]
        %v569 = vld [vmem:[%s557 + $0x58] sm:$0xff]
        %v570 = vld [vmem:[%s557 + $0x60] sm:$0xff]
        %v571 = vld [vmem:[%s557 + $0x68] sm:$0xff]
        %v572 = vld [vmem:[%s557 + $0x70] sm:$0xff]
        %v573 = vld [vmem:[%s557 + $0x78] sm:$0xff]
        %s574 = scalar_lea.vmem %s4, %s31
        %v575 = vld [vmem:[%s574] sm:$0x1]
        %576 = vmatprep.subr.mxu0 0.0
        %577 = vmatpush1.msra.mxu0 %v558
        %578 = vmatprep.subr.mxu0 0.0
        %579 = vmatpush1.msra.mxu0 %v559
        %580 = vmatprep.subr.mxu0 0.0
        %581 = vmatpush1.msra.mxu0 %v560
        %582 = vmatprep.subr.mxu0 0.0
        %583 = vmatpush1.msra.mxu0 %v561
        %584 = vmatprep.subr.mxu0 0.0
        %585 = vmatpush1.msra.mxu0 %v562
        %586 = vmatprep.subr.mxu0 0.0
        %587 = vmatpush1.msra.mxu0 %v563
        %588 = vmatprep.subr.mxu0 0.0
        %589 = vmatpush1.msra.mxu0 %v564
        %590 = vmatprep.subr.mxu0 0.0
        %591 = vmatpush1.msra.mxu0 %v565
        %592 = vmatprep.subr.mxu0 0.0
        %593 = vmatpush1.msra.mxu0 %v566
        %594 = vmatprep.subr.mxu0 0.0
        %595 = vmatpush1.msra.mxu0 %v567
        %596 = vmatprep.subr.mxu0 0.0
        %597 = vmatpush1.msra.mxu0 %v568
        %598 = vmatprep.subr.mxu0 0.0
        %599 = vmatpush1.msra.mxu0 %v569
        %600 = vmatprep.subr.mxu0 0.0
        %601 = vmatpush1.msra.mxu0 %v570
        %602 = vmatprep.subr.mxu0 0.0
        %603 = vmatpush1.msra.mxu0 %v571
        %604 = vmatprep.subr.mxu0 0.0
        %605 = vmatpush1.msra.mxu0 %v572
        %606 = vmatprep.subr.mxu0 0.0
        %607 = vmatpush1.msra.mxu0 %v573
        %608 = vmatprep.subr.mxu0 0.0
        %609 = vmatpush1.msra.mxu0 0.0
        %610 = vmatprep.subr.mxu0 0.0
        %611 = vmatpush1.msra.mxu0 0.0
        %612 = vmatprep.subr.mxu0 0.0
        %613 = vmatpush1.msra.mxu0 0.0
        %614 = vmatprep.subr.mxu0 0.0
        %615 = vmatpush1.msra.mxu0 0.0
        %616 = vmatprep.subr.mxu0 0.0
        %617 = vmatpush1.msra.mxu0 0.0
        %618 = vmatprep.subr.mxu0 0.0
        %619 = vmatpush1.msra.mxu0 0.0
        %620 = vmatprep.subr.mxu0 0.0
        %621 = vmatpush1.msra.mxu0 0.0
        %622 = vmatprep.subr.mxu0 0.0
        %623 = vmatpush1.msra.mxu0 0.0
        %624 = vmatprep.subr.mxu0 0.0
        %625 = vmatpush1.msra.mxu0 0.0
        %626 = vmatprep.subr.mxu0 0.0
        %627 = vmatpush1.msra.mxu0 0.0
        %628 = vmatprep.subr.mxu0 0.0
        %629 = vmatpush1.msra.mxu0 0.0
        %630 = vmatprep.subr.mxu0 0.0
        %631 = vmatpush1.msra.mxu0 0.0
        %632 = vmatprep.subr.mxu0 0.0
        %633 = vmatpush1.msra.mxu0 0.0
        %634 = vmatprep.subr.mxu0 0.0
        %635 = vmatpush1.msra.mxu0 0.0
        %636 = vmatprep.subr.mxu0 0.0
        %637 = vmatpush1.msra.mxu0 0.0
        %638 = vmatprep.subr.mxu0 0.0
        %639 = vmatpush1.msra.mxu0 0.0
        %640 = vmatprep.mubr.f32.mxu0 0.0
        %641 = vmatmul.mubr.f32.gmra.mrb[0].mxu0 %v554
        %v642 = vpop.f32.mrb[0].mxu0
        %v643 = vadd.f32 %v575, %v642
        %v644 = vpop.f32.mrb[0].mxu0
        %645 = vdwg.mxu0
        %v646 = vxor.u32 %v643, 2147483648
        %v647 = vmul.f32 %v646, 1.442695
        %v648 = vpow.pop %v647
        %v649 = vadd.f32 %v648, 1.0
        %v650 = vrcp.pop %v649
        %v651 = vmul.f32 1.0, %v650
        %v652 = vlaneseq
        %v653 = vshrl.u32 %v652, 7
        %v654 = vsub.s32 0, %v653
        %v655 = vrot.slane %v651, %v654
        %v656 = vmul.f32 %v358, %v655
        %v657 = vmul.f32 %v359, %v655
        %v658 = vmul.f32 %v360, %v655
        %v659 = vmul.f32 %v361, %v655
        %v660 = vmul.f32 %v362, %v655
        %v661 = vmul.f32 %v363, %v655
        %v662 = vmul.f32 %v364, %v655
        %v663 = vmul.f32 %v365, %v655
        %v664 = vmul.f32 %v366, %v655
        %v665 = vmul.f32 %v367, %v655
        %v666 = vmul.f32 %v368, %v655
        %v667 = vmul.f32 %v369, %v655
        %v668 = vmul.f32 %v370, %v655
        %v669 = vmul.f32 %v371, %v655
        %v670 = vmul.f32 %v372, %v655
        %v671 = vmul.f32 %v373, %v655
        %v672 = vmul.f32 %v374, %v655
        %v673 = vmul.f32 %v375, %v655
        %v674 = vmul.f32 %v376, %v655
        %v675 = vmul.f32 %v377, %v655
        %v676 = vmul.f32 %v378, %v655
        %v677 = vmul.f32 %v379, %v655
        %v678 = vmul.f32 %v380, %v655
        %v679 = vmul.f32 %v381, %v655
        %v680 = vmul.f32 %v382, %v655
        %v681 = vmul.f32 %v383, %v655
        %v682 = vmul.f32 %v384, %v655
        %v683 = vmul.f32 %v385, %v655
        %v684 = vmul.f32 %v386, %v655
        %v685 = vmul.f32 %v387, %v655
        %v686 = vmul.f32 %v388, %v655
        %v687 = vmul.f32 %v389, %v655
        %p688 = scmp.eq.s32.totalorder %s31, 0
        // Predicated region
        $region65: #{tpu_custom_call.1} parent=47 // pred_check
          %p689 = pneg %p688
        $region66: #{tpu_custom_call.1} parent=47 // pred_check_branch
          %691 = sbr.rel (%p689) target = $region68
        $region67: #{tpu_custom_call.1} parent=47 // pred_region
          %692 = vst [vmem:[#allocation2] sm:$0xf] 0
          %693 = vst [vmem:[#allocation2 + $0x4] sm:$0xf] 0
          %694 = vst [vmem:[#allocation2 + $0x8] sm:$0x3] 0
          %695 = vst [vmem:[#allocation2 + $0xc] sm:$0xf] 0
          %696 = vst [vmem:[#allocation2 + $0x10] sm:$0xf] 0
          %697 = vst [vmem:[#allocation2 + $0x14] sm:$0x3] 0
          %s698 = scalar_lea.vmem [#allocation2], 216
          %699 = vst [vmem:[%s698] sm:$0xf] 0
          %700 = vst [vmem:[%s698 + $0x4] sm:$0xf] 0
          %701 = vst [vmem:[%s698 + $0x8] sm:$0x3] 0
          %702 = vst [vmem:[%s698 + $0xc] sm:$0xf] 0
          %703 = vst [vmem:[%s698 + $0x10] sm:$0xf] 0
          %704 = vst [vmem:[%s698 + $0x14] sm:$0x3] 0
          %s705 = scalar_lea.vmem [#allocation2], 24
          %706 = vst [vmem:[%s705] sm:$0x1] 0
          %707 = vst [vmem:[%s705 + $0xc] sm:$0x1] 0
          %708 = vst [vmem:[%s705 + $0x18] sm:$0x1] 0
          %709 = vst [vmem:[%s705 + $0x24] sm:$0x1] 0
          %710 = vst [vmem:[%s705 + $0x30] sm:$0x1] 0
          %711 = vst [vmem:[%s705 + $0x3c] sm:$0x1] 0
          %712 = vst [vmem:[%s705 + $0x48] sm:$0x1] 0
          %713 = vst [vmem:[%s705 + $0x54] sm:$0x1] 0
          %714 = vst [vmem:[%s705 + $0x60] sm:$0x1] 0
          %715 = vst [vmem:[%s705 + $0x6c] sm:$0x1] 0
          %716 = vst [vmem:[%s705 + $0x78] sm:$0x1] 0
          %717 = vst [vmem:[%s705 + $0x84] sm:$0x1] 0
          %718 = vst [vmem:[%s705 + $0x90] sm:$0x1] 0
          %719 = vst [vmem:[%s705 + $0x9c] sm:$0x1] 0
          %720 = vst [vmem:[%s705 + $0xa8] sm:$0x1] 0
          %721 = vst [vmem:[%s705 + $0xb4] sm:$0x1] 0
          %722 = vst [vmem:[%s705 + $0x8] sm:$0x2] 0
          %723 = vst [vmem:[%s705 + $0x14] sm:$0x2] 0
          %724 = vst [vmem:[%s705 + $0x20] sm:$0x2] 0
          %725 = vst [vmem:[%s705 + $0x2c] sm:$0x2] 0
          %726 = vst [vmem:[%s705 + $0x38] sm:$0x2] 0
          %727 = vst [vmem:[%s705 + $0x44] sm:$0x2] 0
          %728 = vst [vmem:[%s705 + $0x50] sm:$0x2] 0
          %729 = vst [vmem:[%s705 + $0x5c] sm:$0x2] 0
          %730 = vst [vmem:[%s705 + $0x68] sm:$0x2] 0
          %731 = vst [vmem:[%s705 + $0x74] sm:$0x2] 0
          %732 = vst [vmem:[%s705 + $0x80] sm:$0x2] 0
          %733 = vst [vmem:[%s705 + $0x8c] sm:$0x2] 0
          %734 = vst [vmem:[%s705 + $0x98] sm:$0x2] 0
          %735 = vst [vmem:[%s705 + $0xa4] sm:$0x2] 0
          %736 = vst [vmem:[%s705 + $0xb0] sm:$0x2] 0
          %737 = vst [vmem:[%s705 + $0xbc] sm:$0x2] 0
        $region68: #{tpu_custom_call.1} parent=47 // pred_fallthru
          _
        %v738 = vpack.c.bf16 %v657, %v656
        %v739 = vpack.c.bf16 %v659, %v658
        %v740 = vpack.c.bf16 %v661, %v660
        %v741 = vpack.c.bf16 %v663, %v662
        %v742 = vpack.c.bf16 %v665, %v664
        %v743 = vpack.c.bf16 %v667, %v666
        %v744 = vpack.c.bf16 %v669, %v668
        %v745 = vpack.c.bf16 %v671, %v670
        %v746 = vpack.c.bf16 %v673, %v672
        %v747 = vpack.c.bf16 %v675, %v674
        %v748 = vpack.c.bf16 %v677, %v676
        %v749 = vpack.c.bf16 %v679, %v678
        %v750 = vpack.c.bf16 %v681, %v680
        %v751 = vpack.c.bf16 %v683, %v682
        %v752 = vpack.c.bf16 %v685, %v684
        %v753 = vpack.c.bf16 %v687, %v686
        %v770 = vunpack.c.l.b16 %v738
        %v771 = vunpack.c.h.b16 %v738
        %v772 = vunpack.c.l.b16 %v739
        %v773 = vunpack.c.h.b16 %v739
        %v774 = vunpack.c.l.b16 %v740
        %v775 = vunpack.c.h.b16 %v740
        %v776 = vunpack.c.l.b16 %v741
        %v777 = vunpack.c.h.b16 %v741
        %v778 = vunpack.c.l.b16 %v742
        %v779 = vunpack.c.h.b16 %v742
        %v780 = vunpack.c.l.b16 %v743
        %v781 = vunpack.c.h.b16 %v743
        %v782 = vunpack.c.l.b16 %v744
        %v783 = vunpack.c.h.b16 %v744
        %v784 = vunpack.c.l.b16 %v745
        %v785 = vunpack.c.h.b16 %v745
        %v786 = vunpack.c.l.b16 %v746
        %v787 = vunpack.c.h.b16 %v746
        %v788 = vunpack.c.l.b16 %v747
        %v789 = vunpack.c.h.b16 %v747
        %v790 = vunpack.c.l.b16 %v748
        %v791 = vunpack.c.h.b16 %v748
        %v792 = vunpack.c.l.b16 %v749
        %v793 = vunpack.c.h.b16 %v749
        %v794 = vunpack.c.l.b16 %v750
        %v795 = vunpack.c.h.b16 %v750
        %v796 = vunpack.c.l.b16 %v751
        %v797 = vunpack.c.h.b16 %v751
        %v798 = vunpack.c.l.b16 %v752
        %v799 = vunpack.c.h.b16 %v752
        %v800 = vunpack.c.l.b16 %v753
        %v801 = vunpack.c.h.b16 %v753
        %v802 = vpack.c.b16 %v770, %v770
        %v803 = vpack.c.b16 %v771, %v771
        %v804 = vpack.c.b16 %v772, %v772
        %v805 = vpack.c.b16 %v773, %v773
        %v806 = vpack.c.b16 %v774, %v774
        %v807 = vpack.c.b16 %v775, %v775
        %v808 = vpack.c.b16 %v776, %v776
        %v809 = vpack.c.b16 %v777, %v777
        %v810 = vpack.c.b16 %v778, %v778
        %v811 = vpack.c.b16 %v779, %v779
        %v812 = vpack.c.b16 %v780, %v780
        %v813 = vpack.c.b16 %v781, %v781
        %v814 = vpack.c.b16 %v782, %v782
        %v815 = vpack.c.b16 %v783, %v783
        %v816 = vpack.c.b16 %v784, %v784
        %v817 = vpack.c.b16 %v785, %v785
        %v818 = vpack.c.b16 %v786, %v786
        %v819 = vpack.c.b16 %v787, %v787
        %v820 = vpack.c.b16 %v788, %v788
        %v821 = vpack.c.b16 %v789, %v789
        %v822 = vpack.c.b16 %v790, %v790
        %v823 = vpack.c.b16 %v791, %v791
        %v824 = vpack.c.b16 %v792, %v792
        %v825 = vpack.c.b16 %v793, %v793
        %v826 = vpack.c.b16 %v794, %v794
        %v827 = vpack.c.b16 %v795, %v795
        %v828 = vpack.c.b16 %v796, %v796
        %v829 = vpack.c.b16 %v797, %v797
        %v830 = vpack.c.b16 %v798, %v798
        %v831 = vpack.c.b16 %v799, %v799
        %v832 = vpack.c.b16 %v800, %v800
        %v833 = vpack.c.b16 %v801, %v801
        %vm834 = vcmask 1040384
        %vm835 = vcmask 1044484
        %vm836 = vmor %vm834, %vm835
        %v837 = vrot.slane %v802, 7
        %v838 = vrot.slane %v837, 4
        %v839 = vrot.slane %v803, 7
        %v840 = vsel %vm836, %v838, %v839
        %v841 = vrot.slane %v839, 4
        %v842 = vrot.slane %v804, 7
        %v843 = vrot.slane %v842, 4
        %v844 = vrot.slane %v805, 7
        %v845 = vsel %vm836, %v843, %v844
        %v846 = vrot.slane %v844, 4
        %v847 = vrot.slane %v806, 7
        %v848 = vrot.slane %v847, 4
        %v849 = vrot.slane %v807, 7
        %v850 = vsel %vm836, %v848, %v849
        %v851 = vrot.slane %v849, 4
        %v852 = vrot.slane %v808, 7
        %v853 = vrot.slane %v852, 4
        %v854 = vrot.slane %v809, 7
        %v855 = vsel %vm836, %v853, %v854
        %v856 = vrot.slane %v854, 4
        %v857 = vrot.slane %v810, 7
        %v858 = vrot.slane %v857, 4
        %v859 = vrot.slane %v811, 7
        %v860 = vsel %vm836, %v858, %v859
        %v861 = vrot.slane %v859, 4
        %v862 = vrot.slane %v812, 7
        %v863 = vrot.slane %v862, 4
        %v864 = vrot.slane %v813, 7
        %v865 = vsel %vm836, %v863, %v864
        %v866 = vrot.slane %v864, 4
        %v867 = vrot.slane %v814, 7
        %v868 = vrot.slane %v867, 4
        %v869 = vrot.slane %v815, 7
        %v870 = vsel %vm836, %v868, %v869
        %v871 = vrot.slane %v869, 4
        %v872 = vrot.slane %v816, 7
        %v873 = vrot.slane %v872, 4
        %v874 = vrot.slane %v817, 7
        %v875 = vsel %vm836, %v873, %v874
        %v876 = vrot.slane %v874, 4
        %v877 = vrot.slane %v818, 7
        %v878 = vrot.slane %v877, 4
        %v879 = vrot.slane %v819, 7
        %v880 = vsel %vm836, %v878, %v879
        %v881 = vrot.slane %v879, 4
        %v882 = vrot.slane %v820, 7
        %v883 = vrot.slane %v882, 4
        %v884 = vrot.slane %v821, 7
        %v885 = vsel %vm836, %v883, %v884
        %v886 = vrot.slane %v884, 4
        %v887 = vrot.slane %v822, 7
        %v888 = vrot.slane %v887, 4
        %v889 = vrot.slane %v823, 7
        %v890 = vsel %vm836, %v888, %v889
        %v891 = vrot.slane %v889, 4
        %v892 = vrot.slane %v824, 7
        %v893 = vrot.slane %v892, 4
        %v894 = vrot.slane %v825, 7
        %v895 = vsel %vm836, %v893, %v894
        %v896 = vrot.slane %v894, 4
        %v897 = vrot.slane %v826, 7
        %v898 = vrot.slane %v897, 4
        %v899 = vrot.slane %v827, 7
        %v900 = vsel %vm836, %v898, %v899
        %v901 = vrot.slane %v899, 4
        %v902 = vrot.slane %v828, 7
        %v903 = vrot.slane %v902, 4
        %v904 = vrot.slane %v829, 7
        %v905 = vsel %vm836, %v903, %v904
        %v906 = vrot.slane %v904, 4
        %v907 = vrot.slane %v830, 7
        %v908 = vrot.slane %v907, 4
        %v909 = vrot.slane %v831, 7
        %v910 = vsel %vm836, %v908, %v909
        %v911 = vrot.slane %v909, 4
        %v912 = vrot.slane %v832, 7
        %v913 = vrot.slane %v912, 4
        %v914 = vrot.slane %v833, 7
        %v915 = vsel %vm836, %v913, %v914
        %v916 = vrot.slane %v914, 4
        %s965 = scalar_lea.vmem [#allocation2], 24
        %966 = vst [vmem:[%s965] sm:$0xe] %v837
        %967 = vst [vmem:[%s965 + $0x4] sm:$0xf] %v840
        %968 = vst [vmem:[%s965 + $0x8] sm:$0x1] %v841
        %969 = vst [vmem:[%s965 + $0xc] sm:$0xe] %v842
        %970 = vst [vmem:[%s965 + $0x10] sm:$0xf] %v845
        %971 = vst [vmem:[%s965 + $0x14] sm:$0x1] %v846
        %972 = vst [vmem:[%s965 + $0x18] sm:$0xe] %v847
        %973 = vst [vmem:[%s965 + $0x1c] sm:$0xf] %v850
        %974 = vst [vmem:[%s965 + $0x20] sm:$0x1] %v851
        %975 = vst [vmem:[%s965 + $0x24] sm:$0xe] %v852
        %976 = vst [vmem:[%s965 + $0x28] sm:$0xf] %v855
        %977 = vst [vmem:[%s965 + $0x2c] sm:$0x1] %v856
        %978 = vst [vmem:[%s965 + $0x30] sm:$0xe] %v857
        %979 = vst [vmem:[%s965 + $0x34] sm:$0xf] %v860
        %980 = vst [vmem:[%s965 + $0x38] sm:$0x1] %v861
        %981 = vst [vmem:[%s965 + $0x3c] sm:$0xe] %v862
        %982 = vst [vmem:[%s965 + $0x40] sm:$0xf] %v865
        %983 = vst [vmem:[%s965 + $0x44] sm:$0x1] %v866
        %984 = vst [vmem:[%s965 + $0x48] sm:$0xe] %v867
        %985 = vst [vmem:[%s965 + $0x4c] sm:$0xf] %v870
        %986 = vst [vmem:[%s965 + $0x50] sm:$0x1] %v871
        %987 = vst [vmem:[%s965 + $0x54] sm:$0xe] %v872
        %988 = vst [vmem:[%s965 + $0x58] sm:$0xf] %v875
        %989 = vst [vmem:[%s965 + $0x5c] sm:$0x1] %v876
        %990 = vst [vmem:[%s965 + $0x60] sm:$0xe] %v877
        %991 = vst [vmem:[%s965 + $0x64] sm:$0xf] %v880
        %992 = vst [vmem:[%s965 + $0x68] sm:$0x1] %v881
        %993 = vst [vmem:[%s965 + $0x6c] sm:$0xe] %v882
        %994 = vst [vmem:[%s965 + $0x70] sm:$0xf] %v885
        %995 = vst [vmem:[%s965 + $0x74] sm:$0x1] %v886
        %996 = vst [vmem:[%s965 + $0x78] sm:$0xe] %v887
        %997 = vst [vmem:[%s965 + $0x7c] sm:$0xf] %v890
        %998 = vst [vmem:[%s965 + $0x80] sm:$0x1] %v891
        %999 = vst [vmem:[%s965 + $0x84] sm:$0xe] %v892
        %1000 = vst [vmem:[%s965 + $0x88] sm:$0xf] %v895
        %1001 = vst [vmem:[%s965 + $0x8c] sm:$0x1] %v896
        %1002 = vst [vmem:[%s965 + $0x90] sm:$0xe] %v897
        %1003 = vst [vmem:[%s965 + $0x94] sm:$0xf] %v900
        %1004 = vst [vmem:[%s965 + $0x98] sm:$0x1] %v901
        %1005 = vst [vmem:[%s965 + $0x9c] sm:$0xe] %v902
        %1006 = vst [vmem:[%s965 + $0xa0] sm:$0xf] %v905
        %1007 = vst [vmem:[%s965 + $0xa4] sm:$0x1] %v906
        %1008 = vst [vmem:[%s965 + $0xa8] sm:$0xe] %v907
        %1009 = vst [vmem:[%s965 + $0xac] sm:$0xf] %v910
        %1010 = vst [vmem:[%s965 + $0xb0] sm:$0x1] %v911
        %1011 = vst [vmem:[%s965 + $0xb4] sm:$0xe] %v912
        %1012 = vst [vmem:[%s965 + $0xb8] sm:$0xf] %v915
        %1013 = vst [vmem:[%s965 + $0xbc] sm:$0x1] %v916
        %v1014 = vld [vmem:[#allocation2] sm:$0xf]
        %v1015 = vld [vmem:[#allocation2 + $0x4] sm:$0xf]
        %v1016 = vld [vmem:[#allocation2 + $0xc] sm:$0xf]
        %v1017 = vld [vmem:[#allocation2 + $0x10] sm:$0xf]
        %v1018 = vld [vmem:[#allocation2 + $0x18] sm:$0xf]
        %v1019 = vld [vmem:[#allocation2 + $0x1c] sm:$0xf]
        %v1020 = vld [vmem:[#allocation2 + $0x24] sm:$0xf]
        %v1021 = vld [vmem:[#allocation2 + $0x28] sm:$0xf]
        %v1022 = vld [vmem:[#allocation2 + $0x30] sm:$0xf]
        %v1023 = vld [vmem:[#allocation2 + $0x34] sm:$0xf]
        %v1024 = vld [vmem:[#allocation2 + $0x3c] sm:$0xf]
        %v1025 = vld [vmem:[#allocation2 + $0x40] sm:$0xf]
        %v1026 = vld [vmem:[#allocation2 + $0x48] sm:$0xf]
        %v1027 = vld [vmem:[#allocation2 + $0x4c] sm:$0xf]
        %v1028 = vld [vmem:[#allocation2 + $0x54] sm:$0xf]
        %v1029 = vld [vmem:[#allocation2 + $0x58] sm:$0xf]
        %v1030 = vld [vmem:[#allocation2 + $0x60] sm:$0xf]
        %v1031 = vld [vmem:[#allocation2 + $0x64] sm:$0xf]
        %v1032 = vld [vmem:[#allocation2 + $0x6c] sm:$0xf]
        %v1033 = vld [vmem:[#allocation2 + $0x70] sm:$0xf]
        %v1034 = vld [vmem:[#allocation2 + $0x78] sm:$0xf]
        %v1035 = vld [vmem:[#allocation2 + $0x7c] sm:$0xf]
        %v1036 = vld [vmem:[#allocation2 + $0x84] sm:$0xf]
        %v1037 = vld [vmem:[#allocation2 + $0x88] sm:$0xf]
        %v1038 = vld [vmem:[#allocation2 + $0x90] sm:$0xf]
        %v1039 = vld [vmem:[#allocation2 + $0x94] sm:$0xf]
        %v1040 = vld [vmem:[#allocation2 + $0x9c] sm:$0xf]
        %v1041 = vld [vmem:[#allocation2 + $0xa0] sm:$0xf]
        %v1042 = vld [vmem:[#allocation2 + $0xa8] sm:$0xf]
        %v1043 = vld [vmem:[#allocation2 + $0xac] sm:$0xf]
        %v1044 = vld [vmem:[#allocation2 + $0xb4] sm:$0xf]
        %v1045 = vld [vmem:[#allocation2 + $0xb8] sm:$0xf]
        %s1046 = smul.u32 %s31, 9
        %s1047 = smul.u32 %s1046, 16
        %s1048 = smul.addr %s1047, 4
        %s1049 = scalar_lea.vmem [#allocation9], %s1048
        %v1050 = vld [vmem:[%s1049] sm:$0xf]
        %v1051 = vld [vmem:[%s1049 + $0x4] sm:$0xf]
        %v1052 = vld [vmem:[%s1049 + $0x8] sm:$0xf]
        %v1053 = vld [vmem:[%s1049 + $0xc] sm:$0xf]
        %v1054 = vld [vmem:[%s1049 + $0x10] sm:$0xf]
        %v1055 = vld [vmem:[%s1049 + $0x14] sm:$0xf]
        %v1056 = vld [vmem:[%s1049 + $0x18] sm:$0xf]
        %v1057 = vld [vmem:[%s1049 + $0x1c] sm:$0xf]
        %v1058 = vld [vmem:[%s1049 + $0x20] sm:$0xf]
        %v1059 = vld [vmem:[%s1049 + $0x24] sm:$0xf]
        %v1060 = vld [vmem:[%s1049 + $0x28] sm:$0xf]
        %v1061 = vld [vmem:[%s1049 + $0x2c] sm:$0xf]
        %v1062 = vld [vmem:[%s1049 + $0x30] sm:$0xf]
        %v1063 = vld [vmem:[%s1049 + $0x34] sm:$0xf]
        %v1064 = vld [vmem:[%s1049 + $0x38] sm:$0xf]
        %v1065 = vld [vmem:[%s1049 + $0x3c] sm:$0xf]
        %v1066 = vld [vmem:[#allocation2] sm:$0xe]
        %v1067 = vld [vmem:[#allocation2 + $0x8] sm:$0x1]
        %v1068 = vld [vmem:[#allocation2 + $0xc] sm:$0xe]
        %v1069 = vld [vmem:[#allocation2 + $0x14] sm:$0x1]
        %v1070 = vld [vmem:[#allocation2 + $0x18] sm:$0xe]
        %v1071 = vld [vmem:[#allocation2 + $0x20] sm:$0x1]
        %v1072 = vld [vmem:[#allocation2 + $0x24] sm:$0xe]
        %v1073 = vld [vmem:[#allocation2 + $0x2c] sm:$0x1]
        %v1074 = vld [vmem:[#allocation2 + $0x30] sm:$0xe]
        %v1075 = vld [vmem:[#allocation2 + $0x38] sm:$0x1]
        %v1076 = vld [vmem:[#allocation2 + $0x3c] sm:$0xe]
        %v1077 = vld [vmem:[#allocation2 + $0x44] sm:$0x1]
        %v1078 = vld [vmem:[#allocation2 + $0x48] sm:$0xe]
        %v1079 = vld [vmem:[#allocation2 + $0x50] sm:$0x1]
        %v1080 = vld [vmem:[#allocation2 + $0x54] sm:$0xe]
        %v1081 = vld [vmem:[#allocation2 + $0x5c] sm:$0x1]
        %v1082 = vld [vmem:[#allocation2 + $0x60] sm:$0xe]
        %v1083 = vld [vmem:[#allocation2 + $0x68] sm:$0x1]
        %v1084 = vld [vmem:[#allocation2 + $0x6c] sm:$0xe]
        %v1085 = vld [vmem:[#allocation2 + $0x74] sm:$0x1]
        %v1086 = vld [vmem:[#allocation2 + $0x78] sm:$0xe]
        %v1087 = vld [vmem:[#allocation2 + $0x80] sm:$0x1]
        %v1088 = vld [vmem:[#allocation2 + $0x84] sm:$0xe]
        %v1089 = vld [vmem:[#allocation2 + $0x8c] sm:$0x1]
        %v1090 = vld [vmem:[#allocation2 + $0x90] sm:$0xe]
        %v1091 = vld [vmem:[#allocation2 + $0x98] sm:$0x1]
        %v1092 = vld [vmem:[#allocation2 + $0x9c] sm:$0xe]
        %v1093 = vld [vmem:[#allocation2 + $0xa4] sm:$0x1]
        %v1094 = vld [vmem:[#allocation2 + $0xa8] sm:$0xe]
        %v1095 = vld [vmem:[#allocation2 + $0xb0] sm:$0x1]
        %v1096 = vld [vmem:[#allocation2 + $0xb4] sm:$0xe]
        %v1097 = vld [vmem:[#allocation2 + $0xbc] sm:$0x1]
        %vm1146 = vcmask 1042432
        %vm1147 = vcmask 1046532
        %vm1148 = vmor %vm1146, %vm1147
        %v1149 = vrot.slane %v1066, 5
        %v1150 = vrot.slane %v1149, 4
        %v1151 = vrot.slane %v1015, 5
        %v1152 = vsel %vm1148, %v1150, %v1151
        %v1153 = vrot.slane %v1151, 4
        %v1154 = vrot.slane %v1067, 5
        %v1155 = vsel %vm1148, %v1153, %v1154
        %v1156 = vrot.slane %v1068, 5
        %v1157 = vrot.slane %v1156, 4
        %v1158 = vrot.slane %v1017, 5
        %v1159 = vsel %vm1148, %v1157, %v1158
        %v1160 = vrot.slane %v1158, 4
        %v1161 = vrot.slane %v1069, 5
        %v1162 = vsel %vm1148, %v1160, %v1161
        %v1163 = vrot.slane %v1070, 5
        %v1164 = vrot.slane %v1163, 4
        %v1165 = vrot.slane %v1019, 5
        %v1166 = vsel %vm1148, %v1164, %v1165
        %v1167 = vrot.slane %v1165, 4
        %v1168 = vrot.slane %v1071, 5
        %v1169 = vsel %vm1148, %v1167, %v1168
        %v1170 = vrot.slane %v1072, 5
        %v1171 = vrot.slane %v1170, 4
        %v1172 = vrot.slane %v1021, 5
        %v1173 = vsel %vm1148, %v1171, %v1172
        %v1174 = vrot.slane %v1172, 4
        %v1175 = vrot.slane %v1073, 5
        %v1176 = vsel %vm1148, %v1174, %v1175
        %v1177 = vrot.slane %v1074, 5
        %v1178 = vrot.slane %v1177, 4
        %v1179 = vrot.slane %v1023, 5
        %v1180 = vsel %vm1148, %v1178, %v1179
        %v1181 = vrot.slane %v1179, 4
        %v1182 = vrot.slane %v1075, 5
        %v1183 = vsel %vm1148, %v1181, %v1182
        %v1184 = vrot.slane %v1076, 5
        %v1185 = vrot.slane %v1184, 4
        %v1186 = vrot.slane %v1025, 5
        %v1187 = vsel %vm1148, %v1185, %v1186
        %v1188 = vrot.slane %v1186, 4
        %v1189 = vrot.slane %v1077, 5
        %v1190 = vsel %vm1148, %v1188, %v1189
        %v1191 = vrot.slane %v1078, 5
        %v1192 = vrot.slane %v1191, 4
        %v1193 = vrot.slane %v1027, 5
        %v1194 = vsel %vm1148, %v1192, %v1193
        %v1195 = vrot.slane %v1193, 4
        %v1196 = vrot.slane %v1079, 5
        %v1197 = vsel %vm1148, %v1195, %v1196
        %v1198 = vrot.slane %v1080, 5
        %v1199 = vrot.slane %v1198, 4
        %v1200 = vrot.slane %v1029, 5
        %v1201 = vsel %vm1148, %v1199, %v1200
        %v1202 = vrot.slane %v1200, 4
        %v1203 = vrot.slane %v1081, 5
        %v1204 = vsel %vm1148, %v1202, %v1203
        %v1205 = vrot.slane %v1082, 5
        %v1206 = vrot.slane %v1205, 4
        %v1207 = vrot.slane %v1031, 5
        %v1208 = vsel %vm1148, %v1206, %v1207
        %v1209 = vrot.slane %v1207, 4
        %v1210 = vrot.slane %v1083, 5
        %v1211 = vsel %vm1148, %v1209, %v1210
        %v1212 = vrot.slane %v1084, 5
        %v1213 = vrot.slane %v1212, 4
        %v1214 = vrot.slane %v1033, 5
        %v1215 = vsel %vm1148, %v1213, %v1214
        %v1216 = vrot.slane %v1214, 4
        %v1217 = vrot.slane %v1085, 5
        %v1218 = vsel %vm1148, %v1216, %v1217
        %v1219 = vrot.slane %v1086, 5
        %v1220 = vrot.slane %v1219, 4
        %v1221 = vrot.slane %v1035, 5
        %v1222 = vsel %vm1148, %v1220, %v1221
        %v1223 = vrot.slane %v1221, 4
        %v1224 = vrot.slane %v1087, 5
        %v1225 = vsel %vm1148, %v1223, %v1224
        %v1226 = vrot.slane %v1088, 5
        %v1227 = vrot.slane %v1226, 4
        %v1228 = vrot.slane %v1037, 5
        %v1229 = vsel %vm1148, %v1227, %v1228
        %v1230 = vrot.slane %v1228, 4
        %v1231 = vrot.slane %v1089, 5
        %v1232 = vsel %vm1148, %v1230, %v1231
        %v1233 = vrot.slane %v1090, 5
        %v1234 = vrot.slane %v1233, 4
        %v1235 = vrot.slane %v1039, 5
        %v1236 = vsel %vm1148, %v1234, %v1235
        %v1237 = vrot.slane %v1235, 4
        %v1238 = vrot.slane %v1091, 5
        %v1239 = vsel %vm1148, %v1237, %v1238
        %v1240 = vrot.slane %v1092, 5
        %v1241 = vrot.slane %v1240, 4
        %v1242 = vrot.slane %v1041, 5
        %v1243 = vsel %vm1148, %v1241, %v1242
        %v1244 = vrot.slane %v1242, 4
        %v1245 = vrot.slane %v1093, 5
        %v1246 = vsel %vm1148, %v1244, %v1245
        %v1247 = vrot.slane %v1094, 5
        %v1248 = vrot.slane %v1247, 4
        %v1249 = vrot.slane %v1043, 5
        %v1250 = vsel %vm1148, %v1248, %v1249
        %v1251 = vrot.slane %v1249, 4
        %v1252 = vrot.slane %v1095, 5
        %v1253 = vsel %vm1148, %v1251, %v1252
        %v1254 = vrot.slane %v1096, 5
        %v1255 = vrot.slane %v1254, 4
        %v1256 = vrot.slane %v1045, 5
        %v1257 = vsel %vm1148, %v1255, %v1256
        %v1258 = vrot.slane %v1256, 4
        %v1259 = vrot.slane %v1097, 5
        %v1260 = vsel %vm1148, %v1258, %v1259
        %s1261 = sadd.s32 %s1046, 1
        %s1262 = smul.u32 %s1261, 16
        %s1263 = smul.addr %s1262, 4
        %s1264 = scalar_lea.vmem [#allocation9], %s1263
        %v1265 = vld [vmem:[%s1264] sm:$0xf]
        %v1266 = vld [vmem:[%s1264 + $0x4] sm:$0xf]
        %v1267 = vld [vmem:[%s1264 + $0x8] sm:$0xf]
        %v1268 = vld [vmem:[%s1264 + $0xc] sm:$0xf]
        %v1269 = vld [vmem:[%s1264 + $0x10] sm:$0xf]
        %v1270 = vld [vmem:[%s1264 + $0x14] sm:$0xf]
        %v1271 = vld [vmem:[%s1264 + $0x18] sm:$0xf]
        %v1272 = vld [vmem:[%s1264 + $0x1c] sm:$0xf]
        %v1273 = vld [vmem:[%s1264 + $0x20] sm:$0xf]
        %v1274 = vld [vmem:[%s1264 + $0x24] sm:$0xf]
        %v1275 = vld [vmem:[%s1264 + $0x28] sm:$0xf]
        %v1276 = vld [vmem:[%s1264 + $0x2c] sm:$0xf]
        %v1277 = vld [vmem:[%s1264 + $0x30] sm:$0xf]
        %v1278 = vld [vmem:[%s1264 + $0x34] sm:$0xf]
        %v1279 = vld [vmem:[%s1264 + $0x38] sm:$0xf]
        %v1280 = vld [vmem:[%s1264 + $0x3c] sm:$0xf]
        %v1281 = vunpack.c.l.b16 %v1152
        %v1282 = vunpack.c.l.b16 %v1155
        %v1283 = vunpack.c.l.b16 %v1159
        %v1284 = vunpack.c.l.b16 %v1162
        %v1285 = vunpack.c.l.b16 %v1166
        %v1286 = vunpack.c.l.b16 %v1169
        %v1287 = vunpack.c.l.b16 %v1173
        %v1288 = vunpack.c.l.b16 %v1176
        %v1289 = vunpack.c.l.b16 %v1180
        %v1290 = vunpack.c.l.b16 %v1183
        %v1291 = vunpack.c.l.b16 %v1187
        %v1292 = vunpack.c.l.b16 %v1190
        %v1293 = vunpack.c.l.b16 %v1194
        %v1294 = vunpack.c.l.b16 %v1197
        %v1295 = vunpack.c.l.b16 %v1201
        %v1296 = vunpack.c.l.b16 %v1204
        %v1297 = vunpack.c.l.b16 %v1208
        %v1298 = vunpack.c.l.b16 %v1211
        %v1299 = vunpack.c.l.b16 %v1215
        %v1300 = vunpack.c.l.b16 %v1218
        %v1301 = vunpack.c.l.b16 %v1222
        %v1302 = vunpack.c.l.b16 %v1225
        %v1303 = vunpack.c.l.b16 %v1229
        %v1304 = vunpack.c.l.b16 %v1232
        %v1305 = vunpack.c.l.b16 %v1236
        %v1306 = vunpack.c.l.b16 %v1239
        %v1307 = vunpack.c.l.b16 %v1243
        %v1308 = vunpack.c.l.b16 %v1246
        %v1309 = vunpack.c.l.b16 %v1250
        %v1310 = vunpack.c.l.b16 %v1253
        %v1311 = vunpack.c.l.b16 %v1257
        %v1312 = vunpack.c.l.b16 %v1260
        %v1313 = vpack.c.b16 %v1282, %v1281
        %v1314 = vpack.c.b16 %v1284, %v1283
        %v1315 = vpack.c.b16 %v1286, %v1285
        %v1316 = vpack.c.b16 %v1288, %v1287
        %v1317 = vpack.c.b16 %v1290, %v1289
        %v1318 = vpack.c.b16 %v1292, %v1291
        %v1319 = vpack.c.b16 %v1294, %v1293
        %v1320 = vpack.c.b16 %v1296, %v1295
        %v1321 = vpack.c.b16 %v1298, %v1297
        %v1322 = vpack.c.b16 %v1300, %v1299
        %v1323 = vpack.c.b16 %v1302, %v1301
        %v1324 = vpack.c.b16 %v1304, %v1303
        %v1325 = vpack.c.b16 %v1306, %v1305
        %v1326 = vpack.c.b16 %v1308, %v1307
        %v1327 = vpack.c.b16 %v1310, %v1309
        %v1328 = vpack.c.b16 %v1312, %v1311
        %v1361 = vunpack.c.l.b16 %v1265
        %v1362 = vunpack.c.l.b16 %v1266
        %v1363 = vunpack.c.l.b16 %v1267
        %v1364 = vunpack.c.l.b16 %v1268
        %v1365 = vunpack.c.l.b16 %v1269
        %v1366 = vunpack.c.l.b16 %v1270
        %v1367 = vunpack.c.l.b16 %v1271
        %v1368 = vunpack.c.l.b16 %v1272
        %v1369 = vunpack.c.l.b16 %v1273
        %v1370 = vunpack.c.l.b16 %v1274
        %v1371 = vunpack.c.l.b16 %v1275
        %v1372 = vunpack.c.l.b16 %v1276
        %v1373 = vunpack.c.l.b16 %v1277
        %v1374 = vunpack.c.l.b16 %v1278
        %v1375 = vunpack.c.l.b16 %v1279
        %v1376 = vunpack.c.l.b16 %v1280
        %v1377 = vpack.c.b16 %v1362, %v1361
        %v1378 = vpack.c.b16 %v1364, %v1363
        %v1379 = vpack.c.b16 %v1366, %v1365
        %v1380 = vpack.c.b16 %v1368, %v1367
        %v1381 = vpack.c.b16 %v1370, %v1369
        %v1382 = vpack.c.b16 %v1372, %v1371
        %v1383 = vpack.c.b16 %v1374, %v1373
        %v1384 = vpack.c.b16 %v1376, %v1375
        %1393 = vmatprep.subr.bf16.mxu0 0
        %1394 = vmatpush1.bf16.msra.mxu0 %v1377
        %1395 = vmatprep.subr.bf16.mxu0 0
        %1396 = vmatpush1.bf16.msra.mxu0 %v1378
        %1397 = vmatprep.subr.bf16.mxu0 0
        %1398 = vmatpush1.bf16.msra.mxu0 %v1379
        %1399 = vmatprep.subr.bf16.mxu0 0
        %1400 = vmatpush1.bf16.msra.mxu0 %v1380
        %1401 = vmatprep.subr.bf16.mxu0 0
        %1402 = vmatpush1.bf16.msra.mxu0 %v1381
        %1403 = vmatprep.subr.bf16.mxu0 0
        %1404 = vmatpush1.bf16.msra.mxu0 %v1382
        %1405 = vmatprep.subr.bf16.mxu0 0
        %1406 = vmatpush1.bf16.msra.mxu0 %v1383
        %1407 = vmatprep.subr.bf16.mxu0 0
        %1408 = vmatpush1.bf16.msra.mxu0 %v1384
        %1409 = vmatprep.subr.bf16.mxu0 0
        %1410 = vmatpush1.bf16.msra.mxu0 0
        %1411 = vmatprep.subr.bf16.mxu0 0
        %1412 = vmatpush1.bf16.msra.mxu0 0
        %1413 = vmatprep.subr.bf16.mxu0 0
        %1414 = vmatpush1.bf16.msra.mxu0 0
        %1415 = vmatprep.subr.bf16.mxu0 0
        %1416 = vmatpush1.bf16.msra.mxu0 0
        %1417 = vmatprep.subr.bf16.mxu0 0
        %1418 = vmatpush1.bf16.msra.mxu0 0
        %1419 = vmatprep.subr.bf16.mxu0 0
        %1420 = vmatpush1.bf16.msra.mxu0 0
        %1421 = vmatprep.subr.bf16.mxu0 0
        %1422 = vmatpush1.bf16.msra.mxu0 0
        %1423 = vmatprep.subr.bf16.mxu0 0
        %1424 = vmatpush1.bf16.msra.mxu0 0
        %1425 = vmatprep.mubr.bf16.mxu0 0
        %1426 = vmatmul.mubr.bf16.gmra.mrb[0].mxu0 %v1313
        %v1427 = vpop.f32.mrb[0].mxu0
        %v1428 = vadd.f32 0.0, %v1427
        %v1429 = vpop.f32.mrb[0].mxu0
        %v1430 = vpop.f32.mrb[0].mxu0
        %v1431 = vadd.f32 0.0, %v1430
        %v1432 = vpop.f32.mrb[0].mxu0
        %1433 = vmatprep.mubr.bf16.mxu0 0
        %1434 = vmatmul.mubr.bf16.gmra.mrb[0].mxu0 %v1314
        %v1435 = vpop.f32.mrb[0].mxu0
        %v1436 = vadd.f32 0.0, %v1435
        %v1437 = vpop.f32.mrb[0].mxu0
        %v1438 = vpop.f32.mrb[0].mxu0
        %v1439 = vadd.f32 0.0, %v1438
        %v1440 = vpop.f32.mrb[0].mxu0
        %1441 = vmatprep.mubr.bf16.mxu0 0
        %1442 = vmatmul.mubr.bf16.gmra.mrb[0].mxu0 %v1315
        %v1443 = vpop.f32.mrb[0].mxu0
        %v1444 = vadd.f32 0.0, %v1443
        %v1445 = vpop.f32.mrb[0].mxu0
        %v1446 = vpop.f32.mrb[0].mxu0
        %v1447 = vadd.f32 0.0, %v1446
        %v1448 = vpop.f32.mrb[0].mxu0
        %1449 = vmatprep.mubr.bf16.mxu0 0
        %1450 = vmatmul.mubr.bf16.gmra.mrb[0].mxu0 %v1316
        %v1451 = vpop.f32.mrb[0].mxu0
        %v1452 = vadd.f32 0.0, %v1451
        %v1453 = vpop.f32.mrb[0].mxu0
        %v1454 = vpop.f32.mrb[0].mxu0
        %v1455 = vadd.f32 0.0, %v1454
        %v1456 = vpop.f32.mrb[0].mxu0
        %1457 = vmatprep.mubr.bf16.mxu0 0
        %1458 = vmatmul.mubr.bf16.gmra.mrb[0].mxu0 %v1317
        %v1459 = vpop.f32.mrb[0].mxu0
        %v1460 = vadd.f32 0.0, %v1459
        %v1461 = vpop.f32.mrb[0].mxu0
        %v1462 = vpop.f32.mrb[0].mxu0
        %v1463 = vadd.f32 0.0, %v1462
        %v1464 = vpop.f32.mrb[0].mxu0
        %1465 = vmatprep.mubr.bf16.mxu0 0
        %1466 = vmatmul.mubr.bf16.gmra.mrb[0].mxu0 %v1318
        %v1467 = vpop.f32.mrb[0].mxu0
        %v1468 = vadd.f32 0.0, %v1467
        %v1469 = vpop.f32.mrb[0].mxu0
        %v1470 = vpop.f32.mrb[0].mxu0
        %v1471 = vadd.f32 0.0, %v1470
        %v1472 = vpop.f32.mrb[0].mxu0
        %1473 = vmatprep.mubr.bf16.mxu0 0
        %1474 = vmatmul.mubr.bf16.gmra.mrb[0].mxu0 %v1319
        %v1475 = vpop.f32.mrb[0].mxu0
        %v1476 = vadd.f32 0.0, %v1475
        %v1477 = vpop.f32.mrb[0].mxu0
        %v1478 = vpop.f32.mrb[0].mxu0
        %v1479 = vadd.f32 0.0, %v1478
        %v1480 = vpop.f32.mrb[0].mxu0
        %1481 = vmatprep.mubr.bf16.mxu0 0
        %1482 = vmatmul.mubr.bf16.gmra.mrb[0].mxu0 %v1320
        %v1483 = vpop.f32.mrb[0].mxu0
        %v1484 = vadd.f32 0.0, %v1483
        %v1485 = vpop.f32.mrb[0].mxu0
        %v1486 = vpop.f32.mrb[0].mxu0
        %v1487 = vadd.f32 0.0, %v1486
        %v1488 = vpop.f32.mrb[0].mxu0
        %1489 = vmatprep.mubr.bf16.mxu0 0
        %1490 = vmatmul.mubr.bf16.gmra.mrb[0].mxu0 %v1321
        %v1491 = vpop.f32.mrb[0].mxu0
        %v1492 = vadd.f32 0.0, %v1491
        %v1493 = vpop.f32.mrb[0].mxu0
        %v1494 = vpop.f32.mrb[0].mxu0
        %v1495 = vadd.f32 0.0, %v1494
        %v1496 = vpop.f32.mrb[0].mxu0
        %1497 = vmatprep.mubr.bf16.mxu0 0
        %1498 = vmatmul.mubr.bf16.gmra.mrb[0].mxu0 %v1322
        %v1499 = vpop.f32.mrb[0].mxu0
        %v1500 = vadd.f32 0.0, %v1499
        %v1501 = vpop.f32.mrb[0].mxu0
        %v1502 = vpop.f32.mrb[0].mxu0
        %v1503 = vadd.f32 0.0, %v1502
        %v1504 = vpop.f32.mrb[0].mxu0
        %1505 = vmatprep.mubr.bf16.mxu0 0
        %1506 = vmatmul.mubr.bf16.gmra.mrb[0].mxu0 %v1323
        %v1507 = vpop.f32.mrb[0].mxu0
        %v1508 = vadd.f32 0.0, %v1507
        %v1509 = vpop.f32.mrb[0].mxu0
        %v1510 = vpop.f32.mrb[0].mxu0
        %v1511 = vadd.f32 0.0, %v1510
        %v1512 = vpop.f32.mrb[0].mxu0
        %1513 = vmatprep.mubr.bf16.mxu0 0
        %1514 = vmatmul.mubr.bf16.gmra.mrb[0].mxu0 %v1324
        %v1515 = vpop.f32.mrb[0].mxu0
        %v1516 = vadd.f32 0.0, %v1515
        %v1517 = vpop.f32.mrb[0].mxu0
        %v1518 = vpop.f32.mrb[0].mxu0
        %v1519 = vadd.f32 0.0, %v1518
        %v1520 = vpop.f32.mrb[0].mxu0
        %1521 = vmatprep.mubr.bf16.mxu0 0
        %1522 = vmatmul.mubr.bf16.gmra.mrb[0].mxu0 %v1325
        %v1523 = vpop.f32.mrb[0].mxu0
        %v1524 = vadd.f32 0.0, %v1523
        %v1525 = vpop.f32.mrb[0].mxu0
        %v1526 = vpop.f32.mrb[0].mxu0
        %v1527 = vadd.f32 0.0, %v1526
        %v1528 = vpop.f32.mrb[0].mxu0
        %1529 = vmatprep.mubr.bf16.mxu0 0
        %1530 = vmatmul.mubr.bf16.gmra.mrb[0].mxu0 %v1326
        %v1531 = vpop.f32.mrb[0].mxu0
        %v1532 = vadd.f32 0.0, %v1531
        %v1533 = vpop.f32.mrb[0].mxu0
        %v1534 = vpop.f32.mrb[0].mxu0
        %v1535 = vadd.f32 0.0, %v1534
        %v1536 = vpop.f32.mrb[0].mxu0
        %1537 = vmatprep.mubr.bf16.mxu0 0
        %1538 = vmatmul.mubr.bf16.gmra.mrb[0].mxu0 %v1327
        %v1539 = vpop.f32.mrb[0].mxu0
        %v1540 = vadd.f32 0.0, %v1539
        %v1541 = vpop.f32.mrb[0].mxu0
        %v1542 = vpop.f32.mrb[0].mxu0
        %v1543 = vadd.f32 0.0, %v1542
        %v1544 = vpop.f32.mrb[0].mxu0
        %1545 = vmatprep.mubr.bf16.mxu0 0
        %1546 = vmatmul.mubr.bf16.gmra.mrb[0].mxu0 %v1328
        %v1547 = vpop.f32.mrb[0].mxu0
        %v1548 = vadd.f32 0.0, %v1547
        %v1549 = vpop.f32.mrb[0].mxu0
        %v1550 = vpop.f32.mrb[0].mxu0
        %v1551 = vadd.f32 0.0, %v1550
        %v1552 = vpop.f32.mrb[0].mxu0
        %1553 = vdwg.mxu0
        %v1570 = vunpack.c.l.b16 %v1014
        %v1571 = vunpack.c.l.b16 %v1015
        %v1572 = vunpack.c.l.b16 %v1016
        %v1573 = vunpack.c.l.b16 %v1017
        %v1574 = vunpack.c.l.b16 %v1018
        %v1575 = vunpack.c.l.b16 %v1019
        %v1576 = vunpack.c.l.b16 %v1020
        %v1577 = vunpack.c.l.b16 %v1021
        %v1578 = vunpack.c.l.b16 %v1022
        %v1579 = vunpack.c.l.b16 %v1023
        %v1580 = vunpack.c.l.b16 %v1024
        %v1581 = vunpack.c.l.b16 %v1025
        %v1582 = vunpack.c.l.b16 %v1026
        %v1583 = vunpack.c.l.b16 %v1027
        %v1584 = vunpack.c.l.b16 %v1028
        %v1585 = vunpack.c.l.b16 %v1029
        %v1586 = vunpack.c.l.b16 %v1030
        %v1587 = vunpack.c.l.b16 %v1031
        %v1588 = vunpack.c.l.b16 %v1032
        %v1589 = vunpack.c.l.b16 %v1033
        %v1590 = vunpack.c.l.b16 %v1034
        %v1591 = vunpack.c.l.b16 %v1035
        %v1592 = vunpack.c.l.b16 %v1036
        %v1593 = vunpack.c.l.b16 %v1037
        %v1594 = vunpack.c.l.b16 %v1038
        %v1595 = vunpack.c.l.b16 %v1039
        %v1596 = vunpack.c.l.b16 %v1040
        %v1597 = vunpack.c.l.b16 %v1041
        %v1598 = vunpack.c.l.b16 %v1042
        %v1599 = vunpack.c.l.b16 %v1043
        %v1600 = vunpack.c.l.b16 %v1044
        %v1601 = vunpack.c.l.b16 %v1045
        %v1602 = vpack.c.b16 %v1571, %v1570
        %v1603 = vpack.c.b16 %v1573, %v1572
        %v1604 = vpack.c.b16 %v1575, %v1574
        %v1605 = vpack.c.b16 %v1577, %v1576
        %v1606 = vpack.c.b16 %v1579, %v1578
        %v1607 = vpack.c.b16 %v1581, %v1580
        %v1608 = vpack.c.b16 %v1583, %v1582
        %v1609 = vpack.c.b16 %v1585, %v1584
        %v1610 = vpack.c.b16 %v1587, %v1586
        %v1611 = vpack.c.b16 %v1589, %v1588
        %v1612 = vpack.c.b16 %v1591, %v1590
        %v1613 = vpack.c.b16 %v1593, %v1592
        %v1614 = vpack.c.b16 %v1595, %v1594
        %v1615 = vpack.c.b16 %v1597, %v1596
        %v1616 = vpack.c.b16 %v1599, %v1598
        %v1617 = vpack.c.b16 %v1601, %v1600
        %v1650 = vunpack.c.l.b16 %v1050
        %v1651 = vunpack.c.l.b16 %v1051
        %v1652 = vunpack.c.l.b16 %v1052
        %v1653 = vunpack.c.l.b16 %v1053
        %v1654 = vunpack.c.l.b16 %v1054
        %v1655 = vunpack.c.l.b16 %v1055
        %v1656 = vunpack.c.l.b16 %v1056
        %v1657 = vunpack.c.l.b16 %v1057
        %v1658 = vunpack.c.l.b16 %v1058
        %v1659 = vunpack.c.l.b16 %v1059
        %v1660 = vunpack.c.l.b16 %v1060
        %v1661 = vunpack.c.l.b16 %v1061
        %v1662 = vunpack.c.l.b16 %v1062
        %v1663 = vunpack.c.l.b16 %v1063
        %v1664 = vunpack.c.l.b16 %v1064
        %v1665 = vunpack.c.l.b16 %v1065
        %v1666 = vpack.c.b16 %v1651, %v1650
        %v1667 = vpack.c.b16 %v1653, %v1652
        %v1668 = vpack.c.b16 %v1655, %v1654
        %v1669 = vpack.c.b16 %v1657, %v1656
        %v1670 = vpack.c.b16 %v1659, %v1658
        %v1671 = vpack.c.b16 %v1661, %v1660
        %v1672 = vpack.c.b16 %v1663, %v1662
        %v1673 = vpack.c.b16 %v1665, %v1664
        %1682 = vmatprep.subr.bf16.mxu0 0
        %1683 = vmatpush1.bf16.msra.mxu0 %v1666
        %1684 = vmatprep.subr.bf16.mxu0 0
        %1685 = vmatpush1.bf16.msra.mxu0 %v1667
        %1686 = vmatprep.subr.bf16.mxu0 0
        %1687 = vmatpush1.bf16.msra.mxu0 %v1668
        %1688 = vmatprep.subr.bf16.mxu0 0
        %1689 = vmatpush1.bf16.msra.mxu0 %v1669
        %1690 = vmatprep.subr.bf16.mxu0 0
        %1691 = vmatpush1.bf16.msra.mxu0 %v1670
        %1692 = vmatprep.subr.bf16.mxu0 0
        %1693 = vmatpush1.bf16.msra.mxu0 %v1671
        %1694 = vmatprep.subr.bf16.mxu0 0
        %1695 = vmatpush1.bf16.msra.mxu0 %v1672
        %1696 = vmatprep.subr.bf16.mxu0 0
        %1697 = vmatpush1.bf16.msra.mxu0 %v1673
        %1698 = vmatprep.subr.bf16.mxu0 0
        %1699 = vmatpush1.bf16.msra.mxu0 0
        %1700 = vmatprep.subr.bf16.mxu0 0
        %1701 = vmatpush1.bf16.msra.mxu0 0
        %1702 = vmatprep.subr.bf16.mxu0 0
        %1703 = vmatpush1.bf16.msra.mxu0 0
        %1704 = vmatprep.subr.bf16.mxu0 0
        %1705 = vmatpush1.bf16.msra.mxu0 0
        %1706 = vmatprep.subr.bf16.mxu0 0
        %1707 = vmatpush1.bf16.msra.mxu0 0
        %1708 = vmatprep.subr.bf16.mxu0 0
        %1709 = vmatpush1.bf16.msra.mxu0 0
        %1710 = vmatprep.subr.bf16.mxu0 0
        %1711 = vmatpush1.bf16.msra.mxu0 0
        %1712 = vmatprep.subr.bf16.mxu0 0
        %1713 = vmatpush1.bf16.msra.mxu0 0
        %1714 = vmatprep.mubr.bf16.mxu0 0
        %1715 = vmatmul.mubr.bf16.gmra.mrb[0].mxu0 %v1602
        %v1716 = vpop.f32.mrb[0].mxu0
        %v1717 = vadd.f32 %v1428, %v1716
        %v1718 = vpop.f32.mrb[0].mxu0
        %v1719 = vpop.f32.mrb[0].mxu0
        %v1720 = vadd.f32 %v1431, %v1719
        %v1721 = vpop.f32.mrb[0].mxu0
        %1722 = vmatprep.mubr.bf16.mxu0 0
        %1723 = vmatmul.mubr.bf16.gmra.mrb[0].mxu0 %v1603
        %v1724 = vpop.f32.mrb[0].mxu0
        %v1725 = vadd.f32 %v1436, %v1724
        %v1726 = vpop.f32.mrb[0].mxu0
        %v1727 = vpop.f32.mrb[0].mxu0
        %v1728 = vadd.f32 %v1439, %v1727
        %v1729 = vpop.f32.mrb[0].mxu0
        %1730 = vmatprep.mubr.bf16.mxu0 0
        %1731 = vmatmul.mubr.bf16.gmra.mrb[0].mxu0 %v1604
        %v1732 = vpop.f32.mrb[0].mxu0
        %v1733 = vadd.f32 %v1444, %v1732
        %v1734 = vpop.f32.mrb[0].mxu0
        %v1735 = vpop.f32.mrb[0].mxu0
        %v1736 = vadd.f32 %v1447, %v1735
        %v1737 = vpop.f32.mrb[0].mxu0
        %1738 = vmatprep.mubr.bf16.mxu0 0
        %1739 = vmatmul.mubr.bf16.gmra.mrb[0].mxu0 %v1605
        %v1740 = vpop.f32.mrb[0].mxu0
        %v1741 = vadd.f32 %v1452, %v1740
        %v1742 = vpop.f32.mrb[0].mxu0
        %v1743 = vpop.f32.mrb[0].mxu0
        %v1744 = vadd.f32 %v1455, %v1743
        %v1745 = vpop.f32.mrb[0].mxu0
        %1746 = vmatprep.mubr.bf16.mxu0 0
        %1747 = vmatmul.mubr.bf16.gmra.mrb[0].mxu0 %v1606
        %v1748 = vpop.f32.mrb[0].mxu0
        %v1749 = vadd.f32 %v1460, %v1748
        %v1750 = vpop.f32.mrb[0].mxu0
        %v1751 = vpop.f32.mrb[0].mxu0
        %v1752 = vadd.f32 %v1463, %v1751
        %v1753 = vpop.f32.mrb[0].mxu0
        %1754 = vmatprep.mubr.bf16.mxu0 0
        %1755 = vmatmul.mubr.bf16.gmra.mrb[0].mxu0 %v1607
        %v1756 = vpop.f32.mrb[0].mxu0
        %v1757 = vadd.f32 %v1468, %v1756
        %v1758 = vpop.f32.mrb[0].mxu0
        %v1759 = vpop.f32.mrb[0].mxu0
        %v1760 = vadd.f32 %v1471, %v1759
        %v1761 = vpop.f32.mrb[0].mxu0
        %1762 = vmatprep.mubr.bf16.mxu0 0
        %1763 = vmatmul.mubr.bf16.gmra.mrb[0].mxu0 %v1608
        %v1764 = vpop.f32.mrb[0].mxu0
        %v1765 = vadd.f32 %v1476, %v1764
        %v1766 = vpop.f32.mrb[0].mxu0
        %v1767 = vpop.f32.mrb[0].mxu0
        %v1768 = vadd.f32 %v1479, %v1767
        %v1769 = vpop.f32.mrb[0].mxu0
        %1770 = vmatprep.mubr.bf16.mxu0 0
        %1771 = vmatmul.mubr.bf16.gmra.mrb[0].mxu0 %v1609
        %v1772 = vpop.f32.mrb[0].mxu0
        %v1773 = vadd.f32 %v1484, %v1772
        %v1774 = vpop.f32.mrb[0].mxu0
        %v1775 = vpop.f32.mrb[0].mxu0
        %v1776 = vadd.f32 %v1487, %v1775
        %v1777 = vpop.f32.mrb[0].mxu0
        %1778 = vmatprep.mubr.bf16.mxu0 0
        %1779 = vmatmul.mubr.bf16.gmra.mrb[0].mxu0 %v1610
        %v1780 = vpop.f32.mrb[0].mxu0
        %v1781 = vadd.f32 %v1492, %v1780
        %v1782 = vpop.f32.mrb[0].mxu0
        %v1783 = vpop.f32.mrb[0].mxu0
        %v1784 = vadd.f32 %v1495, %v1783
        %v1785 = vpop.f32.mrb[0].mxu0
        %1786 = vmatprep.mubr.bf16.mxu0 0
        %1787 = vmatmul.mubr.bf16.gmra.mrb[0].mxu0 %v1611
        %v1788 = vpop.f32.mrb[0].mxu0
        %v1789 = vadd.f32 %v1500, %v1788
        %v1790 = vpop.f32.mrb[0].mxu0
        %v1791 = vpop.f32.mrb[0].mxu0
        %v1792 = vadd.f32 %v1503, %v1791
        %v1793 = vpop.f32.mrb[0].mxu0
        %1794 = vmatprep.mubr.bf16.mxu0 0
        %1795 = vmatmul.mubr.bf16.gmra.mrb[0].mxu0 %v1612
        %v1796 = vpop.f32.mrb[0].mxu0
        %v1797 = vadd.f32 %v1508, %v1796
        %v1798 = vpop.f32.mrb[0].mxu0
        %v1799 = vpop.f32.mrb[0].mxu0
        %v1800 = vadd.f32 %v1511, %v1799
        %v1801 = vpop.f32.mrb[0].mxu0
        %1802 = vmatprep.mubr.bf16.mxu0 0
        %1803 = vmatmul.mubr.bf16.gmra.mrb[0].mxu0 %v1613
        %v1804 = vpop.f32.mrb[0].mxu0
        %v1805 = vadd.f32 %v1516, %v1804
        %v1806 = vpop.f32.mrb[0].mxu0
        %v1807 = vpop.f32.mrb[0].mxu0
        %v1808 = vadd.f32 %v1519, %v1807
        %v1809 = vpop.f32.mrb[0].mxu0
        %1810 = vmatprep.mubr.bf16.mxu0 0
        %1811 = vmatmul.mubr.bf16.gmra.mrb[0].mxu0 %v1614
        %v1812 = vpop.f32.mrb[0].mxu0
        %v1813 = vadd.f32 %v1524, %v1812
        %v1814 = vpop.f32.mrb[0].mxu0
        %v1815 = vpop.f32.mrb[0].mxu0
        %v1816 = vadd.f32 %v1527, %v1815
        %v1817 = vpop.f32.mrb[0].mxu0
        %1818 = vmatprep.mubr.bf16.mxu0 0
        %1819 = vmatmul.mubr.bf16.gmra.mrb[0].mxu0 %v1615
        %v1820 = vpop.f32.mrb[0].mxu0
        %v1821 = vadd.f32 %v1532, %v1820
        %v1822 = vpop.f32.mrb[0].mxu0
        %v1823 = vpop.f32.mrb[0].mxu0
        %v1824 = vadd.f32 %v1535, %v1823
        %v1825 = vpop.f32.mrb[0].mxu0
        %1826 = vmatprep.mubr.bf16.mxu0 0
        %1827 = vmatmul.mubr.bf16.gmra.mrb[0].mxu0 %v1616
        %v1828 = vpop.f32.mrb[0].mxu0
        %v1829 = vadd.f32 %v1540, %v1828
        %v1830 = vpop.f32.mrb[0].mxu0
        %v1831 = vpop.f32.mrb[0].mxu0
        %v1832 = vadd.f32 %v1543, %v1831
        %v1833 = vpop.f32.mrb[0].mxu0
        %1834 = vmatprep.mubr.bf16.mxu0 0
        %1835 = vmatmul.mubr.bf16.gmra.mrb[0].mxu0 %v1617
        %v1836 = vpop.f32.mrb[0].mxu0
        %v1837 = vadd.f32 %v1548, %v1836
        %v1838 = vpop.f32.mrb[0].mxu0
        %v1839 = vpop.f32.mrb[0].mxu0
        %v1840 = vadd.f32 %v1551, %v1839
        %v1841 = vpop.f32.mrb[0].mxu0
        %1842 = vdwg.mxu0
        %v1843 = vld [vmem:[#allocation2] sm:$0xc]
        %v1844 = vld [vmem:[#allocation2 + $0x8] sm:$0x3]
        %v1845 = vld [vmem:[#allocation2 + $0xc] sm:$0xc]
        %v1846 = vld [vmem:[#allocation2 + $0x14] sm:$0x3]
        %v1847 = vld [vmem:[#allocation2 + $0x18] sm:$0xc]
        %v1848 = vld [vmem:[#allocation2 + $0x20] sm:$0x3]
        %v1849 = vld [vmem:[#allocation2 + $0x24] sm:$0xc]
        %v1850 = vld [vmem:[#allocation2 + $0x2c] sm:$0x3]
        %v1851 = vld [vmem:[#allocation2 + $0x30] sm:$0xc]
        %v1852 = vld [vmem:[#allocation2 + $0x38] sm:$0x3]
        %v1853 = vld [vmem:[#allocation2 + $0x3c] sm:$0xc]
        %v1854 = vld [vmem:[#allocation2 + $0x44] sm:$0x3]
        %v1855 = vld [vmem:[#allocation2 + $0x48] sm:$0xc]
        %v1856 = vld [vmem:[#allocation2 + $0x50] sm:$0x3]
        %v1857 = vld [vmem:[#allocation2 + $0x54] sm:$0xc]
        %v1858 = vld [vmem:[#allocation2 + $0x5c] sm:$0x3]
        %v1859 = vld [vmem:[#allocation2 + $0x60] sm:$0xc]
        %v1860 = vld [vmem:[#allocation2 + $0x68] sm:$0x3]
        %v1861 = vld [vmem:[#allocation2 + $0x6c] sm:$0xc]
        %v1862 = vld [vmem:[#allocation2 + $0x74] sm:$0x3]
        %v1863 = vld [vmem:[#allocation2 + $0x78] sm:$0xc]
        %v1864 = vld [vmem:[#allocation2 + $0x80] sm:$0x3]
        %v1865 = vld [vmem:[#allocation2 + $0x84] sm:$0xc]
        %v1866 = vld [vmem:[#allocation2 + $0x8c] sm:$0x3]
        %v1867 = vld [vmem:[#allocation2 + $0x90] sm:$0xc]
        %v1868 = vld [vmem:[#allocation2 + $0x98] sm:$0x3]
        %v1869 = vld [vmem:[#allocation2 + $0x9c] sm:$0xc]
        %v1870 = vld [vmem:[#allocation2 + $0xa4] sm:$0x3]
        %v1871 = vld [vmem:[#allocation2 + $0xa8] sm:$0xc]
        %v1872 = vld [vmem:[#allocation2 + $0xb0] sm:$0x3]
        %v1873 = vld [vmem:[#allocation2 + $0xb4] sm:$0xc]
        %v1874 = vld [vmem:[#allocation2 + $0xbc] sm:$0x3]
        %vm1907 = vcmask 1041408
        %vm1908 = vcmask 1045508
        %vm1909 = vmor %vm1907, %vm1908
        %v1910 = vrot.slane %v1843, 6
        %v1911 = vrot.slane %v1910, 4
        %v1912 = vrot.slane %v1015, 6
        %v1913 = vsel %vm1909, %v1911, %v1912
        %v1914 = vrot.slane %v1912, 4
        %v1915 = vrot.slane %v1844, 6
        %v1916 = vsel %vm1909, %v1914, %v1915
        %v1917 = vrot.slane %v1845, 6
        %v1918 = vrot.slane %v1917, 4
        %v1919 = vrot.slane %v1017, 6
        %v1920 = vsel %vm1909, %v1918, %v1919
        %v1921 = vrot.slane %v1919, 4
        %v1922 = vrot.slane %v1846, 6
        %v1923 = vsel %vm1909, %v1921, %v1922
        %v1924 = vrot.slane %v1847, 6
        %v1925 = vrot.slane %v1924, 4
        %v1926 = vrot.slane %v1019, 6
        %v1927 = vsel %vm1909, %v1925, %v1926
        %v1928 = vrot.slane %v1926, 4
        %v1929 = vrot.slane %v1848, 6
        %v1930 = vsel %vm1909, %v1928, %v1929
        %v1931 = vrot.slane %v1849, 6
        %v1932 = vrot.slane %v1931, 4
        %v1933 = vrot.slane %v1021, 6
        %v1934 = vsel %vm1909, %v1932, %v1933
        %v1935 = vrot.slane %v1933, 4
        %v1936 = vrot.slane %v1850, 6
        %v1937 = vsel %vm1909, %v1935, %v1936
        %v1938 = vrot.slane %v1851, 6
        %v1939 = vrot.slane %v1938, 4
        %v1940 = vrot.slane %v1023, 6
        %v1941 = vsel %vm1909, %v1939, %v1940
        %v1942 = vrot.slane %v1940, 4
        %v1943 = vrot.slane %v1852, 6
        %v1944 = vsel %vm1909, %v1942, %v1943
        %v1945 = vrot.slane %v1853, 6
        %v1946 = vrot.slane %v1945, 4
        %v1947 = vrot.slane %v1025, 6
        %v1948 = vsel %vm1909, %v1946, %v1947
        %v1949 = vrot.slane %v1947, 4
        %v1950 = vrot.slane %v1854, 6
        %v1951 = vsel %vm1909, %v1949, %v1950
        %v1952 = vrot.slane %v1855, 6
        %v1953 = vrot.slane %v1952, 4
        %v1954 = vrot.slane %v1027, 6
        %v1955 = vsel %vm1909, %v1953, %v1954
        %v1956 = vrot.slane %v1954, 4
        %v1957 = vrot.slane %v1856, 6
        %v1958 = vsel %vm1909, %v1956, %v1957
        %v1959 = vrot.slane %v1857, 6
        %v1960 = vrot.slane %v1959, 4
        %v1961 = vrot.slane %v1029, 6
        %v1962 = vsel %vm1909, %v1960, %v1961
        %v1963 = vrot.slane %v1961, 4
        %v1964 = vrot.slane %v1858, 6
        %v1965 = vsel %vm1909, %v1963, %v1964
        %v1966 = vrot.slane %v1859, 6
        %v1967 = vrot.slane %v1966, 4
        %v1968 = vrot.slane %v1031, 6
        %v1969 = vsel %vm1909, %v1967, %v1968
        %v1970 = vrot.slane %v1968, 4
        %v1971 = vrot.slane %v1860, 6
        %v1972 = vsel %vm1909, %v1970, %v1971
        %v1973 = vrot.slane %v1861, 6
        %v1974 = vrot.slane %v1973, 4
        %v1975 = vrot.slane %v1033, 6
        %v1976 = vsel %vm1909, %v1974, %v1975
        %v1977 = vrot.slane %v1975, 4
        %v1978 = vrot.slane %v1862, 6
        %v1979 = vsel %vm1909, %v1977, %v1978
        %v1980 = vrot.slane %v1863, 6
        %v1981 = vrot.slane %v1980, 4
        %v1982 = vrot.slane %v1035, 6
        %v1983 = vsel %vm1909, %v1981, %v1982
        %v1984 = vrot.slane %v1982, 4
        %v1985 = vrot.slane %v1864, 6
        %v1986 = vsel %vm1909, %v1984, %v1985
        %v1987 = vrot.slane %v1865, 6
        %v1988 = vrot.slane %v1987, 4
        %v1989 = vrot.slane %v1037, 6
        %v1990 = vsel %vm1909, %v1988, %v1989
        %v1991 = vrot.slane %v1989, 4
        %v1992 = vrot.slane %v1866, 6
        %v1993 = vsel %vm1909, %v1991, %v1992
        %v1994 = vrot.slane %v1867, 6
        %v1995 = vrot.slane %v1994, 4
        %v1996 = vrot.slane %v1039, 6
        %v1997 = vsel %vm1909, %v1995, %v1996
        %v1998 = vrot.slane %v1996, 4
        %v1999 = vrot.slane %v1868, 6
        %v2000 = vsel %vm1909, %v1998, %v1999
        %v2001 = vrot.slane %v1869, 6
        %v2002 = vrot.slane %v2001, 4
        %v2003 = vrot.slane %v1041, 6
        %v2004 = vsel %vm1909, %v2002, %v2003
        %v2005 = vrot.slane %v2003, 4
        %v2006 = vrot.slane %v1870, 6
        %v2007 = vsel %vm1909, %v2005, %v2006
        %v2008 = vrot.slane %v1871, 6
        %v2009 = vrot.slane %v2008, 4
        %v2010 = vrot.slane %v1043, 6
        %v2011 = vsel %vm1909, %v2009, %v2010
        %v2012 = vrot.slane %v2010, 4
        %v2013 = vrot.slane %v1872, 6
        %v2014 = vsel %vm1909, %v2012, %v2013
        %v2015 = vrot.slane %v1873, 6
        %v2016 = vrot.slane %v2015, 4
        %v2017 = vrot.slane %v1045, 6
        %v2018 = vsel %vm1909, %v2016, %v2017
        %v2019 = vrot.slane %v2017, 4
        %v2020 = vrot.slane %v1874, 6
        %v2021 = vsel %vm1909, %v2019, %v2020
        %s2022 = sadd.s32 %s1046, 2
        %s2023 = smul.u32 %s2022, 16
        %s2024 = smul.addr %s2023, 4
        %s2025 = scalar_lea.vmem [#allocation9], %s2024
        %v2026 = vld [vmem:[%s2025] sm:$0xf]
        %v2027 = vld [vmem:[%s2025 + $0x4] sm:$0xf]
        %v2028 = vld [vmem:[%s2025 + $0x8] sm:$0xf]
        %v2029 = vld [vmem:[%s2025 + $0xc] sm:$0xf]
        %v2030 = vld [vmem:[%s2025 + $0x10] sm:$0xf]
        %v2031 = vld [vmem:[%s2025 + $0x14] sm:$0xf]
        %v2032 = vld [vmem:[%s2025 + $0x18] sm:$0xf]
        %v2033 = vld [vmem:[%s2025 + $0x1c] sm:$0xf]
        %v2034 = vld [vmem:[%s2025 + $0x20] sm:$0xf]
        %v2035 = vld [vmem:[%s2025 + $0x24] sm:$0xf]
        %v2036 = vld [vmem:[%s2025 + $0x28] sm:$0xf]
        %v2037 = vld [vmem:[%s2025 + $0x2c] sm:$0xf]
        %v2038 = vld [vmem:[%s2025 + $0x30] sm:$0xf]
        %v2039 = vld [vmem:[%s2025 + $0x34] sm:$0xf]
        %v2040 = vld [vmem:[%s2025 + $0x38] sm:$0xf]
        %v2041 = vld [vmem:[%s2025 + $0x3c] sm:$0xf]
        %v2042 = vunpack.c.l.b16 %v1913
        %v2043 = vunpack.c.l.b16 %v1916
        %v2044 = vunpack.c.l.b16 %v1920
        %v2045 = vunpack.c.l.b16 %v1923
        %v2046 = vunpack.c.l.b16 %v1927
        %v2047 = vunpack.c.l.b16 %v1930
        %v2048 = vunpack.c.l.b16 %v1934
        %v2049 = vunpack.c.l.b16 %v1937
        %v2050 = vunpack.c.l.b16 %v1941
        %v2051 = vunpack.c.l.b16 %v1944
        %v2052 = vunpack.c.l.b16 %v1948
        %v2053 = vunpack.c.l.b16 %v1951
        %v2054 = vunpack.c.l.b16 %v1955
        %v2055 = vunpack.c.l.b16 %v1958
        %v2056 = vunpack.c.l.b16 %v1962
        %v2057 = vunpack.c.l.b16 %v1965
        %v2058 = vunpack.c.l.b16 %v1969
        %v2059 = vunpack.c.l.b16 %v1972
        %v2060 = vunpack.c.l.b16 %v1976
        %v2061 = vunpack.c.l.b16 %v1979
        %v2062 = vunpack.c.l.b16 %v1983
        %v2063 = vunpack.c.l.b16 %v1986
        %v2064 = vunpack.c.l.b16 %v1990
        %v2065 = vunpack.c.l.b16 %v1993
        %v2066 = vunpack.c.l.b16 %v1997
        %v2067 = vunpack.c.l.b16 %v2000
        %v2068 = vunpack.c.l.b16 %v2004
        %v2069 = vunpack.c.l.b16 %v2007
        %v2070 = vunpack.c.l.b16 %v2011
        %v2071 = vunpack.c.l.b16 %v2014
        %v2072 = vunpack.c.l.b16 %v2018
        %v2073 = vunpack.c.l.b16 %v2021
        %v2074 = vpack.c.b16 %v2043, %v2042
        %v2075 = vpack.c.b16 %v2045, %v2044
        %v2076 = vpack.c.b16 %v2047, %v2046
        %v2077 = vpack.c.b16 %v2049, %v2048
        %v2078 = vpack.c.b16 %v2051, %v2050
        %v2079 = vpack.c.b16 %v2053, %v2052
        %v2080 = vpack.c.b16 %v2055, %v2054
        %v2081 = vpack.c.b16 %v2057, %v2056
        %v2082 = vpack.c.b16 %v2059, %v2058
        %v2083 = vpack.c.b16 %v2061, %v2060
        %v2084 = vpack.c.b16 %v2063, %v2062
        %v2085 = vpack.c.b16 %v2065, %v2064
        %v2086 = vpack.c.b16 %v2067, %v2066
        %v2087 = vpack.c.b16 %v2069, %v2068
        %v2088 = vpack.c.b16 %v2071, %v2070
        %v2089 = vpack.c.b16 %v2073, %v2072
        %v2122 = vunpack.c.l.b16 %v2026
        %v2123 = vunpack.c.l.b16 %v2027
        %v2124 = vunpack.c.l.b16 %v2028
        %v2125 = vunpack.c.l.b16 %v2029
        %v2126 = vunpack.c.l.b16 %v2030
        %v2127 = vunpack.c.l.b16 %v2031
        %v2128 = vunpack.c.l.b16 %v2032
        %v2129 = vunpack.c.l.b16 %v2033
        %v2130 = vunpack.c.l.b16 %v2034
        %v2131 = vunpack.c.l.b16 %v2035
        %v2132 = vunpack.c.l.b16 %v2036
        %v2133 = vunpack.c.l.b16 %v2037
        %v2134 = vunpack.c.l.b16 %v2038
        %v2135 = vunpack.c.l.b16 %v2039
        %v2136 = vunpack.c.l.b16 %v2040
        %v2137 = vunpack.c.l.b16 %v2041
        %v2138 = vpack.c.b16 %v2123, %v2122
        %v2139 = vpack.c.b16 %v2125, %v2124
        %v2140 = vpack.c.b16 %v2127, %v2126
        %v2141 = vpack.c.b16 %v2129, %v2128
        %v2142 = vpack.c.b16 %v2131, %v2130
        %v2143 = vpack.c.b16 %v2133, %v2132
        %v2144 = vpack.c.b16 %v2135, %v2134
        %v2145 = vpack.c.b16 %v2137, %v2136
        %2154 = vmatprep.subr.bf16.mxu0 0
        %2155 = vmatpush1.bf16.msra.mxu0 %v2138
        %2156 = vmatprep.subr.bf16.mxu0 0
        %2157 = vmatpush1.bf16.msra.mxu0 %v2139
        %2158 = vmatprep.subr.bf16.mxu0 0
        %2159 = vmatpush1.bf16.msra.mxu0 %v2140
        %2160 = vmatprep.subr.bf16.mxu0 0
        %2161 = vmatpush1.bf16.msra.mxu0 %v2141
        %2162 = vmatprep.subr.bf16.mxu0 0
        %2163 = vmatpush1.bf16.msra.mxu0 %v2142
        %2164 = vmatprep.subr.bf16.mxu0 0
        %2165 = vmatpush1.bf16.msra.mxu0 %v2143
        %2166 = vmatprep.subr.bf16.mxu0 0
        %2167 = vmatpush1.bf16.msra.mxu0 %v2144
        %2168 = vmatprep.subr.bf16.mxu0 0
        %2169 = vmatpush1.bf16.msra.mxu0 %v2145
        %2170 = vmatprep.subr.bf16.mxu0 0
        %2171 = vmatpush1.bf16.msra.mxu0 0
        %2172 = vmatprep.subr.bf16.mxu0 0
        %2173 = vmatpush1.bf16.msra.mxu0 0
        %2174 = vmatprep.subr.bf16.mxu0 0
        %2175 = vmatpush1.bf16.msra.mxu0 0
        %2176 = vmatprep.subr.bf16.mxu0 0
        %2177 = vmatpush1.bf16.msra.mxu0 0
        %2178 = vmatprep.subr.bf16.mxu0 0
        %2179 = vmatpush1.bf16.msra.mxu0 0
        %2180 = vmatprep.subr.bf16.mxu0 0
        %2181 = vmatpush1.bf16.msra.mxu0 0
        %2182 = vmatprep.subr.bf16.mxu0 0
        %2183 = vmatpush1.bf16.msra.mxu0 0
        %2184 = vmatprep.subr.bf16.mxu0 0
        %2185 = vmatpush1.bf16.msra.mxu0 0
        %2186 = vmatprep.mubr.bf16.mxu0 0
        %2187 = vmatmul.mubr.bf16.gmra.mrb[0].mxu0 %v2074
        %v2188 = vpop.f32.mrb[0].mxu0
        %v2189 = vadd.f32 0.0, %v2188
        %v2190 = vpop.f32.mrb[0].mxu0
        %v2191 = vpop.f32.mrb[0].mxu0
        %v2192 = vadd.f32 0.0, %v2191
        %v2193 = vpop.f32.mrb[0].mxu0
        %2194 = vmatprep.mubr.bf16.mxu0 0
        %2195 = vmatmul.mubr.bf16.gmra.mrb[0].mxu0 %v2075
        %v2196 = vpop.f32.mrb[0].mxu0
        %v2197 = vadd.f32 0.0, %v2196
        %v2198 = vpop.f32.mrb[0].mxu0
        %v2199 = vpop.f32.mrb[0].mxu0
        %v2200 = vadd.f32 0.0, %v2199
        %v2201 = vpop.f32.mrb[0].mxu0
        %2202 = vmatprep.mubr.bf16.mxu0 0
        %2203 = vmatmul.mubr.bf16.gmra.mrb[0].mxu0 %v2076
        %v2204 = vpop.f32.mrb[0].mxu0
        %v2205 = vadd.f32 0.0, %v2204
        %v2206 = vpop.f32.mrb[0].mxu0
        %v2207 = vpop.f32.mrb[0].mxu0
        %v2208 = vadd.f32 0.0, %v2207
        %v2209 = vpop.f32.mrb[0].mxu0
        %2210 = vmatprep.mubr.bf16.mxu0 0
        %2211 = vmatmul.mubr.bf16.gmra.mrb[0].mxu0 %v2077
        %v2212 = vpop.f32.mrb[0].mxu0
        %v2213 = vadd.f32 0.0, %v2212
        %v2214 = vpop.f32.mrb[0].mxu0
        %v2215 = vpop.f32.mrb[0].mxu0
        %v2216 = vadd.f32 0.0, %v2215
        %v2217 = vpop.f32.mrb[0].mxu0
        %2218 = vmatprep.mubr.bf16.mxu0 0
        %2219 = vmatmul.mubr.bf16.gmra.mrb[0].mxu0 %v2078
        %v2220 = vpop.f32.mrb[0].mxu0
        %v2221 = vadd.f32 0.0, %v2220
        %v2222 = vpop.f32.mrb[0].mxu0
        %v2223 = vpop.f32.mrb[0].mxu0
        %v2224 = vadd.f32 0.0, %v2223
        %v2225 = vpop.f32.mrb[0].mxu0
        %2226 = vmatprep.mubr.bf16.mxu0 0
        %2227 = vmatmul.mubr.bf16.gmra.mrb[0].mxu0 %v2079
        %v2228 = vpop.f32.mrb[0].mxu0
        %v2229 = vadd.f32 0.0, %v2228
        %v2230 = vpop.f32.mrb[0].mxu0
        %v2231 = vpop.f32.mrb[0].mxu0
        %v2232 = vadd.f32 0.0, %v2231
        %v2233 = vpop.f32.mrb[0].mxu0
        %2234 = vmatprep.mubr.bf16.mxu0 0
        %2235 = vmatmul.mubr.bf16.gmra.mrb[0].mxu0 %v2080
        %v2236 = vpop.f32.mrb[0].mxu0
        %v2237 = vadd.f32 0.0, %v2236
        %v2238 = vpop.f32.mrb[0].mxu0
        %v2239 = vpop.f32.mrb[0].mxu0
        %v2240 = vadd.f32 0.0, %v2239
        %v2241 = vpop.f32.mrb[0].mxu0
        %2242 = vmatprep.mubr.bf16.mxu0 0
        %2243 = vmatmul.mubr.bf16.gmra.mrb[0].mxu0 %v2081
        %v2244 = vpop.f32.mrb[0].mxu0
        %v2245 = vadd.f32 0.0, %v2244
        %v2246 = vpop.f32.mrb[0].mxu0
        %v2247 = vpop.f32.mrb[0].mxu0
        %v2248 = vadd.f32 0.0, %v2247
        %v2249 = vpop.f32.mrb[0].mxu0
        %2250 = vmatprep.mubr.bf16.mxu0 0
        %2251 = vmatmul.mubr.bf16.gmra.mrb[0].mxu0 %v2082
        %v2252 = vpop.f32.mrb[0].mxu0
        %v2253 = vadd.f32 0.0, %v2252
        %v2254 = vpop.f32.mrb[0].mxu0
        %v2255 = vpop.f32.mrb[0].mxu0
        %v2256 = vadd.f32 0.0, %v2255
        %v2257 = vpop.f32.mrb[0].mxu0
        %2258 = vmatprep.mubr.bf16.mxu0 0
        %2259 = vmatmul.mubr.bf16.gmra.mrb[0].mxu0 %v2083
        %v2260 = vpop.f32.mrb[0].mxu0
        %v2261 = vadd.f32 0.0, %v2260
        %v2262 = vpop.f32.mrb[0].mxu0
        %v2263 = vpop.f32.mrb[0].mxu0
        %v2264 = vadd.f32 0.0, %v2263
        %v2265 = vpop.f32.mrb[0].mxu0
        %2266 = vmatprep.mubr.bf16.mxu0 0
        %2267 = vmatmul.mubr.bf16.gmra.mrb[0].mxu0 %v2084
        %v2268 = vpop.f32.mrb[0].mxu0
        %v2269 = vadd.f32 0.0, %v2268
        %v2270 = vpop.f32.mrb[0].mxu0
        %v2271 = vpop.f32.mrb[0].mxu0
        %v2272 = vadd.f32 0.0, %v2271
        %v2273 = vpop.f32.mrb[0].mxu0
        %2274 = vmatprep.mubr.bf16.mxu0 0
        %2275 = vmatmul.mubr.bf16.gmra.mrb[0].mxu0 %v2085
        %v2276 = vpop.f32.mrb[0].mxu0
        %v2277 = vadd.f32 0.0, %v2276
        %v2278 = vpop.f32.mrb[0].mxu0
        %v2279 = vpop.f32.mrb[0].mxu0
        %v2280 = vadd.f32 0.0, %v2279
        %v2281 = vpop.f32.mrb[0].mxu0
        %2282 = vmatprep.mubr.bf16.mxu0 0
        %2283 = vmatmul.mubr.bf16.gmra.mrb[0].mxu0 %v2086
        %v2284 = vpop.f32.mrb[0].mxu0
        %v2285 = vadd.f32 0.0, %v2284
        %v2286 = vpop.f32.mrb[0].mxu0
        %v2287 = vpop.f32.mrb[0].mxu0
        %v2288 = vadd.f32 0.0, %v2287
        %v2289 = vpop.f32.mrb[0].mxu0
        %2290 = vmatprep.mubr.bf16.mxu0 0
        %2291 = vmatmul.mubr.bf16.gmra.mrb[0].mxu0 %v2087
        %v2292 = vpop.f32.mrb[0].mxu0
        %v2293 = vadd.f32 0.0, %v2292
        %v2294 = vpop.f32.mrb[0].mxu0
        %v2295 = vpop.f32.mrb[0].mxu0
        %v2296 = vadd.f32 0.0, %v2295
        %v2297 = vpop.f32.mrb[0].mxu0
        %2298 = vmatprep.mubr.bf16.mxu0 0
        %2299 = vmatmul.mubr.bf16.gmra.mrb[0].mxu0 %v2088
        %v2300 = vpop.f32.mrb[0].mxu0
        %v2301 = vadd.f32 0.0, %v2300
        %v2302 = vpop.f32.mrb[0].mxu0
        %v2303 = vpop.f32.mrb[0].mxu0
        %v2304 = vadd.f32 0.0, %v2303
        %v2305 = vpop.f32.mrb[0].mxu0
        %2306 = vmatprep.mubr.bf16.mxu0 0
        %2307 = vmatmul.mubr.bf16.gmra.mrb[0].mxu0 %v2089
        %v2308 = vpop.f32.mrb[0].mxu0
        %v2309 = vadd.f32 0.0, %v2308
        %v2310 = vpop.f32.mrb[0].mxu0
        %v2311 = vpop.f32.mrb[0].mxu0
        %v2312 = vadd.f32 0.0, %v2311
        %v2313 = vpop.f32.mrb[0].mxu0
        %2314 = vdwg.mxu0
        %v2315 = vadd.f32 %v1717, %v2189
        %v2316 = vadd.f32 %v1720, %v2192
        %v2317 = vadd.f32 %v1725, %v2197
        %v2318 = vadd.f32 %v1728, %v2200
        %v2319 = vadd.f32 %v1733, %v2205
        %v2320 = vadd.f32 %v1736, %v2208
        %v2321 = vadd.f32 %v1741, %v2213
        %v2322 = vadd.f32 %v1744, %v2216
        %v2323 = vadd.f32 %v1749, %v2221
        %v2324 = vadd.f32 %v1752, %v2224
        %v2325 = vadd.f32 %v1757, %v2229
        %v2326 = vadd.f32 %v1760, %v2232
        %v2327 = vadd.f32 %v1765, %v2237
        %v2328 = vadd.f32 %v1768, %v2240
        %v2329 = vadd.f32 %v1773, %v2245
        %v2330 = vadd.f32 %v1776, %v2248
        %v2331 = vadd.f32 %v1781, %v2253
        %v2332 = vadd.f32 %v1784, %v2256
        %v2333 = vadd.f32 %v1789, %v2261
        %v2334 = vadd.f32 %v1792, %v2264
        %v2335 = vadd.f32 %v1797, %v2269
        %v2336 = vadd.f32 %v1800, %v2272
        %v2337 = vadd.f32 %v1805, %v2277
        %v2338 = vadd.f32 %v1808, %v2280
        %v2339 = vadd.f32 %v1813, %v2285
        %v2340 = vadd.f32 %v1816, %v2288
        %v2341 = vadd.f32 %v1821, %v2293
        %v2342 = vadd.f32 %v1824, %v2296
        %v2343 = vadd.f32 %v1829, %v2301
        %v2344 = vadd.f32 %v1832, %v2304
        %v2345 = vadd.f32 %v1837, %v2309
        %v2346 = vadd.f32 %v1840, %v2312
        %v2347 = vld [vmem:[%s965] sm:$0xf]
        %v2348 = vld [vmem:[%s965 + $0x4] sm:$0xf]
        %v2349 = vld [vmem:[%s965 + $0xc] sm:$0xf]
        %v2350 = vld [vmem:[%s965 + $0x10] sm:$0xf]
        %v2351 = vld [vmem:[%s965 + $0x18] sm:$0xf]
        %v2352 = vld [vmem:[%s965 + $0x1c] sm:$0xf]
        %v2353 = vld [vmem:[%s965 + $0x24] sm:$0xf]
        %v2354 = vld [vmem:[%s965 + $0x28] sm:$0xf]
        %v2355 = vld [vmem:[%s965 + $0x30] sm:$0xf]
        %v2356 = vld [vmem:[%s965 + $0x34] sm:$0xf]
        %v2357 = vld [vmem:[%s965 + $0x3c] sm:$0xf]
        %v2358 = vld [vmem:[%s965 + $0x40] sm:$0xf]
        %v2359 = vld [vmem:[%s965 + $0x48] sm:$0xf]
        %v2360 = vld [vmem:[%s965 + $0x4c] sm:$0xf]
        %v2361 = vld [vmem:[%s965 + $0x54] sm:$0xf]
        %v2362 = vld [vmem:[%s965 + $0x58] sm:$0xf]
        %v2363 = vld [vmem:[%s965 + $0x60] sm:$0xf]
        %v2364 = vld [vmem:[%s965 + $0x64] sm:$0xf]
        %v2365 = vld [vmem:[%s965 + $0x6c] sm:$0xf]
        %v2366 = vld [vmem:[%s965 + $0x70] sm:$0xf]
        %v2367 = vld [vmem:[%s965 + $0x78] sm:$0xf]
        %v2368 = vld [vmem:[%s965 + $0x7c] sm:$0xf]
        %v2369 = vld [vmem:[%s965 + $0x84] sm:$0xf]
        %v2370 = vld [vmem:[%s965 + $0x88] sm:$0xf]
        %v2371 = vld [vmem:[%s965 + $0x90] sm:$0xf]
        %v2372 = vld [vmem:[%s965 + $0x94] sm:$0xf]
        %v2373 = vld [vmem:[%s965 + $0x9c] sm:$0xf]
        %v2374 = vld [vmem:[%s965 + $0xa0] sm:$0xf]
        %v2375 = vld [vmem:[%s965 + $0xa8] sm:$0xf]
        %v2376 = vld [vmem:[%s965 + $0xac] sm:$0xf]
        %v2377 = vld [vmem:[%s965 + $0xb4] sm:$0xf]
        %v2378 = vld [vmem:[%s965 + $0xb8] sm:$0xf]
        %s2379 = sadd.s32 %s1046, 3
        %s2380 = smul.u32 %s2379, 16
        %s2381 = smul.addr %s2380, 4
        %s2382 = scalar_lea.vmem [#allocation9], %s2381
        %v2383 = vld [vmem:[%s2382] sm:$0xf]
        %v2384 = vld [vmem:[%s2382 + $0x4] sm:$0xf]
        %v2385 = vld [vmem:[%s2382 + $0x8] sm:$0xf]
        %v2386 = vld [vmem:[%s2382 + $0xc] sm:$0xf]
        %v2387 = vld [vmem:[%s2382 + $0x10] sm:$0xf]
        %v2388 = vld [vmem:[%s2382 + $0x14] sm:$0xf]
        %v2389 = vld [vmem:[%s2382 + $0x18] sm:$0xf]
        %v2390 = vld [vmem:[%s2382 + $0x1c] sm:$0xf]
        %v2391 = vld [vmem:[%s2382 + $0x20] sm:$0xf]
        %v2392 = vld [vmem:[%s2382 + $0x24] sm:$0xf]
        %v2393 = vld [vmem:[%s2382 + $0x28] sm:$0xf]
        %v2394 = vld [vmem:[%s2382 + $0x2c] sm:$0xf]
        %v2395 = vld [vmem:[%s2382 + $0x30] sm:$0xf]
        %v2396 = vld [vmem:[%s2382 + $0x34] sm:$0xf]
        %v2397 = vld [vmem:[%s2382 + $0x38] sm:$0xf]
        %v2398 = vld [vmem:[%s2382 + $0x3c] sm:$0xf]
        %v2431 = vunpack.c.l.b16 %v2347
        %v2432 = vunpack.c.l.b16 %v2348
        %v2433 = vunpack.c.l.b16 %v2349
        %v2434 = vunpack.c.l.b16 %v2350
        %v2435 = vunpack.c.l.b16 %v2351
        %v2436 = vunpack.c.l.b16 %v2352
        %v2437 = vunpack.c.l.b16 %v2353
        %v2438 = vunpack.c.l.b16 %v2354
        %v2439 = vunpack.c.l.b16 %v2355
        %v2440 = vunpack.c.l.b16 %v2356
        %v2441 = vunpack.c.l.b16 %v2357
        %v2442 = vunpack.c.l.b16 %v2358
        %v2443 = vunpack.c.l.b16 %v2359
        %v2444 = vunpack.c.l.b16 %v2360
        %v2445 = vunpack.c.l.b16 %v2361
        %v2446 = vunpack.c.l.b16 %v2362
        %v2447 = vunpack.c.l.b16 %v2363
        %v2448 = vunpack.c.l.b16 %v2364
        %v2449 = vunpack.c.l.b16 %v2365
        %v2450 = vunpack.c.l.b16 %v2366
        %v2451 = vunpack.c.l.b16 %v2367
        %v2452 = vunpack.c.l.b16 %v2368
        %v2453 = vunpack.c.l.b16 %v2369
        %v2454 = vunpack.c.l.b16 %v2370
        %v2455 = vunpack.c.l.b16 %v2371
        %v2456 = vunpack.c.l.b16 %v2372
        %v2457 = vunpack.c.l.b16 %v2373
        %v2458 = vunpack.c.l.b16 %v2374
        %v2459 = vunpack.c.l.b16 %v2375
        %v2460 = vunpack.c.l.b16 %v2376
        %v2461 = vunpack.c.l.b16 %v2377
        %v2462 = vunpack.c.l.b16 %v2378
        %v2463 = vpack.c.b16 %v2432, %v2431
        %v2464 = vpack.c.b16 %v2434, %v2433
        %v2465 = vpack.c.b16 %v2436, %v2435
        %v2466 = vpack.c.b16 %v2438, %v2437
        %v2467 = vpack.c.b16 %v2440, %v2439
        %v2468 = vpack.c.b16 %v2442, %v2441
        %v2469 = vpack.c.b16 %v2444, %v2443
        %v2470 = vpack.c.b16 %v2446, %v2445
        %v2471 = vpack.c.b16 %v2448, %v2447
        %v2472 = vpack.c.b16 %v2450, %v2449
        %v2473 = vpack.c.b16 %v2452, %v2451
        %v2474 = vpack.c.b16 %v2454, %v2453
        %v2475 = vpack.c.b16 %v2456, %v2455
        %v2476 = vpack.c.b16 %v2458, %v2457
        %v2477 = vpack.c.b16 %v2460, %v2459
        %v2478 = vpack.c.b16 %v2462, %v2461
        %v2511 = vunpack.c.l.b16 %v2383
        %v2512 = vunpack.c.l.b16 %v2384
        %v2513 = vunpack.c.l.b16 %v2385
        %v2514 = vunpack.c.l.b16 %v2386
        %v2515 = vunpack.c.l.b16 %v2387
        %v2516 = vunpack.c.l.b16 %v2388
        %v2517 = vunpack.c.l.b16 %v2389
        %v2518 = vunpack.c.l.b16 %v2390
        %v2519 = vunpack.c.l.b16 %v2391
        %v2520 = vunpack.c.l.b16 %v2392
        %v2521 = vunpack.c.l.b16 %v2393
        %v2522 = vunpack.c.l.b16 %v2394
        %v2523 = vunpack.c.l.b16 %v2395
        %v2524 = vunpack.c.l.b16 %v2396
        %v2525 = vunpack.c.l.b16 %v2397
        %v2526 = vunpack.c.l.b16 %v2398
        %v2527 = vpack.c.b16 %v2512, %v2511
        %v2528 = vpack.c.b16 %v2514, %v2513
        %v2529 = vpack.c.b16 %v2516, %v2515
        %v2530 = vpack.c.b16 %v2518, %v2517
        %v2531 = vpack.c.b16 %v2520, %v2519
        %v2532 = vpack.c.b16 %v2522, %v2521
        %v2533 = vpack.c.b16 %v2524, %v2523
        %v2534 = vpack.c.b16 %v2526, %v2525
        %2543 = vmatprep.subr.bf16.mxu0 0
        %2544 = vmatpush1.bf16.msra.mxu0 %v2527
        %2545 = vmatprep.subr.bf16.mxu0 0
        %2546 = vmatpush1.bf16.msra.mxu0 %v2528
        %2547 = vmatprep.subr.bf16.mxu0 0
        %2548 = vmatpush1.bf16.msra.mxu0 %v2529
        %2549 = vmatprep.subr.bf16.mxu0 0
        %2550 = vmatpush1.bf16.msra.mxu0 %v2530
        %2551 = vmatprep.subr.bf16.mxu0 0
        %2552 = vmatpush1.bf16.msra.mxu0 %v2531
        %2553 = vmatprep.subr.bf16.mxu0 0
        %2554 = vmatpush1.bf16.msra.mxu0 %v2532
        %2555 = vmatprep.subr.bf16.mxu0 0
        %2556 = vmatpush1.bf16.msra.mxu0 %v2533
        %2557 = vmatprep.subr.bf16.mxu0 0
        %2558 = vmatpush1.bf16.msra.mxu0 %v2534
        %2559 = vmatprep.subr.bf16.mxu0 0
        %2560 = vmatpush1.bf16.msra.mxu0 0
        %2561 = vmatprep.subr.bf16.mxu0 0
        %2562 = vmatpush1.bf16.msra.mxu0 0
        %2563 = vmatprep.subr.bf16.mxu0 0
        %2564 = vmatpush1.bf16.msra.mxu0 0
        %2565 = vmatprep.subr.bf16.mxu0 0
        %2566 = vmatpush1.bf16.msra.mxu0 0
        %2567 = vmatprep.subr.bf16.mxu0 0
        %2568 = vmatpush1.bf16.msra.mxu0 0
        %2569 = vmatprep.subr.bf16.mxu0 0
        %2570 = vmatpush1.bf16.msra.mxu0 0
        %2571 = vmatprep.subr.bf16.mxu0 0
        %2572 = vmatpush1.bf16.msra.mxu0 0
        %2573 = vmatprep.subr.bf16.mxu0 0
        %2574 = vmatpush1.bf16.msra.mxu0 0
        %2575 = vmatprep.mubr.bf16.mxu0 0
        %2576 = vmatmul.mubr.bf16.gmra.mrb[0].mxu0 %v2463
        %v2577 = vpop.f32.mrb[0].mxu0
        %v2578 = vadd.f32 0.0, %v2577
        %v2579 = vpop.f32.mrb[0].mxu0
        %v2580 = vpop.f32.mrb[0].mxu0
        %v2581 = vadd.f32 0.0, %v2580
        %v2582 = vpop.f32.mrb[0].mxu0
        %2583 = vmatprep.mubr.bf16.mxu0 0
        %2584 = vmatmul.mubr.bf16.gmra.mrb[0].mxu0 %v2464
        %v2585 = vpop.f32.mrb[0].mxu0
        %v2586 = vadd.f32 0.0, %v2585
        %v2587 = vpop.f32.mrb[0].mxu0
        %v2588 = vpop.f32.mrb[0].mxu0
        %v2589 = vadd.f32 0.0, %v2588
        %v2590 = vpop.f32.mrb[0].mxu0
        %2591 = vmatprep.mubr.bf16.mxu0 0
        %2592 = vmatmul.mubr.bf16.gmra.mrb[0].mxu0 %v2465
        %v2593 = vpop.f32.mrb[0].mxu0
        %v2594 = vadd.f32 0.0, %v2593
        %v2595 = vpop.f32.mrb[0].mxu0
        %v2596 = vpop.f32.mrb[0].mxu0
        %v2597 = vadd.f32 0.0, %v2596
        %v2598 = vpop.f32.mrb[0].mxu0
        %2599 = vmatprep.mubr.bf16.mxu0 0
        %2600 = vmatmul.mubr.bf16.gmra.mrb[0].mxu0 %v2466
        %v2601 = vpop.f32.mrb[0].mxu0
        %v2602 = vadd.f32 0.0, %v2601
        %v2603 = vpop.f32.mrb[0].mxu0
        %v2604 = vpop.f32.mrb[0].mxu0
        %v2605 = vadd.f32 0.0, %v2604
        %v2606 = vpop.f32.mrb[0].mxu0
        %2607 = vmatprep.mubr.bf16.mxu0 0
        %2608 = vmatmul.mubr.bf16.gmra.mrb[0].mxu0 %v2467
        %v2609 = vpop.f32.mrb[0].mxu0
        %v2610 = vadd.f32 0.0, %v2609
        %v2611 = vpop.f32.mrb[0].mxu0
        %v2612 = vpop.f32.mrb[0].mxu0
        %v2613 = vadd.f32 0.0, %v2612
        %v2614 = vpop.f32.mrb[0].mxu0
        %2615 = vmatprep.mubr.bf16.mxu0 0
        %2616 = vmatmul.mubr.bf16.gmra.mrb[0].mxu0 %v2468
        %v2617 = vpop.f32.mrb[0].mxu0
        %v2618 = vadd.f32 0.0, %v2617
        %v2619 = vpop.f32.mrb[0].mxu0
        %v2620 = vpop.f32.mrb[0].mxu0
        %v2621 = vadd.f32 0.0, %v2620
        %v2622 = vpop.f32.mrb[0].mxu0
        %2623 = vmatprep.mubr.bf16.mxu0 0
        %2624 = vmatmul.mubr.bf16.gmra.mrb[0].mxu0 %v2469
        %v2625 = vpop.f32.mrb[0].mxu0
        %v2626 = vadd.f32 0.0, %v2625
        %v2627 = vpop.f32.mrb[0].mxu0
        %v2628 = vpop.f32.mrb[0].mxu0
        %v2629 = vadd.f32 0.0, %v2628
        %v2630 = vpop.f32.mrb[0].mxu0
        %2631 = vmatprep.mubr.bf16.mxu0 0
        %2632 = vmatmul.mubr.bf16.gmra.mrb[0].mxu0 %v2470
        %v2633 = vpop.f32.mrb[0].mxu0
        %v2634 = vadd.f32 0.0, %v2633
        %v2635 = vpop.f32.mrb[0].mxu0
        %v2636 = vpop.f32.mrb[0].mxu0
        %v2637 = vadd.f32 0.0, %v2636
        %v2638 = vpop.f32.mrb[0].mxu0
        %2639 = vmatprep.mubr.bf16.mxu0 0
        %2640 = vmatmul.mubr.bf16.gmra.mrb[0].mxu0 %v2471
        %v2641 = vpop.f32.mrb[0].mxu0
        %v2642 = vadd.f32 0.0, %v2641
        %v2643 = vpop.f32.mrb[0].mxu0
        %v2644 = vpop.f32.mrb[0].mxu0
        %v2645 = vadd.f32 0.0, %v2644
        %v2646 = vpop.f32.mrb[0].mxu0
        %2647 = vmatprep.mubr.bf16.mxu0 0
        %2648 = vmatmul.mubr.bf16.gmra.mrb[0].mxu0 %v2472
        %v2649 = vpop.f32.mrb[0].mxu0
        %v2650 = vadd.f32 0.0, %v2649
        %v2651 = vpop.f32.mrb[0].mxu0
        %v2652 = vpop.f32.mrb[0].mxu0
        %v2653 = vadd.f32 0.0, %v2652
        %v2654 = vpop.f32.mrb[0].mxu0
        %2655 = vmatprep.mubr.bf16.mxu0 0
        %2656 = vmatmul.mubr.bf16.gmra.mrb[0].mxu0 %v2473
        %v2657 = vpop.f32.mrb[0].mxu0
        %v2658 = vadd.f32 0.0, %v2657
        %v2659 = vpop.f32.mrb[0].mxu0
        %v2660 = vpop.f32.mrb[0].mxu0
        %v2661 = vadd.f32 0.0, %v2660
        %v2662 = vpop.f32.mrb[0].mxu0
        %2663 = vmatprep.mubr.bf16.mxu0 0
        %2664 = vmatmul.mubr.bf16.gmra.mrb[0].mxu0 %v2474
        %v2665 = vpop.f32.mrb[0].mxu0
        %v2666 = vadd.f32 0.0, %v2665
        %v2667 = vpop.f32.mrb[0].mxu0
        %v2668 = vpop.f32.mrb[0].mxu0
        %v2669 = vadd.f32 0.0, %v2668
        %v2670 = vpop.f32.mrb[0].mxu0
        %2671 = vmatprep.mubr.bf16.mxu0 0
        %2672 = vmatmul.mubr.bf16.gmra.mrb[0].mxu0 %v2475
        %v2673 = vpop.f32.mrb[0].mxu0
        %v2674 = vadd.f32 0.0, %v2673
        %v2675 = vpop.f32.mrb[0].mxu0
        %v2676 = vpop.f32.mrb[0].mxu0
        %v2677 = vadd.f32 0.0, %v2676
        %v2678 = vpop.f32.mrb[0].mxu0
        %2679 = vmatprep.mubr.bf16.mxu0 0
        %2680 = vmatmul.mubr.bf16.gmra.mrb[0].mxu0 %v2476
        %v2681 = vpop.f32.mrb[0].mxu0
        %v2682 = vadd.f32 0.0, %v2681
        %v2683 = vpop.f32.mrb[0].mxu0
        %v2684 = vpop.f32.mrb[0].mxu0
        %v2685 = vadd.f32 0.0, %v2684
        %v2686 = vpop.f32.mrb[0].mxu0
        %2687 = vmatprep.mubr.bf16.mxu0 0
        %2688 = vmatmul.mubr.bf16.gmra.mrb[0].mxu0 %v2477
        %v2689 = vpop.f32.mrb[0].mxu0
        %v2690 = vadd.f32 0.0, %v2689
        %v2691 = vpop.f32.mrb[0].mxu0
        %v2692 = vpop.f32.mrb[0].mxu0
        %v2693 = vadd.f32 0.0, %v2692
        %v2694 = vpop.f32.mrb[0].mxu0
        %2695 = vmatprep.mubr.bf16.mxu0 0
        %2696 = vmatmul.mubr.bf16.gmra.mrb[0].mxu0 %v2478
        %v2697 = vpop.f32.mrb[0].mxu0
        %v2698 = vadd.f32 0.0, %v2697
        %v2699 = vpop.f32.mrb[0].mxu0
        %v2700 = vpop.f32.mrb[0].mxu0
        %v2701 = vadd.f32 0.0, %v2700
        %v2702 = vpop.f32.mrb[0].mxu0
        %2703 = vdwg.mxu0
        %v2704 = vadd.f32 %v2315, %v2578
        %v2705 = vadd.f32 %v2316, %v2581
        %v2706 = vadd.f32 %v2317, %v2586
        %v2707 = vadd.f32 %v2318, %v2589
        %v2708 = vadd.f32 %v2319, %v2594
        %v2709 = vadd.f32 %v2320, %v2597
        %v2710 = vadd.f32 %v2321, %v2602
        %v2711 = vadd.f32 %v2322, %v2605
        %v2712 = vadd.f32 %v2323, %v2610
        %v2713 = vadd.f32 %v2324, %v2613
        %v2714 = vadd.f32 %v2325, %v2618
        %v2715 = vadd.f32 %v2326, %v2621
        %v2716 = vadd.f32 %v2327, %v2626
        %v2717 = vadd.f32 %v2328, %v2629
        %v2718 = vadd.f32 %v2329, %v2634
        %v2719 = vadd.f32 %v2330, %v2637
        %v2720 = vadd.f32 %v2331, %v2642
        %v2721 = vadd.f32 %v2332, %v2645
        %v2722 = vadd.f32 %v2333, %v2650
        %v2723 = vadd.f32 %v2334, %v2653
        %v2724 = vadd.f32 %v2335, %v2658
        %v2725 = vadd.f32 %v2336, %v2661
        %v2726 = vadd.f32 %v2337, %v2666
        %v2727 = vadd.f32 %v2338, %v2669
        %v2728 = vadd.f32 %v2339, %v2674
        %v2729 = vadd.f32 %v2340, %v2677
        %v2730 = vadd.f32 %v2341, %v2682
        %v2731 = vadd.f32 %v2342, %v2685
        %v2732 = vadd.f32 %v2343, %v2690
        %v2733 = vadd.f32 %v2344, %v2693
        %v2734 = vadd.f32 %v2345, %v2698
        %v2735 = vadd.f32 %v2346, %v2701
        %v2736 = vld [vmem:[%s965] sm:$0xe]
        %v2737 = vld [vmem:[%s965 + $0x4] sm:$0xf]
        %v2738 = vld [vmem:[%s965 + $0x8] sm:$0x1]
        %v2739 = vld [vmem:[%s965 + $0xc] sm:$0xe]
        %v2740 = vld [vmem:[%s965 + $0x10] sm:$0xf]
        %v2741 = vld [vmem:[%s965 + $0x14] sm:$0x1]
        %v2742 = vld [vmem:[%s965 + $0x18] sm:$0xe]
        %v2743 = vld [vmem:[%s965 + $0x1c] sm:$0xf]
        %v2744 = vld [vmem:[%s965 + $0x20] sm:$0x1]
        %v2745 = vld [vmem:[%s965 + $0x24] sm:$0xe]
        %v2746 = vld [vmem:[%s965 + $0x28] sm:$0xf]
        %v2747 = vld [vmem:[%s965 + $0x2c] sm:$0x1]
        %v2748 = vld [vmem:[%s965 + $0x30] sm:$0xe]
        %v2749 = vld [vmem:[%s965 + $0x34] sm:$0xf]
        %v2750 = vld [vmem:[%s965 + $0x38] sm:$0x1]
        %v2751 = vld [vmem:[%s965 + $0x3c] sm:$0xe]
        %v2752 = vld [vmem:[%s965 + $0x40] sm:$0xf]
        %v2753 = vld [vmem:[%s965 + $0x44] sm:$0x1]
        %v2754 = vld [vmem:[%s965 + $0x48] sm:$0xe]
        %v2755 = vld [vmem:[%s965 + $0x4c] sm:$0xf]
        %v2756 = vld [vmem:[%s965 + $0x50] sm:$0x1]
        %v2757 = vld [vmem:[%s965 + $0x54] sm:$0xe]
        %v2758 = vld [vmem:[%s965 + $0x58] sm:$0xf]
        %v2759 = vld [vmem:[%s965 + $0x5c] sm:$0x1]
        %v2760 = vld [vmem:[%s965 + $0x60] sm:$0xe]
        %v2761 = vld [vmem:[%s965 + $0x64] sm:$0xf]
        %v2762 = vld [vmem:[%s965 + $0x68] sm:$0x1]
        %v2763 = vld [vmem:[%s965 + $0x6c] sm:$0xe]
        %v2764 = vld [vmem:[%s965 + $0x70] sm:$0xf]
        %v2765 = vld [vmem:[%s965 + $0x74] sm:$0x1]
        %v2766 = vld [vmem:[%s965 + $0x78] sm:$0xe]
        %v2767 = vld [vmem:[%s965 + $0x7c] sm:$0xf]
        %v2768 = vld [vmem:[%s965 + $0x80] sm:$0x1]
        %v2769 = vld [vmem:[%s965 + $0x84] sm:$0xe]
        %v2770 = vld [vmem:[%s965 + $0x88] sm:$0xf]
        %v2771 = vld [vmem:[%s965 + $0x8c] sm:$0x1]
        %v2772 = vld [vmem:[%s965 + $0x90] sm:$0xe]
        %v2773 = vld [vmem:[%s965 + $0x94] sm:$0xf]
        %v2774 = vld [vmem:[%s965 + $0x98] sm:$0x1]
        %v2775 = vld [vmem:[%s965 + $0x9c] sm:$0xe]
        %v2776 = vld [vmem:[%s965 + $0xa0] sm:$0xf]
        %v2777 = vld [vmem:[%s965 + $0xa4] sm:$0x1]
        %v2778 = vld [vmem:[%s965 + $0xa8] sm:$0xe]
        %v2779 = vld [vmem:[%s965 + $0xac] sm:$0xf]
        %v2780 = vld [vmem:[%s965 + $0xb0] sm:$0x1]
        %v2781 = vld [vmem:[%s965 + $0xb4] sm:$0xe]
        %v2782 = vld [vmem:[%s965 + $0xb8] sm:$0xf]
        %v2783 = vld [vmem:[%s965 + $0xbc] sm:$0x1]
        %v2832 = vrot.slane %v2736, 5
        %v2833 = vrot.slane %v2832, 4
        %v2834 = vrot.slane %v2737, 5
        %v2835 = vsel %vm1148, %v2833, %v2834
        %v2836 = vrot.slane %v2834, 4
        %v2837 = vrot.slane %v2738, 5
        %v2838 = vsel %vm1148, %v2836, %v2837
        %v2839 = vrot.slane %v2739, 5
        %v2840 = vrot.slane %v2839, 4
        %v2841 = vrot.slane %v2740, 5
        %v2842 = vsel %vm1148, %v2840, %v2841
        %v2843 = vrot.slane %v2841, 4
        %v2844 = vrot.slane %v2741, 5
        %v2845 = vsel %vm1148, %v2843, %v2844
        %v2846 = vrot.slane %v2742, 5
        %v2847 = vrot.slane %v2846, 4
        %v2848 = vrot.slane %v2743, 5
        %v2849 = vsel %vm1148, %v2847, %v2848
        %v2850 = vrot.slane %v2848, 4
        %v2851 = vrot.slane %v2744, 5
        %v2852 = vsel %vm1148, %v2850, %v2851
        %v2853 = vrot.slane %v2745, 5
        %v2854 = vrot.slane %v2853, 4
        %v2855 = vrot.slane %v2746, 5
        %v2856 = vsel %vm1148, %v2854, %v2855
        %v2857 = vrot.slane %v2855, 4
        %v2858 = vrot.slane %v2747, 5
        %v2859 = vsel %vm1148, %v2857, %v2858
        %v2860 = vrot.slane %v2748, 5
        %v2861 = vrot.slane %v2860, 4
        %v2862 = vrot.slane %v2749, 5
        %v2863 = vsel %vm1148, %v2861, %v2862
        %v2864 = vrot.slane %v2862, 4
        %v2865 = vrot.slane %v2750, 5
        %v2866 = vsel %vm1148, %v2864, %v2865
        %v2867 = vrot.slane %v2751, 5
        %v2868 = vrot.slane %v2867, 4
        %v2869 = vrot.slane %v2752, 5
        %v2870 = vsel %vm1148, %v2868, %v2869
        %v2871 = vrot.slane %v2869, 4
        %v2872 = vrot.slane %v2753, 5
        %v2873 = vsel %vm1148, %v2871, %v2872
        %v2874 = vrot.slane %v2754, 5
        %v2875 = vrot.slane %v2874, 4
        %v2876 = vrot.slane %v2755, 5
        %v2877 = vsel %vm1148, %v2875, %v2876
        %v2878 = vrot.slane %v2876, 4
        %v2879 = vrot.slane %v2756, 5
        %v2880 = vsel %vm1148, %v2878, %v2879
        %v2881 = vrot.slane %v2757, 5
        %v2882 = vrot.slane %v2881, 4
        %v2883 = vrot.slane %v2758, 5
        %v2884 = vsel %vm1148, %v2882, %v2883
        %v2885 = vrot.slane %v2883, 4
        %v2886 = vrot.slane %v2759, 5
        %v2887 = vsel %vm1148, %v2885, %v2886
        %v2888 = vrot.slane %v2760, 5
        %v2889 = vrot.slane %v2888, 4
        %v2890 = vrot.slane %v2761, 5
        %v2891 = vsel %vm1148, %v2889, %v2890
        %v2892 = vrot.slane %v2890, 4
        %v2893 = vrot.slane %v2762, 5
        %v2894 = vsel %vm1148, %v2892, %v2893
        %v2895 = vrot.slane %v2763, 5
        %v2896 = vrot.slane %v2895, 4
        %v2897 = vrot.slane %v2764, 5
        %v2898 = vsel %vm1148, %v2896, %v2897
        %v2899 = vrot.slane %v2897, 4
        %v2900 = vrot.slane %v2765, 5
        %v2901 = vsel %vm1148, %v2899, %v2900
        %v2902 = vrot.slane %v2766, 5
        %v2903 = vrot.slane %v2902, 4
        %v2904 = vrot.slane %v2767, 5
        %v2905 = vsel %vm1148, %v2903, %v2904
        %v2906 = vrot.slane %v2904, 4
        %v2907 = vrot.slane %v2768, 5
        %v2908 = vsel %vm1148, %v2906, %v2907
        %v2909 = vrot.slane %v2769, 5
        %v2910 = vrot.slane %v2909, 4
        %v2911 = vrot.slane %v2770, 5
        %v2912 = vsel %vm1148, %v2910, %v2911
        %v2913 = vrot.slane %v2911, 4
        %v2914 = vrot.slane %v2771, 5
        %v2915 = vsel %vm1148, %v2913, %v2914
        %v2916 = vrot.slane %v2772, 5
        %v2917 = vrot.slane %v2916, 4
        %v2918 = vrot.slane %v2773, 5
        %v2919 = vsel %vm1148, %v2917, %v2918
        %v2920 = vrot.slane %v2918, 4
        %v2921 = vrot.slane %v2774, 5
        %v2922 = vsel %vm1148, %v2920, %v2921
        %v2923 = vrot.slane %v2775, 5
        %v2924 = vrot.slane %v2923, 4
        %v2925 = vrot.slane %v2776, 5
        %v2926 = vsel %vm1148, %v2924, %v2925
        %v2927 = vrot.slane %v2925, 4
        %v2928 = vrot.slane %v2777, 5
        %v2929 = vsel %vm1148, %v2927, %v2928
        %v2930 = vrot.slane %v2778, 5
        %v2931 = vrot.slane %v2930, 4
        %v2932 = vrot.slane %v2779, 5
        %v2933 = vsel %vm1148, %v2931, %v2932
        %v2934 = vrot.slane %v2932, 4
        %v2935 = vrot.slane %v2780, 5
        %v2936 = vsel %vm1148, %v2934, %v2935
        %v2937 = vrot.slane %v2781, 5
        %v2938 = vrot.slane %v2937, 4
        %v2939 = vrot.slane %v2782, 5
        %v2940 = vsel %vm1148, %v2938, %v2939
        %v2941 = vrot.slane %v2939, 4
        %v2942 = vrot.slane %v2783, 5
        %v2943 = vsel %vm1148, %v2941, %v2942
        %s2944 = sadd.s32 %s1046, 4
        %s2945 = smul.u32 %s2944, 16
        %s2946 = smul.addr %s2945, 4
        %s2947 = scalar_lea.vmem [#allocation9], %s2946
        %v2948 = vld [vmem:[%s2947] sm:$0xf]
        %v2949 = vld [vmem:[%s2947 + $0x4] sm:$0xf]
        %v2950 = vld [vmem:[%s2947 + $0x8] sm:$0xf]
        %v2951 = vld [vmem:[%s2947 + $0xc] sm:$0xf]
        %v2952 = vld [vmem:[%s2947 + $0x10] sm:$0xf]
        %v2953 = vld [vmem:[%s2947 + $0x14] sm:$0xf]
        %v2954 = vld [vmem:[%s2947 + $0x18] sm:$0xf]
        %v2955 = vld [vmem:[%s2947 + $0x1c] sm:$0xf]
        %v2956 = vld [vmem:[%s2947 + $0x20] sm:$0xf]
        %v2957 = vld [vmem:[%s2947 + $0x24] sm:$0xf]
        %v2958 = vld [vmem:[%s2947 + $0x28] sm:$0xf]
        %v2959 = vld [vmem:[%s2947 + $0x2c] sm:$0xf]
        %v2960 = vld [vmem:[%s2947 + $0x30] sm:$0xf]
        %v2961 = vld [vmem:[%s2947 + $0x34] sm:$0xf]
        %v2962 = vld [vmem:[%s2947 + $0x38] sm:$0xf]
        %v2963 = vld [vmem:[%s2947 + $0x3c] sm:$0xf]
        %v2964 = vunpack.c.l.b16 %v2835
        %v2965 = vunpack.c.l.b16 %v2838
        %v2966 = vunpack.c.l.b16 %v2842
        %v2967 = vunpack.c.l.b16 %v2845
        %v2968 = vunpack.c.l.b16 %v2849
        %v2969 = vunpack.c.l.b16 %v2852
        %v2970 = vunpack.c.l.b16 %v2856
        %v2971 = vunpack.c.l.b16 %v2859
        %v2972 = vunpack.c.l.b16 %v2863
        %v2973 = vunpack.c.l.b16 %v2866
        %v2974 = vunpack.c.l.b16 %v2870
        %v2975 = vunpack.c.l.b16 %v2873
        %v2976 = vunpack.c.l.b16 %v2877
        %v2977 = vunpack.c.l.b16 %v2880
        %v2978 = vunpack.c.l.b16 %v2884
        %v2979 = vunpack.c.l.b16 %v2887
        %v2980 = vunpack.c.l.b16 %v2891
        %v2981 = vunpack.c.l.b16 %v2894
        %v2982 = vunpack.c.l.b16 %v2898
        %v2983 = vunpack.c.l.b16 %v2901
        %v2984 = vunpack.c.l.b16 %v2905
        %v2985 = vunpack.c.l.b16 %v2908
        %v2986 = vunpack.c.l.b16 %v2912
        %v2987 = vunpack.c.l.b16 %v2915
        %v2988 = vunpack.c.l.b16 %v2919
        %v2989 = vunpack.c.l.b16 %v2922
        %v2990 = vunpack.c.l.b16 %v2926
        %v2991 = vunpack.c.l.b16 %v2929
        %v2992 = vunpack.c.l.b16 %v2933
        %v2993 = vunpack.c.l.b16 %v2936
        %v2994 = vunpack.c.l.b16 %v2940
        %v2995 = vunpack.c.l.b16 %v2943
        %v2996 = vpack.c.b16 %v2965, %v2964
        %v2997 = vpack.c.b16 %v2967, %v2966
        %v2998 = vpack.c.b16 %v2969, %v2968
        %v2999 = vpack.c.b16 %v2971, %v2970
        %v3000 = vpack.c.b16 %v2973, %v2972
        %v3001 = vpack.c.b16 %v2975, %v2974
        %v3002 = vpack.c.b16 %v2977, %v2976
        %v3003 = vpack.c.b16 %v2979, %v2978
        %v3004 = vpack.c.b16 %v2981, %v2980
        %v3005 = vpack.c.b16 %v2983, %v2982
        %v3006 = vpack.c.b16 %v2985, %v2984
        %v3007 = vpack.c.b16 %v2987, %v2986
        %v3008 = vpack.c.b16 %v2989, %v2988
        %v3009 = vpack.c.b16 %v2991, %v2990
        %v3010 = vpack.c.b16 %v2993, %v2992
        %v3011 = vpack.c.b16 %v2995, %v2994
        %v3044 = vunpack.c.l.b16 %v2948
        %v3045 = vunpack.c.l.b16 %v2949
        %v3046 = vunpack.c.l.b16 %v2950
        %v3047 = vunpack.c.l.b16 %v2951
        %v3048 = vunpack.c.l.b16 %v2952
        %v3049 = vunpack.c.l.b16 %v2953
        %v3050 = vunpack.c.l.b16 %v2954
        %v3051 = vunpack.c.l.b16 %v2955
        %v3052 = vunpack.c.l.b16 %v2956
        %v3053 = vunpack.c.l.b16 %v2957
        %v3054 = vunpack.c.l.b16 %v2958
        %v3055 = vunpack.c.l.b16 %v2959
        %v3056 = vunpack.c.l.b16 %v2960
        %v3057 = vunpack.c.l.b16 %v2961
        %v3058 = vunpack.c.l.b16 %v2962
        %v3059 = vunpack.c.l.b16 %v2963
        %v3060 = vpack.c.b16 %v3045, %v3044
        %v3061 = vpack.c.b16 %v3047, %v3046
        %v3062 = vpack.c.b16 %v3049, %v3048
        %v3063 = vpack.c.b16 %v3051, %v3050
        %v3064 = vpack.c.b16 %v3053, %v3052
        %v3065 = vpack.c.b16 %v3055, %v3054
        %v3066 = vpack.c.b16 %v3057, %v3056
        %v3067 = vpack.c.b16 %v3059, %v3058
        %3076 = vmatprep.subr.bf16.mxu0 0
        %3077 = vmatpush1.bf16.msra.mxu0 %v3060
        %3078 = vmatprep.subr.bf16.mxu0 0
        %3079 = vmatpush1.bf16.msra.mxu0 %v3061
        %3080 = vmatprep.subr.bf16.mxu0 0
        %3081 = vmatpush1.bf16.msra.mxu0 %v3062
        %3082 = vmatprep.subr.bf16.mxu0 0
        %3083 = vmatpush1.bf16.msra.mxu0 %v3063
        %3084 = vmatprep.subr.bf16.mxu0 0
        %3085 = vmatpush1.bf16.msra.mxu0 %v3064
        %3086 = vmatprep.subr.bf16.mxu0 0
        %3087 = vmatpush1.bf16.msra.mxu0 %v3065
        %3088 = vmatprep.subr.bf16.mxu0 0
        %3089 = vmatpush1.bf16.msra.mxu0 %v3066
        %3090 = vmatprep.subr.bf16.mxu0 0
        %3091 = vmatpush1.bf16.msra.mxu0 %v3067
        %3092 = vmatprep.subr.bf16.mxu0 0
        %3093 = vmatpush1.bf16.msra.mxu0 0
        %3094 = vmatprep.subr.bf16.mxu0 0
        %3095 = vmatpush1.bf16.msra.mxu0 0
        %3096 = vmatprep.subr.bf16.mxu0 0
        %3097 = vmatpush1.bf16.msra.mxu0 0
        %3098 = vmatprep.subr.bf16.mxu0 0
        %3099 = vmatpush1.bf16.msra.mxu0 0
        %3100 = vmatprep.subr.bf16.mxu0 0
        %3101 = vmatpush1.bf16.msra.mxu0 0
        %3102 = vmatprep.subr.bf16.mxu0 0
        %3103 = vmatpush1.bf16.msra.mxu0 0
        %3104 = vmatprep.subr.bf16.mxu0 0
        %3105 = vmatpush1.bf16.msra.mxu0 0
        %3106 = vmatprep.subr.bf16.mxu0 0
        %3107 = vmatpush1.bf16.msra.mxu0 0
        %3108 = vmatprep.mubr.bf16.mxu0 0
        %3109 = vmatmul.mubr.bf16.gmra.mrb[0].mxu0 %v2996
        %v3110 = vpop.f32.mrb[0].mxu0
        %v3111 = vadd.f32 0.0, %v3110
        %v3112 = vpop.f32.mrb[0].mxu0
        %v3113 = vpop.f32.mrb[0].mxu0
        %v3114 = vadd.f32 0.0, %v3113
        %v3115 = vpop.f32.mrb[0].mxu0
        %3116 = vmatprep.mubr.bf16.mxu0 0
        %3117 = vmatmul.mubr.bf16.gmra.mrb[0].mxu0 %v2997
        %v3118 = vpop.f32.mrb[0].mxu0
        %v3119 = vadd.f32 0.0, %v3118
        %v3120 = vpop.f32.mrb[0].mxu0
        %v3121 = vpop.f32.mrb[0].mxu0
        %v3122 = vadd.f32 0.0, %v3121
        %v3123 = vpop.f32.mrb[0].mxu0
        %3124 = vmatprep.mubr.bf16.mxu0 0
        %3125 = vmatmul.mubr.bf16.gmra.mrb[0].mxu0 %v2998
        %v3126 = vpop.f32.mrb[0].mxu0
        %v3127 = vadd.f32 0.0, %v3126
        %v3128 = vpop.f32.mrb[0].mxu0
        %v3129 = vpop.f32.mrb[0].mxu0
        %v3130 = vadd.f32 0.0, %v3129
        %v3131 = vpop.f32.mrb[0].mxu0
        %3132 = vmatprep.mubr.bf16.mxu0 0
        %3133 = vmatmul.mubr.bf16.gmra.mrb[0].mxu0 %v2999
        %v3134 = vpop.f32.mrb[0].mxu0
        %v3135 = vadd.f32 0.0, %v3134
        %v3136 = vpop.f32.mrb[0].mxu0
        %v3137 = vpop.f32.mrb[0].mxu0
        %v3138 = vadd.f32 0.0, %v3137
        %v3139 = vpop.f32.mrb[0].mxu0
        %3140 = vmatprep.mubr.bf16.mxu0 0
        %3141 = vmatmul.mubr.bf16.gmra.mrb[0].mxu0 %v3000
        %v3142 = vpop.f32.mrb[0].mxu0
        %v3143 = vadd.f32 0.0, %v3142
        %v3144 = vpop.f32.mrb[0].mxu0
        %v3145 = vpop.f32.mrb[0].mxu0
        %v3146 = vadd.f32 0.0, %v3145
        %v3147 = vpop.f32.mrb[0].mxu0
        %3148 = vmatprep.mubr.bf16.mxu0 0
        %3149 = vmatmul.mubr.bf16.gmra.mrb[0].mxu0 %v3001
        %v3150 = vpop.f32.mrb[0].mxu0
        %v3151 = vadd.f32 0.0, %v3150
        %v3152 = vpop.f32.mrb[0].mxu0
        %v3153 = vpop.f32.mrb[0].mxu0
        %v3154 = vadd.f32 0.0, %v3153
        %v3155 = vpop.f32.mrb[0].mxu0
        %3156 = vmatprep.mubr.bf16.mxu0 0
        %3157 = vmatmul.mubr.bf16.gmra.mrb[0].mxu0 %v3002
        %v3158 = vpop.f32.mrb[0].mxu0
        %v3159 = vadd.f32 0.0, %v3158
        %v3160 = vpop.f32.mrb[0].mxu0
        %v3161 = vpop.f32.mrb[0].mxu0
        %v3162 = vadd.f32 0.0, %v3161
        %v3163 = vpop.f32.mrb[0].mxu0
        %3164 = vmatprep.mubr.bf16.mxu0 0
        %3165 = vmatmul.mubr.bf16.gmra.mrb[0].mxu0 %v3003
        %v3166 = vpop.f32.mrb[0].mxu0
        %v3167 = vadd.f32 0.0, %v3166
        %v3168 = vpop.f32.mrb[0].mxu0
        %v3169 = vpop.f32.mrb[0].mxu0
        %v3170 = vadd.f32 0.0, %v3169
        %v3171 = vpop.f32.mrb[0].mxu0
        %3172 = vmatprep.mubr.bf16.mxu0 0
        %3173 = vmatmul.mubr.bf16.gmra.mrb[0].mxu0 %v3004
        %v3174 = vpop.f32.mrb[0].mxu0
        %v3175 = vadd.f32 0.0, %v3174
        %v3176 = vpop.f32.mrb[0].mxu0
        %v3177 = vpop.f32.mrb[0].mxu0
        %v3178 = vadd.f32 0.0, %v3177
        %v3179 = vpop.f32.mrb[0].mxu0
        %3180 = vmatprep.mubr.bf16.mxu0 0
        %3181 = vmatmul.mubr.bf16.gmra.mrb[0].mxu0 %v3005
        %v3182 = vpop.f32.mrb[0].mxu0
        %v3183 = vadd.f32 0.0, %v3182
        %v3184 = vpop.f32.mrb[0].mxu0
        %v3185 = vpop.f32.mrb[0].mxu0
        %v3186 = vadd.f32 0.0, %v3185
        %v3187 = vpop.f32.mrb[0].mxu0
        %3188 = vmatprep.mubr.bf16.mxu0 0
        %3189 = vmatmul.mubr.bf16.gmra.mrb[0].mxu0 %v3006
        %v3190 = vpop.f32.mrb[0].mxu0
        %v3191 = vadd.f32 0.0, %v3190
        %v3192 = vpop.f32.mrb[0].mxu0
        %v3193 = vpop.f32.mrb[0].mxu0
        %v3194 = vadd.f32 0.0, %v3193
        %v3195 = vpop.f32.mrb[0].mxu0
        %3196 = vmatprep.mubr.bf16.mxu0 0
        %3197 = vmatmul.mubr.bf16.gmra.mrb[0].mxu0 %v3007
        %v3198 = vpop.f32.mrb[0].mxu0
        %v3199 = vadd.f32 0.0, %v3198
        %v3200 = vpop.f32.mrb[0].mxu0
        %v3201 = vpop.f32.mrb[0].mxu0
        %v3202 = vadd.f32 0.0, %v3201
        %v3203 = vpop.f32.mrb[0].mxu0
        %3204 = vmatprep.mubr.bf16.mxu0 0
        %3205 = vmatmul.mubr.bf16.gmra.mrb[0].mxu0 %v3008
        %v3206 = vpop.f32.mrb[0].mxu0
        %v3207 = vadd.f32 0.0, %v3206
        %v3208 = vpop.f32.mrb[0].mxu0
        %v3209 = vpop.f32.mrb[0].mxu0
        %v3210 = vadd.f32 0.0, %v3209
        %v3211 = vpop.f32.mrb[0].mxu0
        %3212 = vmatprep.mubr.bf16.mxu0 0
        %3213 = vmatmul.mubr.bf16.gmra.mrb[0].mxu0 %v3009
        %v3214 = vpop.f32.mrb[0].mxu0
        %v3215 = vadd.f32 0.0, %v3214
        %v3216 = vpop.f32.mrb[0].mxu0
        %v3217 = vpop.f32.mrb[0].mxu0
        %v3218 = vadd.f32 0.0, %v3217
        %v3219 = vpop.f32.mrb[0].mxu0
        %3220 = vmatprep.mubr.bf16.mxu0 0
        %3221 = vmatmul.mubr.bf16.gmra.mrb[0].mxu0 %v3010
        %v3222 = vpop.f32.mrb[0].mxu0
        %v3223 = vadd.f32 0.0, %v3222
        %v3224 = vpop.f32.mrb[0].mxu0
        %v3225 = vpop.f32.mrb[0].mxu0
        %v3226 = vadd.f32 0.0, %v3225
        %v3227 = vpop.f32.mrb[0].mxu0
        %3228 = vmatprep.mubr.bf16.mxu0 0
        %3229 = vmatmul.mubr.bf16.gmra.mrb[0].mxu0 %v3011
        %v3230 = vpop.f32.mrb[0].mxu0
        %v3231 = vadd.f32 0.0, %v3230
        %v3232 = vpop.f32.mrb[0].mxu0
        %v3233 = vpop.f32.mrb[0].mxu0
        %v3234 = vadd.f32 0.0, %v3233
        %v3235 = vpop.f32.mrb[0].mxu0
        %3236 = vdwg.mxu0
        %v3237 = vadd.f32 %v2704, %v3111
        %v3238 = vadd.f32 %v2705, %v3114
        %v3239 = vadd.f32 %v2706, %v3119
        %v3240 = vadd.f32 %v2707, %v3122
        %v3241 = vadd.f32 %v2708, %v3127
        %v3242 = vadd.f32 %v2709, %v3130
        %v3243 = vadd.f32 %v2710, %v3135
        %v3244 = vadd.f32 %v2711, %v3138
        %v3245 = vadd.f32 %v2712, %v3143
        %v3246 = vadd.f32 %v2713, %v3146
        %v3247 = vadd.f32 %v2714, %v3151
        %v3248 = vadd.f32 %v2715, %v3154
        %v3249 = vadd.f32 %v2716, %v3159
        %v3250 = vadd.f32 %v2717, %v3162
        %v3251 = vadd.f32 %v2718, %v3167
        %v3252 = vadd.f32 %v2719, %v3170
        %v3253 = vadd.f32 %v2720, %v3175
        %v3254 = vadd.f32 %v2721, %v3178
        %v3255 = vadd.f32 %v2722, %v3183
        %v3256 = vadd.f32 %v2723, %v3186
        %v3257 = vadd.f32 %v2724, %v3191
        %v3258 = vadd.f32 %v2725, %v3194
        %v3259 = vadd.f32 %v2726, %v3199
        %v3260 = vadd.f32 %v2727, %v3202
        %v3261 = vadd.f32 %v2728, %v3207
        %v3262 = vadd.f32 %v2729, %v3210
        %v3263 = vadd.f32 %v2730, %v3215
        %v3264 = vadd.f32 %v2731, %v3218
        %v3265 = vadd.f32 %v2732, %v3223
        %v3266 = vadd.f32 %v2733, %v3226
        %v3267 = vadd.f32 %v2734, %v3231
        %v3268 = vadd.f32 %v2735, %v3234
        %v3269 = vld [vmem:[%s965] sm:$0xc]
        %v3270 = vld [vmem:[%s965 + $0x8] sm:$0x3]
        %v3271 = vld [vmem:[%s965 + $0xc] sm:$0xc]
        %v3272 = vld [vmem:[%s965 + $0x14] sm:$0x3]
        %v3273 = vld [vmem:[%s965 + $0x18] sm:$0xc]
        %v3274 = vld [vmem:[%s965 + $0x20] sm:$0x3]
        %v3275 = vld [vmem:[%s965 + $0x24] sm:$0xc]
        %v3276 = vld [vmem:[%s965 + $0x2c] sm:$0x3]
        %v3277 = vld [vmem:[%s965 + $0x30] sm:$0xc]
        %v3278 = vld [vmem:[%s965 + $0x38] sm:$0x3]
        %v3279 = vld [vmem:[%s965 + $0x3c] sm:$0xc]
        %v3280 = vld [vmem:[%s965 + $0x44] sm:$0x3]
        %v3281 = vld [vmem:[%s965 + $0x48] sm:$0xc]
        %v3282 = vld [vmem:[%s965 + $0x50] sm:$0x3]
        %v3283 = vld [vmem:[%s965 + $0x54] sm:$0xc]
        %v3284 = vld [vmem:[%s965 + $0x5c] sm:$0x3]
        %v3285 = vld [vmem:[%s965 + $0x60] sm:$0xc]
        %v3286 = vld [vmem:[%s965 + $0x68] sm:$0x3]
        %v3287 = vld [vmem:[%s965 + $0x6c] sm:$0xc]
        %v3288 = vld [vmem:[%s965 + $0x74] sm:$0x3]
        %v3289 = vld [vmem:[%s965 + $0x78] sm:$0xc]
        %v3290 = vld [vmem:[%s965 + $0x80] sm:$0x3]
        %v3291 = vld [vmem:[%s965 + $0x84] sm:$0xc]
        %v3292 = vld [vmem:[%s965 + $0x8c] sm:$0x3]
        %v3293 = vld [vmem:[%s965 + $0x90] sm:$0xc]
        %v3294 = vld [vmem:[%s965 + $0x98] sm:$0x3]
        %v3295 = vld [vmem:[%s965 + $0x9c] sm:$0xc]
        %v3296 = vld [vmem:[%s965 + $0xa4] sm:$0x3]
        %v3297 = vld [vmem:[%s965 + $0xa8] sm:$0xc]
        %v3298 = vld [vmem:[%s965 + $0xb0] sm:$0x3]
        %v3299 = vld [vmem:[%s965 + $0xb4] sm:$0xc]
        %v3300 = vld [vmem:[%s965 + $0xbc] sm:$0x3]
        %v3333 = vrot.slane %v3269, 6
        %v3334 = vrot.slane %v3333, 4
        %v3335 = vrot.slane %v2737, 6
        %v3336 = vsel %vm1909, %v3334, %v3335
        %v3337 = vrot.slane %v3335, 4
        %v3338 = vrot.slane %v3270, 6
        %v3339 = vsel %vm1909, %v3337, %v3338
        %v3340 = vrot.slane %v3271, 6
        %v3341 = vrot.slane %v3340, 4
        %v3342 = vrot.slane %v2740, 6
        %v3343 = vsel %vm1909, %v3341, %v3342
        %v3344 = vrot.slane %v3342, 4
        %v3345 = vrot.slane %v3272, 6
        %v3346 = vsel %vm1909, %v3344, %v3345
        %v3347 = vrot.slane %v3273, 6
        %v3348 = vrot.slane %v3347, 4
        %v3349 = vrot.slane %v2743, 6
        %v3350 = vsel %vm1909, %v3348, %v3349
        %v3351 = vrot.slane %v3349, 4
        %v3352 = vrot.slane %v3274, 6
        %v3353 = vsel %vm1909, %v3351, %v3352
        %v3354 = vrot.slane %v3275, 6
        %v3355 = vrot.slane %v3354, 4
        %v3356 = vrot.slane %v2746, 6
        %v3357 = vsel %vm1909, %v3355, %v3356
        %v3358 = vrot.slane %v3356, 4
        %v3359 = vrot.slane %v3276, 6
        %v3360 = vsel %vm1909, %v3358, %v3359
        %v3361 = vrot.slane %v3277, 6
        %v3362 = vrot.slane %v3361, 4
        %v3363 = vrot.slane %v2749, 6
        %v3364 = vsel %vm1909, %v3362, %v3363
        %v3365 = vrot.slane %v3363, 4
        %v3366 = vrot.slane %v3278, 6
        %v3367 = vsel %vm1909, %v3365, %v3366
        %v3368 = vrot.slane %v3279, 6
        %v3369 = vrot.slane %v3368, 4
        %v3370 = vrot.slane %v2752, 6
        %v3371 = vsel %vm1909, %v3369, %v3370
        %v3372 = vrot.slane %v3370, 4
        %v3373 = vrot.slane %v3280, 6
        %v3374 = vsel %vm1909, %v3372, %v3373
        %v3375 = vrot.slane %v3281, 6
        %v3376 = vrot.slane %v3375, 4
        %v3377 = vrot.slane %v2755, 6
        %v3378 = vsel %vm1909, %v3376, %v3377
        %v3379 = vrot.slane %v3377, 4
        %v3380 = vrot.slane %v3282, 6
        %v3381 = vsel %vm1909, %v3379, %v3380
        %v3382 = vrot.slane %v3283, 6
        %v3383 = vrot.slane %v3382, 4
        %v3384 = vrot.slane %v2758, 6
        %v3385 = vsel %vm1909, %v3383, %v3384
        %v3386 = vrot.slane %v3384, 4
        %v3387 = vrot.slane %v3284, 6
        %v3388 = vsel %vm1909, %v3386, %v3387
        %v3389 = vrot.slane %v3285, 6
        %v3390 = vrot.slane %v3389, 4
        %v3391 = vrot.slane %v2761, 6
        %v3392 = vsel %vm1909, %v3390, %v3391
        %v3393 = vrot.slane %v3391, 4
        %v3394 = vrot.slane %v3286, 6
        %v3395 = vsel %vm1909, %v3393, %v3394
        %v3396 = vrot.slane %v3287, 6
        %v3397 = vrot.slane %v3396, 4
        %v3398 = vrot.slane %v2764, 6
        %v3399 = vsel %vm1909, %v3397, %v3398
        %v3400 = vrot.slane %v3398, 4
        %v3401 = vrot.slane %v3288, 6
        %v3402 = vsel %vm1909, %v3400, %v3401
        %v3403 = vrot.slane %v3289, 6
        %v3404 = vrot.slane %v3403, 4
        %v3405 = vrot.slane %v2767, 6
        %v3406 = vsel %vm1909, %v3404, %v3405
        %v3407 = vrot.slane %v3405, 4
        %v3408 = vrot.slane %v3290, 6
        %v3409 = vsel %vm1909, %v3407, %v3408
        %v3410 = vrot.slane %v3291, 6
        %v3411 = vrot.slane %v3410, 4
        %v3412 = vrot.slane %v2770, 6
        %v3413 = vsel %vm1909, %v3411, %v3412
        %v3414 = vrot.slane %v3412, 4
        %v3415 = vrot.slane %v3292, 6
        %v3416 = vsel %vm1909, %v3414, %v3415
        %v3417 = vrot.slane %v3293, 6
        %v3418 = vrot.slane %v3417, 4
        %v3419 = vrot.slane %v2773, 6
        %v3420 = vsel %vm1909, %v3418, %v3419
        %v3421 = vrot.slane %v3419, 4
        %v3422 = vrot.slane %v3294, 6
        %v3423 = vsel %vm1909, %v3421, %v3422
        %v3424 = vrot.slane %v3295, 6
        %v3425 = vrot.slane %v3424, 4
        %v3426 = vrot.slane %v2776, 6
        %v3427 = vsel %vm1909, %v3425, %v3426
        %v3428 = vrot.slane %v3426, 4
        %v3429 = vrot.slane %v3296, 6
        %v3430 = vsel %vm1909, %v3428, %v3429
        %v3431 = vrot.slane %v3297, 6
        %v3432 = vrot.slane %v3431, 4
        %v3433 = vrot.slane %v2779, 6
        %v3434 = vsel %vm1909, %v3432, %v3433
        %v3435 = vrot.slane %v3433, 4
        %v3436 = vrot.slane %v3298, 6
        %v3437 = vsel %vm1909, %v3435, %v3436
        %v3438 = vrot.slane %v3299, 6
        %v3439 = vrot.slane %v3438, 4
        %v3440 = vrot.slane %v2782, 6
        %v3441 = vsel %vm1909, %v3439, %v3440
        %v3442 = vrot.slane %v3440, 4
        %v3443 = vrot.slane %v3300, 6
        %v3444 = vsel %vm1909, %v3442, %v3443
        %s3445 = sadd.s32 %s1046, 5
        %s3446 = smul.u32 %s3445, 16
        %s3447 = smul.addr %s3446, 4
        %s3448 = scalar_lea.vmem [#allocation9], %s3447
        %v3449 = vld [vmem:[%s3448] sm:$0xf]
        %v3450 = vld [vmem:[%s3448 + $0x4] sm:$0xf]
        %v3451 = vld [vmem:[%s3448 + $0x8] sm:$0xf]
        %v3452 = vld [vmem:[%s3448 + $0xc] sm:$0xf]
        %v3453 = vld [vmem:[%s3448 + $0x10] sm:$0xf]
        %v3454 = vld [vmem:[%s3448 + $0x14] sm:$0xf]
        %v3455 = vld [vmem:[%s3448 + $0x18] sm:$0xf]
        %v3456 = vld [vmem:[%s3448 + $0x1c] sm:$0xf]
        %v3457 = vld [vmem:[%s3448 + $0x20] sm:$0xf]
        %v3458 = vld [vmem:[%s3448 + $0x24] sm:$0xf]
        %v3459 = vld [vmem:[%s3448 + $0x28] sm:$0xf]
        %v3460 = vld [vmem:[%s3448 + $0x2c] sm:$0xf]
        %v3461 = vld [vmem:[%s3448 + $0x30] sm:$0xf]
        %v3462 = vld [vmem:[%s3448 + $0x34] sm:$0xf]
        %v3463 = vld [vmem:[%s3448 + $0x38] sm:$0xf]
        %v3464 = vld [vmem:[%s3448 + $0x3c] sm:$0xf]
        %v3465 = vunpack.c.l.b16 %v3336
        %v3466 = vunpack.c.l.b16 %v3339
        %v3467 = vunpack.c.l.b16 %v3343
        %v3468 = vunpack.c.l.b16 %v3346
        %v3469 = vunpack.c.l.b16 %v3350
        %v3470 = vunpack.c.l.b16 %v3353
        %v3471 = vunpack.c.l.b16 %v3357
        %v3472 = vunpack.c.l.b16 %v3360
        %v3473 = vunpack.c.l.b16 %v3364
        %v3474 = vunpack.c.l.b16 %v3367
        %v3475 = vunpack.c.l.b16 %v3371
        %v3476 = vunpack.c.l.b16 %v3374
        %v3477 = vunpack.c.l.b16 %v3378
        %v3478 = vunpack.c.l.b16 %v3381
        %v3479 = vunpack.c.l.b16 %v3385
        %v3480 = vunpack.c.l.b16 %v3388
        %v3481 = vunpack.c.l.b16 %v3392
        %v3482 = vunpack.c.l.b16 %v3395
        %v3483 = vunpack.c.l.b16 %v3399
        %v3484 = vunpack.c.l.b16 %v3402
        %v3485 = vunpack.c.l.b16 %v3406
        %v3486 = vunpack.c.l.b16 %v3409
        %v3487 = vunpack.c.l.b16 %v3413
        %v3488 = vunpack.c.l.b16 %v3416
        %v3489 = vunpack.c.l.b16 %v3420
        %v3490 = vunpack.c.l.b16 %v3423
        %v3491 = vunpack.c.l.b16 %v3427
        %v3492 = vunpack.c.l.b16 %v3430
        %v3493 = vunpack.c.l.b16 %v3434
        %v3494 = vunpack.c.l.b16 %v3437
        %v3495 = vunpack.c.l.b16 %v3441
        %v3496 = vunpack.c.l.b16 %v3444
        %v3497 = vpack.c.b16 %v3466, %v3465
        %v3498 = vpack.c.b16 %v3468, %v3467
        %v3499 = vpack.c.b16 %v3470, %v3469
        %v3500 = vpack.c.b16 %v3472, %v3471
        %v3501 = vpack.c.b16 %v3474, %v3473
        %v3502 = vpack.c.b16 %v3476, %v3475
        %v3503 = vpack.c.b16 %v3478, %v3477
        %v3504 = vpack.c.b16 %v3480, %v3479
        %v3505 = vpack.c.b16 %v3482, %v3481
        %v3506 = vpack.c.b16 %v3484, %v3483
        %v3507 = vpack.c.b16 %v3486, %v3485
        %v3508 = vpack.c.b16 %v3488, %v3487
        %v3509 = vpack.c.b16 %v3490, %v3489
        %v3510 = vpack.c.b16 %v3492, %v3491
        %v3511 = vpack.c.b16 %v3494, %v3493
        %v3512 = vpack.c.b16 %v3496, %v3495
        %v3545 = vunpack.c.l.b16 %v3449
        %v3546 = vunpack.c.l.b16 %v3450
        %v3547 = vunpack.c.l.b16 %v3451
        %v3548 = vunpack.c.l.b16 %v3452
        %v3549 = vunpack.c.l.b16 %v3453
        %v3550 = vunpack.c.l.b16 %v3454
        %v3551 = vunpack.c.l.b16 %v3455
        %v3552 = vunpack.c.l.b16 %v3456
        %v3553 = vunpack.c.l.b16 %v3457
        %v3554 = vunpack.c.l.b16 %v3458
        %v3555 = vunpack.c.l.b16 %v3459
        %v3556 = vunpack.c.l.b16 %v3460
        %v3557 = vunpack.c.l.b16 %v3461
        %v3558 = vunpack.c.l.b16 %v3462
        %v3559 = vunpack.c.l.b16 %v3463
        %v3560 = vunpack.c.l.b16 %v3464
        %v3561 = vpack.c.b16 %v3546, %v3545
        %v3562 = vpack.c.b16 %v3548, %v3547
        %v3563 = vpack.c.b16 %v3550, %v3549
        %v3564 = vpack.c.b16 %v3552, %v3551
        %v3565 = vpack.c.b16 %v3554, %v3553
        %v3566 = vpack.c.b16 %v3556, %v3555
        %v3567 = vpack.c.b16 %v3558, %v3557
        %v3568 = vpack.c.b16 %v3560, %v3559
        %3577 = vmatprep.subr.bf16.mxu0 0
        %3578 = vmatpush1.bf16.msra.mxu0 %v3561
        %3579 = vmatprep.subr.bf16.mxu0 0
        %3580 = vmatpush1.bf16.msra.mxu0 %v3562
        %3581 = vmatprep.subr.bf16.mxu0 0
        %3582 = vmatpush1.bf16.msra.mxu0 %v3563
        %3583 = vmatprep.subr.bf16.mxu0 0
        %3584 = vmatpush1.bf16.msra.mxu0 %v3564
        %3585 = vmatprep.subr.bf16.mxu0 0
        %3586 = vmatpush1.bf16.msra.mxu0 %v3565
        %3587 = vmatprep.subr.bf16.mxu0 0
        %3588 = vmatpush1.bf16.msra.mxu0 %v3566
        %3589 = vmatprep.subr.bf16.mxu0 0
        %3590 = vmatpush1.bf16.msra.mxu0 %v3567
        %3591 = vmatprep.subr.bf16.mxu0 0
        %3592 = vmatpush1.bf16.msra.mxu0 %v3568
        %3593 = vmatprep.subr.bf16.mxu0 0
        %3594 = vmatpush1.bf16.msra.mxu0 0
        %3595 = vmatprep.subr.bf16.mxu0 0
        %3596 = vmatpush1.bf16.msra.mxu0 0
        %3597 = vmatprep.subr.bf16.mxu0 0
        %3598 = vmatpush1.bf16.msra.mxu0 0
        %3599 = vmatprep.subr.bf16.mxu0 0
        %3600 = vmatpush1.bf16.msra.mxu0 0
        %3601 = vmatprep.subr.bf16.mxu0 0
        %3602 = vmatpush1.bf16.msra.mxu0 0
        %3603 = vmatprep.subr.bf16.mxu0 0
        %3604 = vmatpush1.bf16.msra.mxu0 0
        %3605 = vmatprep.subr.bf16.mxu0 0
        %3606 = vmatpush1.bf16.msra.mxu0 0
        %3607 = vmatprep.subr.bf16.mxu0 0
        %3608 = vmatpush1.bf16.msra.mxu0 0
        %3609 = vmatprep.mubr.bf16.mxu0 0
        %3610 = vmatmul.mubr.bf16.gmra.mrb[0].mxu0 %v3497
        %v3611 = vpop.f32.mrb[0].mxu0
        %v3612 = vadd.f32 0.0, %v3611
        %v3613 = vpop.f32.mrb[0].mxu0
        %v3614 = vpop.f32.mrb[0].mxu0
        %v3615 = vadd.f32 0.0, %v3614
        %v3616 = vpop.f32.mrb[0].mxu0
        %3617 = vmatprep.mubr.bf16.mxu0 0
        %3618 = vmatmul.mubr.bf16.gmra.mrb[0].mxu0 %v3498
        %v3619 = vpop.f32.mrb[0].mxu0
        %v3620 = vadd.f32 0.0, %v3619
        %v3621 = vpop.f32.mrb[0].mxu0
        %v3622 = vpop.f32.mrb[0].mxu0
        %v3623 = vadd.f32 0.0, %v3622
        %v3624 = vpop.f32.mrb[0].mxu0
        %3625 = vmatprep.mubr.bf16.mxu0 0
        %3626 = vmatmul.mubr.bf16.gmra.mrb[0].mxu0 %v3499
        %v3627 = vpop.f32.mrb[0].mxu0
        %v3628 = vadd.f32 0.0, %v3627
        %v3629 = vpop.f32.mrb[0].mxu0
        %v3630 = vpop.f32.mrb[0].mxu0
        %v3631 = vadd.f32 0.0, %v3630
        %v3632 = vpop.f32.mrb[0].mxu0
        %3633 = vmatprep.mubr.bf16.mxu0 0
        %3634 = vmatmul.mubr.bf16.gmra.mrb[0].mxu0 %v3500
        %v3635 = vpop.f32.mrb[0].mxu0
        %v3636 = vadd.f32 0.0, %v3635
        %v3637 = vpop.f32.mrb[0].mxu0
        %v3638 = vpop.f32.mrb[0].mxu0
        %v3639 = vadd.f32 0.0, %v3638
        %v3640 = vpop.f32.mrb[0].mxu0
        %3641 = vmatprep.mubr.bf16.mxu0 0
        %3642 = vmatmul.mubr.bf16.gmra.mrb[0].mxu0 %v3501
        %v3643 = vpop.f32.mrb[0].mxu0
        %v3644 = vadd.f32 0.0, %v3643
        %v3645 = vpop.f32.mrb[0].mxu0
        %v3646 = vpop.f32.mrb[0].mxu0
        %v3647 = vadd.f32 0.0, %v3646
        %v3648 = vpop.f32.mrb[0].mxu0
        %3649 = vmatprep.mubr.bf16.mxu0 0
        %3650 = vmatmul.mubr.bf16.gmra.mrb[0].mxu0 %v3502
        %v3651 = vpop.f32.mrb[0].mxu0
        %v3652 = vadd.f32 0.0, %v3651
        %v3653 = vpop.f32.mrb[0].mxu0
        %v3654 = vpop.f32.mrb[0].mxu0
        %v3655 = vadd.f32 0.0, %v3654
        %v3656 = vpop.f32.mrb[0].mxu0
        %3657 = vmatprep.mubr.bf16.mxu0 0
        %3658 = vmatmul.mubr.bf16.gmra.mrb[0].mxu0 %v3503
        %v3659 = vpop.f32.mrb[0].mxu0
        %v3660 = vadd.f32 0.0, %v3659
        %v3661 = vpop.f32.mrb[0].mxu0
        %v3662 = vpop.f32.mrb[0].mxu0
        %v3663 = vadd.f32 0.0, %v3662
        %v3664 = vpop.f32.mrb[0].mxu0
        %3665 = vmatprep.mubr.bf16.mxu0 0
        %3666 = vmatmul.mubr.bf16.gmra.mrb[0].mxu0 %v3504
        %v3667 = vpop.f32.mrb[0].mxu0
        %v3668 = vadd.f32 0.0, %v3667
        %v3669 = vpop.f32.mrb[0].mxu0
        %v3670 = vpop.f32.mrb[0].mxu0
        %v3671 = vadd.f32 0.0, %v3670
        %v3672 = vpop.f32.mrb[0].mxu0
        %3673 = vmatprep.mubr.bf16.mxu0 0
        %3674 = vmatmul.mubr.bf16.gmra.mrb[0].mxu0 %v3505
        %v3675 = vpop.f32.mrb[0].mxu0
        %v3676 = vadd.f32 0.0, %v3675
        %v3677 = vpop.f32.mrb[0].mxu0
        %v3678 = vpop.f32.mrb[0].mxu0
        %v3679 = vadd.f32 0.0, %v3678
        %v3680 = vpop.f32.mrb[0].mxu0
        %3681 = vmatprep.mubr.bf16.mxu0 0
        %3682 = vmatmul.mubr.bf16.gmra.mrb[0].mxu0 %v3506
        %v3683 = vpop.f32.mrb[0].mxu0
        %v3684 = vadd.f32 0.0, %v3683
        %v3685 = vpop.f32.mrb[0].mxu0
        %v3686 = vpop.f32.mrb[0].mxu0
        %v3687 = vadd.f32 0.0, %v3686
        %v3688 = vpop.f32.mrb[0].mxu0
        %3689 = vmatprep.mubr.bf16.mxu0 0
        %3690 = vmatmul.mubr.bf16.gmra.mrb[0].mxu0 %v3507
        %v3691 = vpop.f32.mrb[0].mxu0
        %v3692 = vadd.f32 0.0, %v3691
        %v3693 = vpop.f32.mrb[0].mxu0
        %v3694 = vpop.f32.mrb[0].mxu0
        %v3695 = vadd.f32 0.0, %v3694
        %v3696 = vpop.f32.mrb[0].mxu0
        %3697 = vmatprep.mubr.bf16.mxu0 0
        %3698 = vmatmul.mubr.bf16.gmra.mrb[0].mxu0 %v3508
        %v3699 = vpop.f32.mrb[0].mxu0
        %v3700 = vadd.f32 0.0, %v3699
        %v3701 = vpop.f32.mrb[0].mxu0
        %v3702 = vpop.f32.mrb[0].mxu0
        %v3703 = vadd.f32 0.0, %v3702
        %v3704 = vpop.f32.mrb[0].mxu0
        %3705 = vmatprep.mubr.bf16.mxu0 0
        %3706 = vmatmul.mubr.bf16.gmra.mrb[0].mxu0 %v3509
        %v3707 = vpop.f32.mrb[0].mxu0
        %v3708 = vadd.f32 0.0, %v3707
        %v3709 = vpop.f32.mrb[0].mxu0
        %v3710 = vpop.f32.mrb[0].mxu0
        %v3711 = vadd.f32 0.0, %v3710
        %v3712 = vpop.f32.mrb[0].mxu0
        %3713 = vmatprep.mubr.bf16.mxu0 0
        %3714 = vmatmul.mubr.bf16.gmra.mrb[0].mxu0 %v3510
        %v3715 = vpop.f32.mrb[0].mxu0
        %v3716 = vadd.f32 0.0, %v3715
        %v3717 = vpop.f32.mrb[0].mxu0
        %v3718 = vpop.f32.mrb[0].mxu0
        %v3719 = vadd.f32 0.0, %v3718
        %v3720 = vpop.f32.mrb[0].mxu0
        %3721 = vmatprep.mubr.bf16.mxu0 0
        %3722 = vmatmul.mubr.bf16.gmra.mrb[0].mxu0 %v3511
        %v3723 = vpop.f32.mrb[0].mxu0
        %v3724 = vadd.f32 0.0, %v3723
        %v3725 = vpop.f32.mrb[0].mxu0
        %v3726 = vpop.f32.mrb[0].mxu0
        %v3727 = vadd.f32 0.0, %v3726
        %v3728 = vpop.f32.mrb[0].mxu0
        %3729 = vmatprep.mubr.bf16.mxu0 0
        %3730 = vmatmul.mubr.bf16.gmra.mrb[0].mxu0 %v3512
        %v3731 = vpop.f32.mrb[0].mxu0
        %v3732 = vadd.f32 0.0, %v3731
        %v3733 = vpop.f32.mrb[0].mxu0
        %v3734 = vpop.f32.mrb[0].mxu0
        %v3735 = vadd.f32 0.0, %v3734
        %v3736 = vpop.f32.mrb[0].mxu0
        %3737 = vdwg.mxu0
        %v3738 = vadd.f32 %v3237, %v3612
        %v3739 = vadd.f32 %v3238, %v3615
        %v3740 = vadd.f32 %v3239, %v3620
        %v3741 = vadd.f32 %v3240, %v3623
        %v3742 = vadd.f32 %v3241, %v3628
        %v3743 = vadd.f32 %v3242, %v3631
        %v3744 = vadd.f32 %v3243, %v3636
        %v3745 = vadd.f32 %v3244, %v3639
        %v3746 = vadd.f32 %v3245, %v3644
        %v3747 = vadd.f32 %v3246, %v3647
        %v3748 = vadd.f32 %v3247, %v3652
        %v3749 = vadd.f32 %v3248, %v3655
        %v3750 = vadd.f32 %v3249, %v3660
        %v3751 = vadd.f32 %v3250, %v3663
        %v3752 = vadd.f32 %v3251, %v3668
        %v3753 = vadd.f32 %v3252, %v3671
        %v3754 = vadd.f32 %v3253, %v3676
        %v3755 = vadd.f32 %v3254, %v3679
        %v3756 = vadd.f32 %v3255, %v3684
        %v3757 = vadd.f32 %v3256, %v3687
        %v3758 = vadd.f32 %v3257, %v3692
        %v3759 = vadd.f32 %v3258, %v3695
        %v3760 = vadd.f32 %v3259, %v3700
        %v3761 = vadd.f32 %v3260, %v3703
        %v3762 = vadd.f32 %v3261, %v3708
        %v3763 = vadd.f32 %v3262, %v3711
        %v3764 = vadd.f32 %v3263, %v3716
        %v3765 = vadd.f32 %v3264, %v3719
        %v3766 = vadd.f32 %v3265, %v3724
        %v3767 = vadd.f32 %v3266, %v3727
        %v3768 = vadd.f32 %v3267, %v3732
        %v3769 = vadd.f32 %v3268, %v3735
        %s3770 = scalar_lea.vmem [#allocation2], 48
        %v3771 = vld [vmem:[%s3770] sm:$0xf]
        %v3772 = vld [vmem:[%s3770 + $0x4] sm:$0xf]
        %v3773 = vld [vmem:[%s3770 + $0xc] sm:$0xf]
        %v3774 = vld [vmem:[%s3770 + $0x10] sm:$0xf]
        %v3775 = vld [vmem:[%s3770 + $0x18] sm:$0xf]
        %v3776 = vld [vmem:[%s3770 + $0x1c] sm:$0xf]
        %v3777 = vld [vmem:[%s3770 + $0x24] sm:$0xf]
        %v3778 = vld [vmem:[%s3770 + $0x28] sm:$0xf]
        %v3779 = vld [vmem:[%s3770 + $0x30] sm:$0xf]
        %v3780 = vld [vmem:[%s3770 + $0x34] sm:$0xf]
        %v3781 = vld [vmem:[%s3770 + $0x3c] sm:$0xf]
        %v3782 = vld [vmem:[%s3770 + $0x40] sm:$0xf]
        %v3783 = vld [vmem:[%s3770 + $0x48] sm:$0xf]
        %v3784 = vld [vmem:[%s3770 + $0x4c] sm:$0xf]
        %v3785 = vld [vmem:[%s3770 + $0x54] sm:$0xf]
        %v3786 = vld [vmem:[%s3770 + $0x58] sm:$0xf]
        %v3787 = vld [vmem:[%s3770 + $0x60] sm:$0xf]
        %v3788 = vld [vmem:[%s3770 + $0x64] sm:$0xf]
        %v3789 = vld [vmem:[%s3770 + $0x6c] sm:$0xf]
        %v3790 = vld [vmem:[%s3770 + $0x70] sm:$0xf]
        %v3791 = vld [vmem:[%s3770 + $0x78] sm:$0xf]
        %v3792 = vld [vmem:[%s3770 + $0x7c] sm:$0xf]
        %v3793 = vld [vmem:[%s3770 + $0x84] sm:$0xf]
        %v3794 = vld [vmem:[%s3770 + $0x88] sm:$0xf]
        %v3795 = vld [vmem:[%s3770 + $0x90] sm:$0xf]
        %v3796 = vld [vmem:[%s3770 + $0x94] sm:$0xf]
        %v3797 = vld [vmem:[%s3770 + $0x9c] sm:$0xf]
        %v3798 = vld [vmem:[%s3770 + $0xa0] sm:$0xf]
        %v3799 = vld [vmem:[%s3770 + $0xa8] sm:$0xf]
        %v3800 = vld [vmem:[%s3770 + $0xac] sm:$0xf]
        %v3801 = vld [vmem:[%s3770 + $0xb4] sm:$0xf]
        %v3802 = vld [vmem:[%s3770 + $0xb8] sm:$0xf]
        %s3803 = sadd.s32 %s1046, 6
        %s3804 = smul.u32 %s3803, 16
        %s3805 = smul.addr %s3804, 4
        %s3806 = scalar_lea.vmem [#allocation9], %s3805
        %v3807 = vld [vmem:[%s3806] sm:$0xf]
        %v3808 = vld [vmem:[%s3806 + $0x4] sm:$0xf]
        %v3809 = vld [vmem:[%s3806 + $0x8] sm:$0xf]
        %v3810 = vld [vmem:[%s3806 + $0xc] sm:$0xf]
        %v3811 = vld [vmem:[%s3806 + $0x10] sm:$0xf]
        %v3812 = vld [vmem:[%s3806 + $0x14] sm:$0xf]
        %v3813 = vld [vmem:[%s3806 + $0x18] sm:$0xf]
        %v3814 = vld [vmem:[%s3806 + $0x1c] sm:$0xf]
        %v3815 = vld [vmem:[%s3806 + $0x20] sm:$0xf]
        %v3816 = vld [vmem:[%s3806 + $0x24] sm:$0xf]
        %v3817 = vld [vmem:[%s3806 + $0x28] sm:$0xf]
        %v3818 = vld [vmem:[%s3806 + $0x2c] sm:$0xf]
        %v3819 = vld [vmem:[%s3806 + $0x30] sm:$0xf]
        %v3820 = vld [vmem:[%s3806 + $0x34] sm:$0xf]
        %v3821 = vld [vmem:[%s3806 + $0x38] sm:$0xf]
        %v3822 = vld [vmem:[%s3806 + $0x3c] sm:$0xf]
        %v3855 = vunpack.c.l.b16 %v3771
        %v3856 = vunpack.c.l.b16 %v3772
        %v3857 = vunpack.c.l.b16 %v3773
        %v3858 = vunpack.c.l.b16 %v3774
        %v3859 = vunpack.c.l.b16 %v3775
        %v3860 = vunpack.c.l.b16 %v3776
        %v3861 = vunpack.c.l.b16 %v3777
        %v3862 = vunpack.c.l.b16 %v3778
        %v3863 = vunpack.c.l.b16 %v3779
        %v3864 = vunpack.c.l.b16 %v3780
        %v3865 = vunpack.c.l.b16 %v3781
        %v3866 = vunpack.c.l.b16 %v3782
        %v3867 = vunpack.c.l.b16 %v3783
        %v3868 = vunpack.c.l.b16 %v3784
        %v3869 = vunpack.c.l.b16 %v3785
        %v3870 = vunpack.c.l.b16 %v3786
        %v3871 = vunpack.c.l.b16 %v3787
        %v3872 = vunpack.c.l.b16 %v3788
        %v3873 = vunpack.c.l.b16 %v3789
        %v3874 = vunpack.c.l.b16 %v3790
        %v3875 = vunpack.c.l.b16 %v3791
        %v3876 = vunpack.c.l.b16 %v3792
        %v3877 = vunpack.c.l.b16 %v3793
        %v3878 = vunpack.c.l.b16 %v3794
        %v3879 = vunpack.c.l.b16 %v3795
        %v3880 = vunpack.c.l.b16 %v3796
        %v3881 = vunpack.c.l.b16 %v3797
        %v3882 = vunpack.c.l.b16 %v3798
        %v3883 = vunpack.c.l.b16 %v3799
        %v3884 = vunpack.c.l.b16 %v3800
        %v3885 = vunpack.c.l.b16 %v3801
        %v3886 = vunpack.c.l.b16 %v3802
        %v3887 = vpack.c.b16 %v3856, %v3855
        %v3888 = vpack.c.b16 %v3858, %v3857
        %v3889 = vpack.c.b16 %v3860, %v3859
        %v3890 = vpack.c.b16 %v3862, %v3861
        %v3891 = vpack.c.b16 %v3864, %v3863
        %v3892 = vpack.c.b16 %v3866, %v3865
        %v3893 = vpack.c.b16 %v3868, %v3867
        %v3894 = vpack.c.b16 %v3870, %v3869
        %v3895 = vpack.c.b16 %v3872, %v3871
        %v3896 = vpack.c.b16 %v3874, %v3873
        %v3897 = vpack.c.b16 %v3876, %v3875
        %v3898 = vpack.c.b16 %v3878, %v3877
        %v3899 = vpack.c.b16 %v3880, %v3879
        %v3900 = vpack.c.b16 %v3882, %v3881
        %v3901 = vpack.c.b16 %v3884, %v3883
        %v3902 = vpack.c.b16 %v3886, %v3885
        %v3935 = vunpack.c.l.b16 %v3807
        %v3936 = vunpack.c.l.b16 %v3808
        %v3937 = vunpack.c.l.b16 %v3809
        %v3938 = vunpack.c.l.b16 %v3810
        %v3939 = vunpack.c.l.b16 %v3811
        %v3940 = vunpack.c.l.b16 %v3812
        %v3941 = vunpack.c.l.b16 %v3813
        %v3942 = vunpack.c.l.b16 %v3814
        %v3943 = vunpack.c.l.b16 %v3815
        %v3944 = vunpack.c.l.b16 %v3816
        %v3945 = vunpack.c.l.b16 %v3817
        %v3946 = vunpack.c.l.b16 %v3818
        %v3947 = vunpack.c.l.b16 %v3819
        %v3948 = vunpack.c.l.b16 %v3820
        %v3949 = vunpack.c.l.b16 %v3821
        %v3950 = vunpack.c.l.b16 %v3822
        %v3951 = vpack.c.b16 %v3936, %v3935
        %v3952 = vpack.c.b16 %v3938, %v3937
        %v3953 = vpack.c.b16 %v3940, %v3939
        %v3954 = vpack.c.b16 %v3942, %v3941
        %v3955 = vpack.c.b16 %v3944, %v3943
        %v3956 = vpack.c.b16 %v3946, %v3945
        %v3957 = vpack.c.b16 %v3948, %v3947
        %v3958 = vpack.c.b16 %v3950, %v3949
        %3967 = vmatprep.subr.bf16.mxu0 0
        %3968 = vmatpush1.bf16.msra.mxu0 %v3951
        %3969 = vmatprep.subr.bf16.mxu0 0
        %3970 = vmatpush1.bf16.msra.mxu0 %v3952
        %3971 = vmatprep.subr.bf16.mxu0 0
        %3972 = vmatpush1.bf16.msra.mxu0 %v3953
        %3973 = vmatprep.subr.bf16.mxu0 0
        %3974 = vmatpush1.bf16.msra.mxu0 %v3954
        %3975 = vmatprep.subr.bf16.mxu0 0
        %3976 = vmatpush1.bf16.msra.mxu0 %v3955
        %3977 = vmatprep.subr.bf16.mxu0 0
        %3978 = vmatpush1.bf16.msra.mxu0 %v3956
        %3979 = vmatprep.subr.bf16.mxu0 0
        %3980 = vmatpush1.bf16.msra.mxu0 %v3957
        %3981 = vmatprep.subr.bf16.mxu0 0
        %3982 = vmatpush1.bf16.msra.mxu0 %v3958
        %3983 = vmatprep.subr.bf16.mxu0 0
        %3984 = vmatpush1.bf16.msra.mxu0 0
        %3985 = vmatprep.subr.bf16.mxu0 0
        %3986 = vmatpush1.bf16.msra.mxu0 0
        %3987 = vmatprep.subr.bf16.mxu0 0
        %3988 = vmatpush1.bf16.msra.mxu0 0
        %3989 = vmatprep.subr.bf16.mxu0 0
        %3990 = vmatpush1.bf16.msra.mxu0 0
        %3991 = vmatprep.subr.bf16.mxu0 0
        %3992 = vmatpush1.bf16.msra.mxu0 0
        %3993 = vmatprep.subr.bf16.mxu0 0
        %3994 = vmatpush1.bf16.msra.mxu0 0
        %3995 = vmatprep.subr.bf16.mxu0 0
        %3996 = vmatpush1.bf16.msra.mxu0 0
        %3997 = vmatprep.subr.bf16.mxu0 0
        %3998 = vmatpush1.bf16.msra.mxu0 0
        %3999 = vmatprep.mubr.bf16.mxu0 0
        %4000 = vmatmul.mubr.bf16.gmra.mrb[0].mxu0 %v3887
        %v4001 = vpop.f32.mrb[0].mxu0
        %v4002 = vadd.f32 0.0, %v4001
        %v4003 = vpop.f32.mrb[0].mxu0
        %v4004 = vpop.f32.mrb[0].mxu0
        %v4005 = vadd.f32 0.0, %v4004
        %v4006 = vpop.f32.mrb[0].mxu0
        %4007 = vmatprep.mubr.bf16.mxu0 0
        %4008 = vmatmul.mubr.bf16.gmra.mrb[0].mxu0 %v3888
        %v4009 = vpop.f32.mrb[0].mxu0
        %v4010 = vadd.f32 0.0, %v4009
        %v4011 = vpop.f32.mrb[0].mxu0
        %v4012 = vpop.f32.mrb[0].mxu0
        %v4013 = vadd.f32 0.0, %v4012
        %v4014 = vpop.f32.mrb[0].mxu0
        %4015 = vmatprep.mubr.bf16.mxu0 0
        %4016 = vmatmul.mubr.bf16.gmra.mrb[0].mxu0 %v3889
        %v4017 = vpop.f32.mrb[0].mxu0
        %v4018 = vadd.f32 0.0, %v4017
        %v4019 = vpop.f32.mrb[0].mxu0
        %v4020 = vpop.f32.mrb[0].mxu0
        %v4021 = vadd.f32 0.0, %v4020
        %v4022 = vpop.f32.mrb[0].mxu0
        %4023 = vmatprep.mubr.bf16.mxu0 0
        %4024 = vmatmul.mubr.bf16.gmra.mrb[0].mxu0 %v3890
        %v4025 = vpop.f32.mrb[0].mxu0
        %v4026 = vadd.f32 0.0, %v4025
        %v4027 = vpop.f32.mrb[0].mxu0
        %v4028 = vpop.f32.mrb[0].mxu0
        %v4029 = vadd.f32 0.0, %v4028
        %v4030 = vpop.f32.mrb[0].mxu0
        %4031 = vmatprep.mubr.bf16.mxu0 0
        %4032 = vmatmul.mubr.bf16.gmra.mrb[0].mxu0 %v3891
        %v4033 = vpop.f32.mrb[0].mxu0
        %v4034 = vadd.f32 0.0, %v4033
        %v4035 = vpop.f32.mrb[0].mxu0
        %v4036 = vpop.f32.mrb[0].mxu0
        %v4037 = vadd.f32 0.0, %v4036
        %v4038 = vpop.f32.mrb[0].mxu0
        %4039 = vmatprep.mubr.bf16.mxu0 0
        %4040 = vmatmul.mubr.bf16.gmra.mrb[0].mxu0 %v3892
        %v4041 = vpop.f32.mrb[0].mxu0
        %v4042 = vadd.f32 0.0, %v4041
        %v4043 = vpop.f32.mrb[0].mxu0
        %v4044 = vpop.f32.mrb[0].mxu0
        %v4045 = vadd.f32 0.0, %v4044
        %v4046 = vpop.f32.mrb[0].mxu0
        %4047 = vmatprep.mubr.bf16.mxu0 0
        %4048 = vmatmul.mubr.bf16.gmra.mrb[0].mxu0 %v3893
        %v4049 = vpop.f32.mrb[0].mxu0
        %v4050 = vadd.f32 0.0, %v4049
        %v4051 = vpop.f32.mrb[0].mxu0
        %v4052 = vpop.f32.mrb[0].mxu0
        %v4053 = vadd.f32 0.0, %v4052
        %v4054 = vpop.f32.mrb[0].mxu0
        %4055 = vmatprep.mubr.bf16.mxu0 0
        %4056 = vmatmul.mubr.bf16.gmra.mrb[0].mxu0 %v3894
        %v4057 = vpop.f32.mrb[0].mxu0
        %v4058 = vadd.f32 0.0, %v4057
        %v4059 = vpop.f32.mrb[0].mxu0
        %v4060 = vpop.f32.mrb[0].mxu0
        %v4061 = vadd.f32 0.0, %v4060
        %v4062 = vpop.f32.mrb[0].mxu0
        %4063 = vmatprep.mubr.bf16.mxu0 0
        %4064 = vmatmul.mubr.bf16.gmra.mrb[0].mxu0 %v3895
        %v4065 = vpop.f32.mrb[0].mxu0
        %v4066 = vadd.f32 0.0, %v4065
        %v4067 = vpop.f32.mrb[0].mxu0
        %v4068 = vpop.f32.mrb[0].mxu0
        %v4069 = vadd.f32 0.0, %v4068
        %v4070 = vpop.f32.mrb[0].mxu0
        %4071 = vmatprep.mubr.bf16.mxu0 0
        %4072 = vmatmul.mubr.bf16.gmra.mrb[0].mxu0 %v3896
        %v4073 = vpop.f32.mrb[0].mxu0
        %v4074 = vadd.f32 0.0, %v4073
        %v4075 = vpop.f32.mrb[0].mxu0
        %v4076 = vpop.f32.mrb[0].mxu0
        %v4077 = vadd.f32 0.0, %v4076
        %v4078 = vpop.f32.mrb[0].mxu0
        %4079 = vmatprep.mubr.bf16.mxu0 0
        %4080 = vmatmul.mubr.bf16.gmra.mrb[0].mxu0 %v3897
        %v4081 = vpop.f32.mrb[0].mxu0
        %v4082 = vadd.f32 0.0, %v4081
        %v4083 = vpop.f32.mrb[0].mxu0
        %v4084 = vpop.f32.mrb[0].mxu0
        %v4085 = vadd.f32 0.0, %v4084
        %v4086 = vpop.f32.mrb[0].mxu0
        %4087 = vmatprep.mubr.bf16.mxu0 0
        %4088 = vmatmul.mubr.bf16.gmra.mrb[0].mxu0 %v3898
        %v4089 = vpop.f32.mrb[0].mxu0
        %v4090 = vadd.f32 0.0, %v4089
        %v4091 = vpop.f32.mrb[0].mxu0
        %v4092 = vpop.f32.mrb[0].mxu0
        %v4093 = vadd.f32 0.0, %v4092
        %v4094 = vpop.f32.mrb[0].mxu0
        %4095 = vmatprep.mubr.bf16.mxu0 0
        %4096 = vmatmul.mubr.bf16.gmra.mrb[0].mxu0 %v3899
        %v4097 = vpop.f32.mrb[0].mxu0
        %v4098 = vadd.f32 0.0, %v4097
        %v4099 = vpop.f32.mrb[0].mxu0
        %v4100 = vpop.f32.mrb[0].mxu0
        %v4101 = vadd.f32 0.0, %v4100
        %v4102 = vpop.f32.mrb[0].mxu0
        %4103 = vmatprep.mubr.bf16.mxu0 0
        %4104 = vmatmul.mubr.bf16.gmra.mrb[0].mxu0 %v3900
        %v4105 = vpop.f32.mrb[0].mxu0
        %v4106 = vadd.f32 0.0, %v4105
        %v4107 = vpop.f32.mrb[0].mxu0
        %v4108 = vpop.f32.mrb[0].mxu0
        %v4109 = vadd.f32 0.0, %v4108
        %v4110 = vpop.f32.mrb[0].mxu0
        %4111 = vmatprep.mubr.bf16.mxu0 0
        %4112 = vmatmul.mubr.bf16.gmra.mrb[0].mxu0 %v3901
        %v4113 = vpop.f32.mrb[0].mxu0
        %v4114 = vadd.f32 0.0, %v4113
        %v4115 = vpop.f32.mrb[0].mxu0
        %v4116 = vpop.f32.mrb[0].mxu0
        %v4117 = vadd.f32 0.0, %v4116
        %v4118 = vpop.f32.mrb[0].mxu0
        %4119 = vmatprep.mubr.bf16.mxu0 0
        %4120 = vmatmul.mubr.bf16.gmra.mrb[0].mxu0 %v3902
        %v4121 = vpop.f32.mrb[0].mxu0
        %v4122 = vadd.f32 0.0, %v4121
        %v4123 = vpop.f32.mrb[0].mxu0
        %v4124 = vpop.f32.mrb[0].mxu0
        %v4125 = vadd.f32 0.0, %v4124
        %v4126 = vpop.f32.mrb[0].mxu0
        %4127 = vdwg.mxu0
        %v4128 = vadd.f32 %v3738, %v4002
        %v4129 = vadd.f32 %v3739, %v4005
        %v4130 = vadd.f32 %v3740, %v4010
        %v4131 = vadd.f32 %v3741, %v4013
        %v4132 = vadd.f32 %v3742, %v4018
        %v4133 = vadd.f32 %v3743, %v4021
        %v4134 = vadd.f32 %v3744, %v4026
        %v4135 = vadd.f32 %v3745, %v4029
        %v4136 = vadd.f32 %v3746, %v4034
        %v4137 = vadd.f32 %v3747, %v4037
        %v4138 = vadd.f32 %v3748, %v4042
        %v4139 = vadd.f32 %v3749, %v4045
        %v4140 = vadd.f32 %v3750, %v4050
        %v4141 = vadd.f32 %v3751, %v4053
        %v4142 = vadd.f32 %v3752, %v4058
        %v4143 = vadd.f32 %v3753, %v4061
        %v4144 = vadd.f32 %v3754, %v4066
        %v4145 = vadd.f32 %v3755, %v4069
        %v4146 = vadd.f32 %v3756, %v4074
        %v4147 = vadd.f32 %v3757, %v4077
        %v4148 = vadd.f32 %v3758, %v4082
        %v4149 = vadd.f32 %v3759, %v4085
        %v4150 = vadd.f32 %v3760, %v4090
        %v4151 = vadd.f32 %v3761, %v4093
        %v4152 = vadd.f32 %v3762, %v4098
        %v4153 = vadd.f32 %v3763, %v4101
        %v4154 = vadd.f32 %v3764, %v4106
        %v4155 = vadd.f32 %v3765, %v4109
        %v4156 = vadd.f32 %v3766, %v4114
        %v4157 = vadd.f32 %v3767, %v4117
        %v4158 = vadd.f32 %v3768, %v4122
        %v4159 = vadd.f32 %v3769, %v4125
        %v4160 = vld [vmem:[%s3770] sm:$0xe]
        %v4161 = vld [vmem:[%s3770 + $0x4] sm:$0xf]
        %v4162 = vld [vmem:[%s3770 + $0x8] sm:$0x1]
        %v4163 = vld [vmem:[%s3770 + $0xc] sm:$0xe]
        %v4164 = vld [vmem:[%s3770 + $0x10] sm:$0xf]
        %v4165 = vld [vmem:[%s3770 + $0x14] sm:$0x1]
        %v4166 = vld [vmem:[%s3770 + $0x18] sm:$0xe]
        %v4167 = vld [vmem:[%s3770 + $0x1c] sm:$0xf]
        %v4168 = vld [vmem:[%s3770 + $0x20] sm:$0x1]
        %v4169 = vld [vmem:[%s3770 + $0x24] sm:$0xe]
        %v4170 = vld [vmem:[%s3770 + $0x28] sm:$0xf]
        %v4171 = vld [vmem:[%s3770 + $0x2c] sm:$0x1]
        %v4172 = vld [vmem:[%s3770 + $0x30] sm:$0xe]
        %v4173 = vld [vmem:[%s3770 + $0x34] sm:$0xf]
        %v4174 = vld [vmem:[%s3770 + $0x38] sm:$0x1]
        %v4175 = vld [vmem:[%s3770 + $0x3c] sm:$0xe]
        %v4176 = vld [vmem:[%s3770 + $0x40] sm:$0xf]
        %v4177 = vld [vmem:[%s3770 + $0x44] sm:$0x1]
        %v4178 = vld [vmem:[%s3770 + $0x48] sm:$0xe]
        %v4179 = vld [vmem:[%s3770 + $0x4c] sm:$0xf]
        %v4180 = vld [vmem:[%s3770 + $0x50] sm:$0x1]
        %v4181 = vld [vmem:[%s3770 + $0x54] sm:$0xe]
        %v4182 = vld [vmem:[%s3770 + $0x58] sm:$0xf]
        %v4183 = vld [vmem:[%s3770 + $0x5c] sm:$0x1]
        %v4184 = vld [vmem:[%s3770 + $0x60] sm:$0xe]
        %v4185 = vld [vmem:[%s3770 + $0x64] sm:$0xf]
        %v4186 = vld [vmem:[%s3770 + $0x68] sm:$0x1]
        %v4187 = vld [vmem:[%s3770 + $0x6c] sm:$0xe]
        %v4188 = vld [vmem:[%s3770 + $0x70] sm:$0xf]
        %v4189 = vld [vmem:[%s3770 + $0x74] sm:$0x1]
        %v4190 = vld [vmem:[%s3770 + $0x78] sm:$0xe]
        %v4191 = vld [vmem:[%s3770 + $0x7c] sm:$0xf]
        %v4192 = vld [vmem:[%s3770 + $0x80] sm:$0x1]
        %v4193 = vld [vmem:[%s3770 + $0x84] sm:$0xe]
        %v4194 = vld [vmem:[%s3770 + $0x88] sm:$0xf]
        %v4195 = vld [vmem:[%s3770 + $0x8c] sm:$0x1]
        %v4196 = vld [vmem:[%s3770 + $0x90] sm:$0xe]
        %v4197 = vld [vmem:[%s3770 + $0x94] sm:$0xf]
        %v4198 = vld [vmem:[%s3770 + $0x98] sm:$0x1]
        %v4199 = vld [vmem:[%s3770 + $0x9c] sm:$0xe]
        %v4200 = vld [vmem:[%s3770 + $0xa0] sm:$0xf]
        %v4201 = vld [vmem:[%s3770 + $0xa4] sm:$0x1]
        %v4202 = vld [vmem:[%s3770 + $0xa8] sm:$0xe]
        %v4203 = vld [vmem:[%s3770 + $0xac] sm:$0xf]
        %v4204 = vld [vmem:[%s3770 + $0xb0] sm:$0x1]
        %v4205 = vld [vmem:[%s3770 + $0xb4] sm:$0xe]
        %v4206 = vld [vmem:[%s3770 + $0xb8] sm:$0xf]
        %v4207 = vld [vmem:[%s3770 + $0xbc] sm:$0x1]
        %v4256 = vrot.slane %v4160, 5
        %v4257 = vrot.slane %v4256, 4
        %v4258 = vrot.slane %v4161, 5
        %v4259 = vsel %vm1148, %v4257, %v4258
        %v4260 = vrot.slane %v4258, 4
        %v4261 = vrot.slane %v4162, 5
        %v4262 = vsel %vm1148, %v4260, %v4261
        %v4263 = vrot.slane %v4163, 5
        %v4264 = vrot.slane %v4263, 4
        %v4265 = vrot.slane %v4164, 5
        %v4266 = vsel %vm1148, %v4264, %v4265
        %v4267 = vrot.slane %v4265, 4
        %v4268 = vrot.slane %v4165, 5
        %v4269 = vsel %vm1148, %v4267, %v4268
        %v4270 = vrot.slane %v4166, 5
        %v4271 = vrot.slane %v4270, 4
        %v4272 = vrot.slane %v4167, 5
        %v4273 = vsel %vm1148, %v4271, %v4272
        %v4274 = vrot.slane %v4272, 4
        %v4275 = vrot.slane %v4168, 5
        %v4276 = vsel %vm1148, %v4274, %v4275
        %v4277 = vrot.slane %v4169, 5
        %v4278 = vrot.slane %v4277, 4
        %v4279 = vrot.slane %v4170, 5
        %v4280 = vsel %vm1148, %v4278, %v4279
        %v4281 = vrot.slane %v4279, 4
        %v4282 = vrot.slane %v4171, 5
        %v4283 = vsel %vm1148, %v4281, %v4282
        %v4284 = vrot.slane %v4172, 5
        %v4285 = vrot.slane %v4284, 4
        %v4286 = vrot.slane %v4173, 5
        %v4287 = vsel %vm1148, %v4285, %v4286
        %v4288 = vrot.slane %v4286, 4
        %v4289 = vrot.slane %v4174, 5
        %v4290 = vsel %vm1148, %v4288, %v4289
        %v4291 = vrot.slane %v4175, 5
        %v4292 = vrot.slane %v4291, 4
        %v4293 = vrot.slane %v4176, 5
        %v4294 = vsel %vm1148, %v4292, %v4293
        %v4295 = vrot.slane %v4293, 4
        %v4296 = vrot.slane %v4177, 5
        %v4297 = vsel %vm1148, %v4295, %v4296
        %v4298 = vrot.slane %v4178, 5
        %v4299 = vrot.slane %v4298, 4
        %v4300 = vrot.slane %v4179, 5
        %v4301 = vsel %vm1148, %v4299, %v4300
        %v4302 = vrot.slane %v4300, 4
        %v4303 = vrot.slane %v4180, 5
        %v4304 = vsel %vm1148, %v4302, %v4303
        %v4305 = vrot.slane %v4181, 5
        %v4306 = vrot.slane %v4305, 4
        %v4307 = vrot.slane %v4182, 5
        %v4308 = vsel %vm1148, %v4306, %v4307
        %v4309 = vrot.slane %v4307, 4
        %v4310 = vrot.slane %v4183, 5
        %v4311 = vsel %vm1148, %v4309, %v4310
        %v4312 = vrot.slane %v4184, 5
        %v4313 = vrot.slane %v4312, 4
        %v4314 = vrot.slane %v4185, 5
        %v4315 = vsel %vm1148, %v4313, %v4314
        %v4316 = vrot.slane %v4314, 4
        %v4317 = vrot.slane %v4186, 5
        %v4318 = vsel %vm1148, %v4316, %v4317
        %v4319 = vrot.slane %v4187, 5
        %v4320 = vrot.slane %v4319, 4
        %v4321 = vrot.slane %v4188, 5
        %v4322 = vsel %vm1148, %v4320, %v4321
        %v4323 = vrot.slane %v4321, 4
        %v4324 = vrot.slane %v4189, 5
        %v4325 = vsel %vm1148, %v4323, %v4324
        %v4326 = vrot.slane %v4190, 5
        %v4327 = vrot.slane %v4326, 4
        %v4328 = vrot.slane %v4191, 5
        %v4329 = vsel %vm1148, %v4327, %v4328
        %v4330 = vrot.slane %v4328, 4
        %v4331 = vrot.slane %v4192, 5
        %v4332 = vsel %vm1148, %v4330, %v4331
        %v4333 = vrot.slane %v4193, 5
        %v4334 = vrot.slane %v4333, 4
        %v4335 = vrot.slane %v4194, 5
        %v4336 = vsel %vm1148, %v4334, %v4335
        %v4337 = vrot.slane %v4335, 4
        %v4338 = vrot.slane %v4195, 5
        %v4339 = vsel %vm1148, %v4337, %v4338
        %v4340 = vrot.slane %v4196, 5
        %v4341 = vrot.slane %v4340, 4
        %v4342 = vrot.slane %v4197, 5
        %v4343 = vsel %vm1148, %v4341, %v4342
        %v4344 = vrot.slane %v4342, 4
        %v4345 = vrot.slane %v4198, 5
        %v4346 = vsel %vm1148, %v4344, %v4345
        %v4347 = vrot.slane %v4199, 5
        %v4348 = vrot.slane %v4347, 4
        %v4349 = vrot.slane %v4200, 5
        %v4350 = vsel %vm1148, %v4348, %v4349
        %v4351 = vrot.slane %v4349, 4
        %v4352 = vrot.slane %v4201, 5
        %v4353 = vsel %vm1148, %v4351, %v4352
        %v4354 = vrot.slane %v4202, 5
        %v4355 = vrot.slane %v4354, 4
        %v4356 = vrot.slane %v4203, 5
        %v4357 = vsel %vm1148, %v4355, %v4356
        %v4358 = vrot.slane %v4356, 4
        %v4359 = vrot.slane %v4204, 5
        %v4360 = vsel %vm1148, %v4358, %v4359
        %v4361 = vrot.slane %v4205, 5
        %v4362 = vrot.slane %v4361, 4
        %v4363 = vrot.slane %v4206, 5
        %v4364 = vsel %vm1148, %v4362, %v4363
        %v4365 = vrot.slane %v4363, 4
        %v4366 = vrot.slane %v4207, 5
        %v4367 = vsel %vm1148, %v4365, %v4366
        %s4368 = sadd.s32 %s1046, 7
        %s4369 = smul.u32 %s4368, 16
        %s4370 = smul.addr %s4369, 4
        %s4371 = scalar_lea.vmem [#allocation9], %s4370
        %v4372 = vld [vmem:[%s4371] sm:$0xf]
        %v4373 = vld [vmem:[%s4371 + $0x4] sm:$0xf]
        %v4374 = vld [vmem:[%s4371 + $0x8] sm:$0xf]
        %v4375 = vld [vmem:[%s4371 + $0xc] sm:$0xf]
        %v4376 = vld [vmem:[%s4371 + $0x10] sm:$0xf]
        %v4377 = vld [vmem:[%s4371 + $0x14] sm:$0xf]
        %v4378 = vld [vmem:[%s4371 + $0x18] sm:$0xf]
        %v4379 = vld [vmem:[%s4371 + $0x1c] sm:$0xf]
        %v4380 = vld [vmem:[%s4371 + $0x20] sm:$0xf]
        %v4381 = vld [vmem:[%s4371 + $0x24] sm:$0xf]
        %v4382 = vld [vmem:[%s4371 + $0x28] sm:$0xf]
        %v4383 = vld [vmem:[%s4371 + $0x2c] sm:$0xf]
        %v4384 = vld [vmem:[%s4371 + $0x30] sm:$0xf]
        %v4385 = vld [vmem:[%s4371 + $0x34] sm:$0xf]
        %v4386 = vld [vmem:[%s4371 + $0x38] sm:$0xf]
        %v4387 = vld [vmem:[%s4371 + $0x3c] sm:$0xf]
        %v4388 = vunpack.c.l.b16 %v4259
        %v4389 = vunpack.c.l.b16 %v4262
        %v4390 = vunpack.c.l.b16 %v4266
        %v4391 = vunpack.c.l.b16 %v4269
        %v4392 = vunpack.c.l.b16 %v4273
        %v4393 = vunpack.c.l.b16 %v4276
        %v4394 = vunpack.c.l.b16 %v4280
        %v4395 = vunpack.c.l.b16 %v4283
        %v4396 = vunpack.c.l.b16 %v4287
        %v4397 = vunpack.c.l.b16 %v4290
        %v4398 = vunpack.c.l.b16 %v4294
        %v4399 = vunpack.c.l.b16 %v4297
        %v4400 = vunpack.c.l.b16 %v4301
        %v4401 = vunpack.c.l.b16 %v4304
        %v4402 = vunpack.c.l.b16 %v4308
        %v4403 = vunpack.c.l.b16 %v4311
        %v4404 = vunpack.c.l.b16 %v4315
        %v4405 = vunpack.c.l.b16 %v4318
        %v4406 = vunpack.c.l.b16 %v4322
        %v4407 = vunpack.c.l.b16 %v4325
        %v4408 = vunpack.c.l.b16 %v4329
        %v4409 = vunpack.c.l.b16 %v4332
        %v4410 = vunpack.c.l.b16 %v4336
        %v4411 = vunpack.c.l.b16 %v4339
        %v4412 = vunpack.c.l.b16 %v4343
        %v4413 = vunpack.c.l.b16 %v4346
        %v4414 = vunpack.c.l.b16 %v4350
        %v4415 = vunpack.c.l.b16 %v4353
        %v4416 = vunpack.c.l.b16 %v4357
        %v4417 = vunpack.c.l.b16 %v4360
        %v4418 = vunpack.c.l.b16 %v4364
        %v4419 = vunpack.c.l.b16 %v4367
        %v4420 = vpack.c.b16 %v4389, %v4388
        %v4421 = vpack.c.b16 %v4391, %v4390
        %v4422 = vpack.c.b16 %v4393, %v4392
        %v4423 = vpack.c.b16 %v4395, %v4394
        %v4424 = vpack.c.b16 %v4397, %v4396
        %v4425 = vpack.c.b16 %v4399, %v4398
        %v4426 = vpack.c.b16 %v4401, %v4400
        %v4427 = vpack.c.b16 %v4403, %v4402
        %v4428 = vpack.c.b16 %v4405, %v4404
        %v4429 = vpack.c.b16 %v4407, %v4406
        %v4430 = vpack.c.b16 %v4409, %v4408
        %v4431 = vpack.c.b16 %v4411, %v4410
        %v4432 = vpack.c.b16 %v4413, %v4412
        %v4433 = vpack.c.b16 %v4415, %v4414
        %v4434 = vpack.c.b16 %v4417, %v4416
        %v4435 = vpack.c.b16 %v4419, %v4418
        %v4468 = vunpack.c.l.b16 %v4372
        %v4469 = vunpack.c.l.b16 %v4373
        %v4470 = vunpack.c.l.b16 %v4374
        %v4471 = vunpack.c.l.b16 %v4375
        %v4472 = vunpack.c.l.b16 %v4376
        %v4473 = vunpack.c.l.b16 %v4377
        %v4474 = vunpack.c.l.b16 %v4378
        %v4475 = vunpack.c.l.b16 %v4379
        %v4476 = vunpack.c.l.b16 %v4380
        %v4477 = vunpack.c.l.b16 %v4381
        %v4478 = vunpack.c.l.b16 %v4382
        %v4479 = vunpack.c.l.b16 %v4383
        %v4480 = vunpack.c.l.b16 %v4384
        %v4481 = vunpack.c.l.b16 %v4385
        %v4482 = vunpack.c.l.b16 %v4386
        %v4483 = vunpack.c.l.b16 %v4387
        %v4484 = vpack.c.b16 %v4469, %v4468
        %v4485 = vpack.c.b16 %v4471, %v4470
        %v4486 = vpack.c.b16 %v4473, %v4472
        %v4487 = vpack.c.b16 %v4475, %v4474
        %v4488 = vpack.c.b16 %v4477, %v4476
        %v4489 = vpack.c.b16 %v4479, %v4478
        %v4490 = vpack.c.b16 %v4481, %v4480
        %v4491 = vpack.c.b16 %v4483, %v4482
        %4500 = vmatprep.subr.bf16.mxu0 0
        %4501 = vmatpush1.bf16.msra.mxu0 %v4484
        %4502 = vmatprep.subr.bf16.mxu0 0
        %4503 = vmatpush1.bf16.msra.mxu0 %v4485
        %4504 = vmatprep.subr.bf16.mxu0 0
        %4505 = vmatpush1.bf16.msra.mxu0 %v4486
        %4506 = vmatprep.subr.bf16.mxu0 0
        %4507 = vmatpush1.bf16.msra.mxu0 %v4487
        %4508 = vmatprep.subr.bf16.mxu0 0
        %4509 = vmatpush1.bf16.msra.mxu0 %v4488
        %4510 = vmatprep.subr.bf16.mxu0 0
        %4511 = vmatpush1.bf16.msra.mxu0 %v4489
        %4512 = vmatprep.subr.bf16.mxu0 0
        %4513 = vmatpush1.bf16.msra.mxu0 %v4490
        %4514 = vmatprep.subr.bf16.mxu0 0
        %4515 = vmatpush1.bf16.msra.mxu0 %v4491
        %4516 = vmatprep.subr.bf16.mxu0 0
        %4517 = vmatpush1.bf16.msra.mxu0 0
        %4518 = vmatprep.subr.bf16.mxu0 0
        %4519 = vmatpush1.bf16.msra.mxu0 0
        %4520 = vmatprep.subr.bf16.mxu0 0
        %4521 = vmatpush1.bf16.msra.mxu0 0
        %4522 = vmatprep.subr.bf16.mxu0 0
        %4523 = vmatpush1.bf16.msra.mxu0 0
        %4524 = vmatprep.subr.bf16.mxu0 0
        %4525 = vmatpush1.bf16.msra.mxu0 0
        %4526 = vmatprep.subr.bf16.mxu0 0
        %4527 = vmatpush1.bf16.msra.mxu0 0
        %4528 = vmatprep.subr.bf16.mxu0 0
        %4529 = vmatpush1.bf16.msra.mxu0 0
        %4530 = vmatprep.subr.bf16.mxu0 0
        %4531 = vmatpush1.bf16.msra.mxu0 0
        %4532 = vmatprep.mubr.bf16.mxu0 0
        %4533 = vmatmul.mubr.bf16.gmra.mrb[0].mxu0 %v4420
        %v4534 = vpop.f32.mrb[0].mxu0
        %v4535 = vadd.f32 0.0, %v4534
        %v4536 = vpop.f32.mrb[0].mxu0
        %v4537 = vpop.f32.mrb[0].mxu0
        %v4538 = vadd.f32 0.0, %v4537
        %v4539 = vpop.f32.mrb[0].mxu0
        %4540 = vmatprep.mubr.bf16.mxu0 0
        %4541 = vmatmul.mubr.bf16.gmra.mrb[0].mxu0 %v4421
        %v4542 = vpop.f32.mrb[0].mxu0
        %v4543 = vadd.f32 0.0, %v4542
        %v4544 = vpop.f32.mrb[0].mxu0
        %v4545 = vpop.f32.mrb[0].mxu0
        %v4546 = vadd.f32 0.0, %v4545
        %v4547 = vpop.f32.mrb[0].mxu0
        %4548 = vmatprep.mubr.bf16.mxu0 0
        %4549 = vmatmul.mubr.bf16.gmra.mrb[0].mxu0 %v4422
        %v4550 = vpop.f32.mrb[0].mxu0
        %v4551 = vadd.f32 0.0, %v4550
        %v4552 = vpop.f32.mrb[0].mxu0
        %v4553 = vpop.f32.mrb[0].mxu0
        %v4554 = vadd.f32 0.0, %v4553
        %v4555 = vpop.f32.mrb[0].mxu0
        %4556 = vmatprep.mubr.bf16.mxu0 0
        %4557 = vmatmul.mubr.bf16.gmra.mrb[0].mxu0 %v4423
        %v4558 = vpop.f32.mrb[0].mxu0
        %v4559 = vadd.f32 0.0, %v4558
        %v4560 = vpop.f32.mrb[0].mxu0
        %v4561 = vpop.f32.mrb[0].mxu0
        %v4562 = vadd.f32 0.0, %v4561
        %v4563 = vpop.f32.mrb[0].mxu0
        %4564 = vmatprep.mubr.bf16.mxu0 0
        %4565 = vmatmul.mubr.bf16.gmra.mrb[0].mxu0 %v4424
        %v4566 = vpop.f32.mrb[0].mxu0
        %v4567 = vadd.f32 0.0, %v4566
        %v4568 = vpop.f32.mrb[0].mxu0
        %v4569 = vpop.f32.mrb[0].mxu0
        %v4570 = vadd.f32 0.0, %v4569
        %v4571 = vpop.f32.mrb[0].mxu0
        %4572 = vmatprep.mubr.bf16.mxu0 0
        %4573 = vmatmul.mubr.bf16.gmra.mrb[0].mxu0 %v4425
        %v4574 = vpop.f32.mrb[0].mxu0
        %v4575 = vadd.f32 0.0, %v4574
        %v4576 = vpop.f32.mrb[0].mxu0
        %v4577 = vpop.f32.mrb[0].mxu0
        %v4578 = vadd.f32 0.0, %v4577
        %v4579 = vpop.f32.mrb[0].mxu0
        %4580 = vmatprep.mubr.bf16.mxu0 0
        %4581 = vmatmul.mubr.bf16.gmra.mrb[0].mxu0 %v4426
        %v4582 = vpop.f32.mrb[0].mxu0
        %v4583 = vadd.f32 0.0, %v4582
        %v4584 = vpop.f32.mrb[0].mxu0
        %v4585 = vpop.f32.mrb[0].mxu0
        %v4586 = vadd.f32 0.0, %v4585
        %v4587 = vpop.f32.mrb[0].mxu0
        %4588 = vmatprep.mubr.bf16.mxu0 0
        %4589 = vmatmul.mubr.bf16.gmra.mrb[0].mxu0 %v4427
        %v4590 = vpop.f32.mrb[0].mxu0
        %v4591 = vadd.f32 0.0, %v4590
        %v4592 = vpop.f32.mrb[0].mxu0
        %v4593 = vpop.f32.mrb[0].mxu0
        %v4594 = vadd.f32 0.0, %v4593
        %v4595 = vpop.f32.mrb[0].mxu0
        %4596 = vmatprep.mubr.bf16.mxu0 0
        %4597 = vmatmul.mubr.bf16.gmra.mrb[0].mxu0 %v4428
        %v4598 = vpop.f32.mrb[0].mxu0
        %v4599 = vadd.f32 0.0, %v4598
        %v4600 = vpop.f32.mrb[0].mxu0
        %v4601 = vpop.f32.mrb[0].mxu0
        %v4602 = vadd.f32 0.0, %v4601
        %v4603 = vpop.f32.mrb[0].mxu0
        %4604 = vmatprep.mubr.bf16.mxu0 0
        %4605 = vmatmul.mubr.bf16.gmra.mrb[0].mxu0 %v4429
        %v4606 = vpop.f32.mrb[0].mxu0
        %v4607 = vadd.f32 0.0, %v4606
        %v4608 = vpop.f32.mrb[0].mxu0
        %v4609 = vpop.f32.mrb[0].mxu0
        %v4610 = vadd.f32 0.0, %v4609
        %v4611 = vpop.f32.mrb[0].mxu0
        %4612 = vmatprep.mubr.bf16.mxu0 0
        %4613 = vmatmul.mubr.bf16.gmra.mrb[0].mxu0 %v4430
        %v4614 = vpop.f32.mrb[0].mxu0
        %v4615 = vadd.f32 0.0, %v4614
        %v4616 = vpop.f32.mrb[0].mxu0
        %v4617 = vpop.f32.mrb[0].mxu0
        %v4618 = vadd.f32 0.0, %v4617
        %v4619 = vpop.f32.mrb[0].mxu0
        %4620 = vmatprep.mubr.bf16.mxu0 0
        %4621 = vmatmul.mubr.bf16.gmra.mrb[0].mxu0 %v4431
        %v4622 = vpop.f32.mrb[0].mxu0
        %v4623 = vadd.f32 0.0, %v4622
        %v4624 = vpop.f32.mrb[0].mxu0
        %v4625 = vpop.f32.mrb[0].mxu0
        %v4626 = vadd.f32 0.0, %v4625
        %v4627 = vpop.f32.mrb[0].mxu0
        %4628 = vmatprep.mubr.bf16.mxu0 0
        %4629 = vmatmul.mubr.bf16.gmra.mrb[0].mxu0 %v4432
        %v4630 = vpop.f32.mrb[0].mxu0
        %v4631 = vadd.f32 0.0, %v4630
        %v4632 = vpop.f32.mrb[0].mxu0
        %v4633 = vpop.f32.mrb[0].mxu0
        %v4634 = vadd.f32 0.0, %v4633
        %v4635 = vpop.f32.mrb[0].mxu0
        %4636 = vmatprep.mubr.bf16.mxu0 0
        %4637 = vmatmul.mubr.bf16.gmra.mrb[0].mxu0 %v4433
        %v4638 = vpop.f32.mrb[0].mxu0
        %v4639 = vadd.f32 0.0, %v4638
        %v4640 = vpop.f32.mrb[0].mxu0
        %v4641 = vpop.f32.mrb[0].mxu0
        %v4642 = vadd.f32 0.0, %v4641
        %v4643 = vpop.f32.mrb[0].mxu0
        %4644 = vmatprep.mubr.bf16.mxu0 0
        %4645 = vmatmul.mubr.bf16.gmra.mrb[0].mxu0 %v4434
        %v4646 = vpop.f32.mrb[0].mxu0
        %v4647 = vadd.f32 0.0, %v4646
        %v4648 = vpop.f32.mrb[0].mxu0
        %v4649 = vpop.f32.mrb[0].mxu0
        %v4650 = vadd.f32 0.0, %v4649
        %v4651 = vpop.f32.mrb[0].mxu0
        %4652 = vmatprep.mubr.bf16.mxu0 0
        %4653 = vmatmul.mubr.bf16.gmra.mrb[0].mxu0 %v4435
        %v4654 = vpop.f32.mrb[0].mxu0
        %v4655 = vadd.f32 0.0, %v4654
        %v4656 = vpop.f32.mrb[0].mxu0
        %v4657 = vpop.f32.mrb[0].mxu0
        %v4658 = vadd.f32 0.0, %v4657
        %v4659 = vpop.f32.mrb[0].mxu0
        %4660 = vdwg.mxu0
        %v4661 = vadd.f32 %v4128, %v4535
        %v4662 = vadd.f32 %v4129, %v4538
        %v4663 = vadd.f32 %v4130, %v4543
        %v4664 = vadd.f32 %v4131, %v4546
        %v4665 = vadd.f32 %v4132, %v4551
        %v4666 = vadd.f32 %v4133, %v4554
        %v4667 = vadd.f32 %v4134, %v4559
        %v4668 = vadd.f32 %v4135, %v4562
        %v4669 = vadd.f32 %v4136, %v4567
        %v4670 = vadd.f32 %v4137, %v4570
        %v4671 = vadd.f32 %v4138, %v4575
        %v4672 = vadd.f32 %v4139, %v4578
        %v4673 = vadd.f32 %v4140, %v4583
        %v4674 = vadd.f32 %v4141, %v4586
        %v4675 = vadd.f32 %v4142, %v4591
        %v4676 = vadd.f32 %v4143, %v4594
        %v4677 = vadd.f32 %v4144, %v4599
        %v4678 = vadd.f32 %v4145, %v4602
        %v4679 = vadd.f32 %v4146, %v4607
        %v4680 = vadd.f32 %v4147, %v4610
        %v4681 = vadd.f32 %v4148, %v4615
        %v4682 = vadd.f32 %v4149, %v4618
        %v4683 = vadd.f32 %v4150, %v4623
        %v4684 = vadd.f32 %v4151, %v4626
        %v4685 = vadd.f32 %v4152, %v4631
        %v4686 = vadd.f32 %v4153, %v4634
        %v4687 = vadd.f32 %v4154, %v4639
        %v4688 = vadd.f32 %v4155, %v4642
        %v4689 = vadd.f32 %v4156, %v4647
        %v4690 = vadd.f32 %v4157, %v4650
        %v4691 = vadd.f32 %v4158, %v4655
        %v4692 = vadd.f32 %v4159, %v4658
        %v4693 = vld [vmem:[%s3770] sm:$0xc]
        %v4694 = vld [vmem:[%s3770 + $0x8] sm:$0x3]
        %v4695 = vld [vmem:[%s3770 + $0xc] sm:$0xc]
        %v4696 = vld [vmem:[%s3770 + $0x14] sm:$0x3]
        %v4697 = vld [vmem:[%s3770 + $0x18] sm:$0xc]
        %v4698 = vld [vmem:[%s3770 + $0x20] sm:$0x3]
        %v4699 = vld [vmem:[%s3770 + $0x24] sm:$0xc]
        %v4700 = vld [vmem:[%s3770 + $0x2c] sm:$0x3]
        %v4701 = vld [vmem:[%s3770 + $0x30] sm:$0xc]
        %v4702 = vld [vmem:[%s3770 + $0x38] sm:$0x3]
        %v4703 = vld [vmem:[%s3770 + $0x3c] sm:$0xc]
        %v4704 = vld [vmem:[%s3770 + $0x44] sm:$0x3]
        %v4705 = vld [vmem:[%s3770 + $0x48] sm:$0xc]
        %v4706 = vld [vmem:[%s3770 + $0x50] sm:$0x3]
        %v4707 = vld [vmem:[%s3770 + $0x54] sm:$0xc]
        %v4708 = vld [vmem:[%s3770 + $0x5c] sm:$0x3]
        %v4709 = vld [vmem:[%s3770 + $0x60] sm:$0xc]
        %v4710 = vld [vmem:[%s3770 + $0x68] sm:$0x3]
        %v4711 = vld [vmem:[%s3770 + $0x6c] sm:$0xc]
        %v4712 = vld [vmem:[%s3770 + $0x74] sm:$0x3]
        %v4713 = vld [vmem:[%s3770 + $0x78] sm:$0xc]
        %v4714 = vld [vmem:[%s3770 + $0x80] sm:$0x3]
        %v4715 = vld [vmem:[%s3770 + $0x84] sm:$0xc]
        %v4716 = vld [vmem:[%s3770 + $0x8c] sm:$0x3]
        %v4717 = vld [vmem:[%s3770 + $0x90] sm:$0xc]
        %v4718 = vld [vmem:[%s3770 + $0x98] sm:$0x3]
        %v4719 = vld [vmem:[%s3770 + $0x9c] sm:$0xc]
        %v4720 = vld [vmem:[%s3770 + $0xa4] sm:$0x3]
        %v4721 = vld [vmem:[%s3770 + $0xa8] sm:$0xc]
        %v4722 = vld [vmem:[%s3770 + $0xb0] sm:$0x3]
        %v4723 = vld [vmem:[%s3770 + $0xb4] sm:$0xc]
        %v4724 = vld [vmem:[%s3770 + $0xbc] sm:$0x3]
        %v4757 = vrot.slane %v4693, 6
        %v4758 = vrot.slane %v4757, 4
        %v4759 = vrot.slane %v4161, 6
        %v4760 = vsel %vm1909, %v4758, %v4759
        %v4761 = vrot.slane %v4759, 4
        %v4762 = vrot.slane %v4694, 6
        %v4763 = vsel %vm1909, %v4761, %v4762
        %v4764 = vrot.slane %v4695, 6
        %v4765 = vrot.slane %v4764, 4
        %v4766 = vrot.slane %v4164, 6
        %v4767 = vsel %vm1909, %v4765, %v4766
        %v4768 = vrot.slane %v4766, 4
        %v4769 = vrot.slane %v4696, 6
        %v4770 = vsel %vm1909, %v4768, %v4769
        %v4771 = vrot.slane %v4697, 6
        %v4772 = vrot.slane %v4771, 4
        %v4773 = vrot.slane %v4167, 6
        %v4774 = vsel %vm1909, %v4772, %v4773
        %v4775 = vrot.slane %v4773, 4
        %v4776 = vrot.slane %v4698, 6
        %v4777 = vsel %vm1909, %v4775, %v4776
        %v4778 = vrot.slane %v4699, 6
        %v4779 = vrot.slane %v4778, 4
        %v4780 = vrot.slane %v4170, 6
        %v4781 = vsel %vm1909, %v4779, %v4780
        %v4782 = vrot.slane %v4780, 4
        %v4783 = vrot.slane %v4700, 6
        %v4784 = vsel %vm1909, %v4782, %v4783
        %v4785 = vrot.slane %v4701, 6
        %v4786 = vrot.slane %v4785, 4
        %v4787 = vrot.slane %v4173, 6
        %v4788 = vsel %vm1909, %v4786, %v4787
        %v4789 = vrot.slane %v4787, 4
        %v4790 = vrot.slane %v4702, 6
        %v4791 = vsel %vm1909, %v4789, %v4790
        %v4792 = vrot.slane %v4703, 6
        %v4793 = vrot.slane %v4792, 4
        %v4794 = vrot.slane %v4176, 6
        %v4795 = vsel %vm1909, %v4793, %v4794
        %v4796 = vrot.slane %v4794, 4
        %v4797 = vrot.slane %v4704, 6
        %v4798 = vsel %vm1909, %v4796, %v4797
        %v4799 = vrot.slane %v4705, 6
        %v4800 = vrot.slane %v4799, 4
        %v4801 = vrot.slane %v4179, 6
        %v4802 = vsel %vm1909, %v4800, %v4801
        %v4803 = vrot.slane %v4801, 4
        %v4804 = vrot.slane %v4706, 6
        %v4805 = vsel %vm1909, %v4803, %v4804
        %v4806 = vrot.slane %v4707, 6
        %v4807 = vrot.slane %v4806, 4
        %v4808 = vrot.slane %v4182, 6
        %v4809 = vsel %vm1909, %v4807, %v4808
        %v4810 = vrot.slane %v4808, 4
        %v4811 = vrot.slane %v4708, 6
        %v4812 = vsel %vm1909, %v4810, %v4811
        %v4813 = vrot.slane %v4709, 6
        %v4814 = vrot.slane %v4813, 4
        %v4815 = vrot.slane %v4185, 6
        %v4816 = vsel %vm1909, %v4814, %v4815
        %v4817 = vrot.slane %v4815, 4
        %v4818 = vrot.slane %v4710, 6
        %v4819 = vsel %vm1909, %v4817, %v4818
        %v4820 = vrot.slane %v4711, 6
        %v4821 = vrot.slane %v4820, 4
        %v4822 = vrot.slane %v4188, 6
        %v4823 = vsel %vm1909, %v4821, %v4822
        %v4824 = vrot.slane %v4822, 4
        %v4825 = vrot.slane %v4712, 6
        %v4826 = vsel %vm1909, %v4824, %v4825
        %v4827 = vrot.slane %v4713, 6
        %v4828 = vrot.slane %v4827, 4
        %v4829 = vrot.slane %v4191, 6
        %v4830 = vsel %vm1909, %v4828, %v4829
        %v4831 = vrot.slane %v4829, 4
        %v4832 = vrot.slane %v4714, 6
        %v4833 = vsel %vm1909, %v4831, %v4832
        %v4834 = vrot.slane %v4715, 6
        %v4835 = vrot.slane %v4834, 4
        %v4836 = vrot.slane %v4194, 6
        %v4837 = vsel %vm1909, %v4835, %v4836
        %v4838 = vrot.slane %v4836, 4
        %v4839 = vrot.slane %v4716, 6
        %v4840 = vsel %vm1909, %v4838, %v4839
        %v4841 = vrot.slane %v4717, 6
        %v4842 = vrot.slane %v4841, 4
        %v4843 = vrot.slane %v4197, 6
        %v4844 = vsel %vm1909, %v4842, %v4843
        %v4845 = vrot.slane %v4843, 4
        %v4846 = vrot.slane %v4718, 6
        %v4847 = vsel %vm1909, %v4845, %v4846
        %v4848 = vrot.slane %v4719, 6
        %v4849 = vrot.slane %v4848, 4
        %v4850 = vrot.slane %v4200, 6
        %v4851 = vsel %vm1909, %v4849, %v4850
        %v4852 = vrot.slane %v4850, 4
        %v4853 = vrot.slane %v4720, 6
        %v4854 = vsel %vm1909, %v4852, %v4853
        %v4855 = vrot.slane %v4721, 6
        %v4856 = vrot.slane %v4855, 4
        %v4857 = vrot.slane %v4203, 6
        %v4858 = vsel %vm1909, %v4856, %v4857
        %v4859 = vrot.slane %v4857, 4
        %v4860 = vrot.slane %v4722, 6
        %v4861 = vsel %vm1909, %v4859, %v4860
        %v4862 = vrot.slane %v4723, 6
        %v4863 = vrot.slane %v4862, 4
        %v4864 = vrot.slane %v4206, 6
        %v4865 = vsel %vm1909, %v4863, %v4864
        %v4866 = vrot.slane %v4864, 4
        %v4867 = vrot.slane %v4724, 6
        %v4868 = vsel %vm1909, %v4866, %v4867
        %s4869 = sadd.s32 %s1046, 8
        %s4870 = smul.u32 %s4869, 16
        %s4871 = smul.addr %s4870, 4
        %s4872 = scalar_lea.vmem [#allocation9], %s4871
        %v4873 = vld [vmem:[%s4872] sm:$0xf]
        %v4874 = vld [vmem:[%s4872 + $0x4] sm:$0xf]
        %v4875 = vld [vmem:[%s4872 + $0x8] sm:$0xf]
        %v4876 = vld [vmem:[%s4872 + $0xc] sm:$0xf]
        %v4877 = vld [vmem:[%s4872 + $0x10] sm:$0xf]
        %v4878 = vld [vmem:[%s4872 + $0x14] sm:$0xf]
        %v4879 = vld [vmem:[%s4872 + $0x18] sm:$0xf]
        %v4880 = vld [vmem:[%s4872 + $0x1c] sm:$0xf]
        %v4881 = vld [vmem:[%s4872 + $0x20] sm:$0xf]
        %v4882 = vld [vmem:[%s4872 + $0x24] sm:$0xf]
        %v4883 = vld [vmem:[%s4872 + $0x28] sm:$0xf]
        %v4884 = vld [vmem:[%s4872 + $0x2c] sm:$0xf]
        %v4885 = vld [vmem:[%s4872 + $0x30] sm:$0xf]
        %v4886 = vld [vmem:[%s4872 + $0x34] sm:$0xf]
        %v4887 = vld [vmem:[%s4872 + $0x38] sm:$0xf]
        %v4888 = vld [vmem:[%s4872 + $0x3c] sm:$0xf]
        %v4889 = vunpack.c.l.b16 %v4760
        %v4890 = vunpack.c.l.b16 %v4763
        %v4891 = vunpack.c.l.b16 %v4767
        %v4892 = vunpack.c.l.b16 %v4770
        %v4893 = vunpack.c.l.b16 %v4774
        %v4894 = vunpack.c.l.b16 %v4777
        %v4895 = vunpack.c.l.b16 %v4781
        %v4896 = vunpack.c.l.b16 %v4784
        %v4897 = vunpack.c.l.b16 %v4788
        %v4898 = vunpack.c.l.b16 %v4791
        %v4899 = vunpack.c.l.b16 %v4795
        %v4900 = vunpack.c.l.b16 %v4798
        %v4901 = vunpack.c.l.b16 %v4802
        %v4902 = vunpack.c.l.b16 %v4805
        %v4903 = vunpack.c.l.b16 %v4809
        %v4904 = vunpack.c.l.b16 %v4812
        %v4905 = vunpack.c.l.b16 %v4816
        %v4906 = vunpack.c.l.b16 %v4819
        %v4907 = vunpack.c.l.b16 %v4823
        %v4908 = vunpack.c.l.b16 %v4826
        %v4909 = vunpack.c.l.b16 %v4830
        %v4910 = vunpack.c.l.b16 %v4833
        %v4911 = vunpack.c.l.b16 %v4837
        %v4912 = vunpack.c.l.b16 %v4840
        %v4913 = vunpack.c.l.b16 %v4844
        %v4914 = vunpack.c.l.b16 %v4847
        %v4915 = vunpack.c.l.b16 %v4851
        %v4916 = vunpack.c.l.b16 %v4854
        %v4917 = vunpack.c.l.b16 %v4858
        %v4918 = vunpack.c.l.b16 %v4861
        %v4919 = vunpack.c.l.b16 %v4865
        %v4920 = vunpack.c.l.b16 %v4868
        %v4921 = vpack.c.b16 %v4890, %v4889
        %v4922 = vpack.c.b16 %v4892, %v4891
        %v4923 = vpack.c.b16 %v4894, %v4893
        %v4924 = vpack.c.b16 %v4896, %v4895
        %v4925 = vpack.c.b16 %v4898, %v4897
        %v4926 = vpack.c.b16 %v4900, %v4899
        %v4927 = vpack.c.b16 %v4902, %v4901
        %v4928 = vpack.c.b16 %v4904, %v4903
        %v4929 = vpack.c.b16 %v4906, %v4905
        %v4930 = vpack.c.b16 %v4908, %v4907
        %v4931 = vpack.c.b16 %v4910, %v4909
        %v4932 = vpack.c.b16 %v4912, %v4911
        %v4933 = vpack.c.b16 %v4914, %v4913
        %v4934 = vpack.c.b16 %v4916, %v4915
        %v4935 = vpack.c.b16 %v4918, %v4917
        %v4936 = vpack.c.b16 %v4920, %v4919
        %v4969 = vunpack.c.l.b16 %v4873
        %v4970 = vunpack.c.l.b16 %v4874
        %v4971 = vunpack.c.l.b16 %v4875
        %v4972 = vunpack.c.l.b16 %v4876
        %v4973 = vunpack.c.l.b16 %v4877
        %v4974 = vunpack.c.l.b16 %v4878
        %v4975 = vunpack.c.l.b16 %v4879
        %v4976 = vunpack.c.l.b16 %v4880
        %v4977 = vunpack.c.l.b16 %v4881
        %v4978 = vunpack.c.l.b16 %v4882
        %v4979 = vunpack.c.l.b16 %v4883
        %v4980 = vunpack.c.l.b16 %v4884
        %v4981 = vunpack.c.l.b16 %v4885
        %v4982 = vunpack.c.l.b16 %v4886
        %v4983 = vunpack.c.l.b16 %v4887
        %v4984 = vunpack.c.l.b16 %v4888
        %v4985 = vpack.c.b16 %v4970, %v4969
        %v4986 = vpack.c.b16 %v4972, %v4971
        %v4987 = vpack.c.b16 %v4974, %v4973
        %v4988 = vpack.c.b16 %v4976, %v4975
        %v4989 = vpack.c.b16 %v4978, %v4977
        %v4990 = vpack.c.b16 %v4980, %v4979
        %v4991 = vpack.c.b16 %v4982, %v4981
        %v4992 = vpack.c.b16 %v4984, %v4983
        %5001 = vmatprep.subr.bf16.mxu0 0
        %5002 = vmatpush1.bf16.msra.mxu0 %v4985
        %5003 = vmatprep.subr.bf16.mxu0 0
        %5004 = vmatpush1.bf16.msra.mxu0 %v4986
        %5005 = vmatprep.subr.bf16.mxu0 0
        %5006 = vmatpush1.bf16.msra.mxu0 %v4987
        %5007 = vmatprep.subr.bf16.mxu0 0
        %5008 = vmatpush1.bf16.msra.mxu0 %v4988
        %5009 = vmatprep.subr.bf16.mxu0 0
        %5010 = vmatpush1.bf16.msra.mxu0 %v4989
        %5011 = vmatprep.subr.bf16.mxu0 0
        %5012 = vmatpush1.bf16.msra.mxu0 %v4990
        %5013 = vmatprep.subr.bf16.mxu0 0
        %5014 = vmatpush1.bf16.msra.mxu0 %v4991
        %5015 = vmatprep.subr.bf16.mxu0 0
        %5016 = vmatpush1.bf16.msra.mxu0 %v4992
        %5017 = vmatprep.subr.bf16.mxu0 0
        %5018 = vmatpush1.bf16.msra.mxu0 0
        %5019 = vmatprep.subr.bf16.mxu0 0
        %5020 = vmatpush1.bf16.msra.mxu0 0
        %5021 = vmatprep.subr.bf16.mxu0 0
        %5022 = vmatpush1.bf16.msra.mxu0 0
        %5023 = vmatprep.subr.bf16.mxu0 0
        %5024 = vmatpush1.bf16.msra.mxu0 0
        %5025 = vmatprep.subr.bf16.mxu0 0
        %5026 = vmatpush1.bf16.msra.mxu0 0
        %5027 = vmatprep.subr.bf16.mxu0 0
        %5028 = vmatpush1.bf16.msra.mxu0 0
        %5029 = vmatprep.subr.bf16.mxu0 0
        %5030 = vmatpush1.bf16.msra.mxu0 0
        %5031 = vmatprep.subr.bf16.mxu0 0
        %5032 = vmatpush1.bf16.msra.mxu0 0
        %5033 = vmatprep.mubr.bf16.mxu0 0
        %5034 = vmatmul.mubr.bf16.gmra.mrb[0].mxu0 %v4921
        %v5035 = vpop.f32.mrb[0].mxu0
        %v5036 = vadd.f32 0.0, %v5035
        %v5037 = vpop.f32.mrb[0].mxu0
        %v5038 = vpop.f32.mrb[0].mxu0
        %v5039 = vadd.f32 0.0, %v5038
        %v5040 = vpop.f32.mrb[0].mxu0
        %5041 = vmatprep.mubr.bf16.mxu0 0
        %5042 = vmatmul.mubr.bf16.gmra.mrb[0].mxu0 %v4922
        %v5043 = vpop.f32.mrb[0].mxu0
        %v5044 = vadd.f32 0.0, %v5043
        %v5045 = vpop.f32.mrb[0].mxu0
        %v5046 = vpop.f32.mrb[0].mxu0
        %v5047 = vadd.f32 0.0, %v5046
        %v5048 = vpop.f32.mrb[0].mxu0
        %5049 = vmatprep.mubr.bf16.mxu0 0
        %5050 = vmatmul.mubr.bf16.gmra.mrb[0].mxu0 %v4923
        %v5051 = vpop.f32.mrb[0].mxu0
        %v5052 = vadd.f32 0.0, %v5051
        %v5053 = vpop.f32.mrb[0].mxu0
        %v5054 = vpop.f32.mrb[0].mxu0
        %v5055 = vadd.f32 0.0, %v5054
        %v5056 = vpop.f32.mrb[0].mxu0
        %5057 = vmatprep.mubr.bf16.mxu0 0
        %5058 = vmatmul.mubr.bf16.gmra.mrb[0].mxu0 %v4924
        %v5059 = vpop.f32.mrb[0].mxu0
        %v5060 = vadd.f32 0.0, %v5059
        %v5061 = vpop.f32.mrb[0].mxu0
        %v5062 = vpop.f32.mrb[0].mxu0
        %v5063 = vadd.f32 0.0, %v5062
        %v5064 = vpop.f32.mrb[0].mxu0
        %5065 = vmatprep.mubr.bf16.mxu0 0
        %5066 = vmatmul.mubr.bf16.gmra.mrb[0].mxu0 %v4925
        %v5067 = vpop.f32.mrb[0].mxu0
        %v5068 = vadd.f32 0.0, %v5067
        %v5069 = vpop.f32.mrb[0].mxu0
        %v5070 = vpop.f32.mrb[0].mxu0
        %v5071 = vadd.f32 0.0, %v5070
        %v5072 = vpop.f32.mrb[0].mxu0
        %5073 = vmatprep.mubr.bf16.mxu0 0
        %5074 = vmatmul.mubr.bf16.gmra.mrb[0].mxu0 %v4926
        %v5075 = vpop.f32.mrb[0].mxu0
        %v5076 = vadd.f32 0.0, %v5075
        %v5077 = vpop.f32.mrb[0].mxu0
        %v5078 = vpop.f32.mrb[0].mxu0
        %v5079 = vadd.f32 0.0, %v5078
        %v5080 = vpop.f32.mrb[0].mxu0
        %5081 = vmatprep.mubr.bf16.mxu0 0
        %5082 = vmatmul.mubr.bf16.gmra.mrb[0].mxu0 %v4927
        %v5083 = vpop.f32.mrb[0].mxu0
        %v5084 = vadd.f32 0.0, %v5083
        %v5085 = vpop.f32.mrb[0].mxu0
        %v5086 = vpop.f32.mrb[0].mxu0
        %v5087 = vadd.f32 0.0, %v5086
        %v5088 = vpop.f32.mrb[0].mxu0
        %5089 = vmatprep.mubr.bf16.mxu0 0
        %5090 = vmatmul.mubr.bf16.gmra.mrb[0].mxu0 %v4928
        %v5091 = vpop.f32.mrb[0].mxu0
        %v5092 = vadd.f32 0.0, %v5091
        %v5093 = vpop.f32.mrb[0].mxu0
        %v5094 = vpop.f32.mrb[0].mxu0
        %v5095 = vadd.f32 0.0, %v5094
        %v5096 = vpop.f32.mrb[0].mxu0
        %5097 = vmatprep.mubr.bf16.mxu0 0
        %5098 = vmatmul.mubr.bf16.gmra.mrb[0].mxu0 %v4929
        %v5099 = vpop.f32.mrb[0].mxu0
        %v5100 = vadd.f32 0.0, %v5099
        %v5101 = vpop.f32.mrb[0].mxu0
        %v5102 = vpop.f32.mrb[0].mxu0
        %v5103 = vadd.f32 0.0, %v5102
        %v5104 = vpop.f32.mrb[0].mxu0
        %5105 = vmatprep.mubr.bf16.mxu0 0
        %5106 = vmatmul.mubr.bf16.gmra.mrb[0].mxu0 %v4930
        %v5107 = vpop.f32.mrb[0].mxu0
        %v5108 = vadd.f32 0.0, %v5107
        %v5109 = vpop.f32.mrb[0].mxu0
        %v5110 = vpop.f32.mrb[0].mxu0
        %v5111 = vadd.f32 0.0, %v5110
        %v5112 = vpop.f32.mrb[0].mxu0
        %5113 = vmatprep.mubr.bf16.mxu0 0
        %5114 = vmatmul.mubr.bf16.gmra.mrb[0].mxu0 %v4931
        %v5115 = vpop.f32.mrb[0].mxu0
        %v5116 = vadd.f32 0.0, %v5115
        %v5117 = vpop.f32.mrb[0].mxu0
        %v5118 = vpop.f32.mrb[0].mxu0
        %v5119 = vadd.f32 0.0, %v5118
        %v5120 = vpop.f32.mrb[0].mxu0
        %5121 = vmatprep.mubr.bf16.mxu0 0
        %5122 = vmatmul.mubr.bf16.gmra.mrb[0].mxu0 %v4932
        %v5123 = vpop.f32.mrb[0].mxu0
        %v5124 = vadd.f32 0.0, %v5123
        %v5125 = vpop.f32.mrb[0].mxu0
        %v5126 = vpop.f32.mrb[0].mxu0
        %v5127 = vadd.f32 0.0, %v5126
        %v5128 = vpop.f32.mrb[0].mxu0
        %5129 = vmatprep.mubr.bf16.mxu0 0
        %5130 = vmatmul.mubr.bf16.gmra.mrb[0].mxu0 %v4933
        %v5131 = vpop.f32.mrb[0].mxu0
        %v5132 = vadd.f32 0.0, %v5131
        %v5133 = vpop.f32.mrb[0].mxu0
        %v5134 = vpop.f32.mrb[0].mxu0
        %v5135 = vadd.f32 0.0, %v5134
        %v5136 = vpop.f32.mrb[0].mxu0
        %5137 = vmatprep.mubr.bf16.mxu0 0
        %5138 = vmatmul.mubr.bf16.gmra.mrb[0].mxu0 %v4934
        %v5139 = vpop.f32.mrb[0].mxu0
        %v5140 = vadd.f32 0.0, %v5139
        %v5141 = vpop.f32.mrb[0].mxu0
        %v5142 = vpop.f32.mrb[0].mxu0
        %v5143 = vadd.f32 0.0, %v5142
        %v5144 = vpop.f32.mrb[0].mxu0
        %5145 = vmatprep.mubr.bf16.mxu0 0
        %5146 = vmatmul.mubr.bf16.gmra.mrb[0].mxu0 %v4935
        %v5147 = vpop.f32.mrb[0].mxu0
        %v5148 = vadd.f32 0.0, %v5147
        %v5149 = vpop.f32.mrb[0].mxu0
        %v5150 = vpop.f32.mrb[0].mxu0
        %v5151 = vadd.f32 0.0, %v5150
        %v5152 = vpop.f32.mrb[0].mxu0
        %5153 = vmatprep.mubr.bf16.mxu0 0
        %5154 = vmatmul.mubr.bf16.gmra.mrb[0].mxu0 %v4936
        %v5155 = vpop.f32.mrb[0].mxu0
        %v5156 = vadd.f32 0.0, %v5155
        %v5157 = vpop.f32.mrb[0].mxu0
        %v5158 = vpop.f32.mrb[0].mxu0
        %v5159 = vadd.f32 0.0, %v5158
        %v5160 = vpop.f32.mrb[0].mxu0
        %5161 = vdwg.mxu0
        %v5162 = vadd.f32 %v4661, %v5036
        %v5163 = vadd.f32 %v4662, %v5039
        %v5164 = vadd.f32 %v4663, %v5044
        %v5165 = vadd.f32 %v4664, %v5047
        %v5166 = vadd.f32 %v4665, %v5052
        %v5167 = vadd.f32 %v4666, %v5055
        %v5168 = vadd.f32 %v4667, %v5060
        %v5169 = vadd.f32 %v4668, %v5063
        %v5170 = vadd.f32 %v4669, %v5068
        %v5171 = vadd.f32 %v4670, %v5071
        %v5172 = vadd.f32 %v4671, %v5076
        %v5173 = vadd.f32 %v4672, %v5079
        %v5174 = vadd.f32 %v4673, %v5084
        %v5175 = vadd.f32 %v4674, %v5087
        %v5176 = vadd.f32 %v4675, %v5092
        %v5177 = vadd.f32 %v4676, %v5095
        %v5178 = vadd.f32 %v4677, %v5100
        %v5179 = vadd.f32 %v4678, %v5103
        %v5180 = vadd.f32 %v4679, %v5108
        %v5181 = vadd.f32 %v4680, %v5111
        %v5182 = vadd.f32 %v4681, %v5116
        %v5183 = vadd.f32 %v4682, %v5119
        %v5184 = vadd.f32 %v4683, %v5124
        %v5185 = vadd.f32 %v4684, %v5127
        %v5186 = vadd.f32 %v4685, %v5132
        %v5187 = vadd.f32 %v4686, %v5135
        %v5188 = vadd.f32 %v4687, %v5140
        %v5189 = vadd.f32 %v4688, %v5143
        %v5190 = vadd.f32 %v4689, %v5148
        %v5191 = vadd.f32 %v4690, %v5151
        %v5192 = vadd.f32 %v4691, %v5156
        %v5193 = vadd.f32 %v4692, %v5159
        %s5194 = scalar_lea.vmem %s6, %s31
        %v5195 = vld [vmem:[%s5194] sm:$0x1]
        %v5197 = vlaneseq
        %v5198 = vshrl.u32 %v5197, 7
        %v5199 = vsub.s32 0, %v5198
        %v5200 = vrot.slane %v5195, %v5199
        %v5202 = vadd.f32 %v5162, %v5200
        %v5203 = vadd.f32 %v5163, %v5200
        %v5204 = vadd.f32 %v5164, %v5200
        %v5205 = vadd.f32 %v5165, %v5200
        %v5206 = vadd.f32 %v5166, %v5200
        %v5207 = vadd.f32 %v5167, %v5200
        %v5208 = vadd.f32 %v5168, %v5200
        %v5209 = vadd.f32 %v5169, %v5200
        %v5210 = vadd.f32 %v5170, %v5200
        %v5211 = vadd.f32 %v5171, %v5200
        %v5212 = vadd.f32 %v5172, %v5200
        %v5213 = vadd.f32 %v5173, %v5200
        %v5214 = vadd.f32 %v5174, %v5200
        %v5215 = vadd.f32 %v5175, %v5200
        %v5216 = vadd.f32 %v5176, %v5200
        %v5217 = vadd.f32 %v5177, %v5200
        %v5218 = vadd.f32 %v5178, %v5200
        %v5219 = vadd.f32 %v5179, %v5200
        %v5220 = vadd.f32 %v5180, %v5200
        %v5221 = vadd.f32 %v5181, %v5200
        %v5222 = vadd.f32 %v5182, %v5200
        %v5223 = vadd.f32 %v5183, %v5200
        %v5224 = vadd.f32 %v5184, %v5200
        %v5225 = vadd.f32 %v5185, %v5200
        %v5226 = vadd.f32 %v5186, %v5200
        %v5227 = vadd.f32 %v5187, %v5200
        %v5228 = vadd.f32 %v5188, %v5200
        %v5229 = vadd.f32 %v5189, %v5200
        %v5230 = vadd.f32 %v5190, %v5200
        %v5231 = vadd.f32 %v5191, %v5200
        %v5232 = vadd.f32 %v5192, %v5200
        %v5233 = vadd.f32 %v5193, %v5200
        // Predicated region
        $region69: #{tpu_custom_call.1} parent=47 // pred_check
          %p5234 = pneg %p688
        $region70: #{tpu_custom_call.1} parent=47 // pred_check_branch
          %5236 = sbr.rel (%p5234) target = $region72
        $region71: #{tpu_custom_call.1} parent=47 // pred_region
          %5237 = vst [vmem:[%s356] sm:$0xff] %v5202
          %5238 = vst [vmem:[%s356 + $0x8] sm:$0xff] %v5203
          %5239 = vst [vmem:[%s356 + $0x10] sm:$0xff] %v5204
          %5240 = vst [vmem:[%s356 + $0x18] sm:$0xff] %v5205
          %5241 = vst [vmem:[%s356 + $0x20] sm:$0xff] %v5206
          %5242 = vst [vmem:[%s356 + $0x28] sm:$0xff] %v5207
          %5243 = vst [vmem:[%s356 + $0x30] sm:$0xff] %v5208
          %5244 = vst [vmem:[%s356 + $0x38] sm:$0xff] %v5209
          %5245 = vst [vmem:[%s356 + $0x40] sm:$0xff] %v5210
          %5246 = vst [vmem:[%s356 + $0x48] sm:$0xff] %v5211
          %5247 = vst [vmem:[%s356 + $0x50] sm:$0xff] %v5212
          %5248 = vst [vmem:[%s356 + $0x58] sm:$0xff] %v5213
          %5249 = vst [vmem:[%s356 + $0x60] sm:$0xff] %v5214
          %5250 = vst [vmem:[%s356 + $0x68] sm:$0xff] %v5215
          %5251 = vst [vmem:[%s356 + $0x70] sm:$0xff] %v5216
          %5252 = vst [vmem:[%s356 + $0x78] sm:$0xff] %v5217
          %5253 = vst [vmem:[%s356 + $0x80] sm:$0xff] %v5218
          %5254 = vst [vmem:[%s356 + $0x88] sm:$0xff] %v5219
          %5255 = vst [vmem:[%s356 + $0x90] sm:$0xff] %v5220
          %5256 = vst [vmem:[%s356 + $0x98] sm:$0xff] %v5221
          %5257 = vst [vmem:[%s356 + $0xa0] sm:$0xff] %v5222
          %5258 = vst [vmem:[%s356 + $0xa8] sm:$0xff] %v5223
          %5259 = vst [vmem:[%s356 + $0xb0] sm:$0xff] %v5224
          %5260 = vst [vmem:[%s356 + $0xb8] sm:$0xff] %v5225
          %5261 = vst [vmem:[%s356 + $0xc0] sm:$0xff] %v5226
          %5262 = vst [vmem:[%s356 + $0xc8] sm:$0xff] %v5227
          %5263 = vst [vmem:[%s356 + $0xd0] sm:$0xff] %v5228
          %5264 = vst [vmem:[%s356 + $0xd8] sm:$0xff] %v5229
          %5265 = vst [vmem:[%s356 + $0xe0] sm:$0xff] %v5230
          %5266 = vst [vmem:[%s356 + $0xe8] sm:$0xff] %v5231
          %5267 = vst [vmem:[%s356 + $0xf0] sm:$0xff] %v5232
          %5268 = vst [vmem:[%s356 + $0xf8] sm:$0xff] %v5233
        $region72: #{tpu_custom_call.1} parent=47 // pred_fallthru
          _
        %p5269 = scmp.ne.s32.totalorder %s31, 0
        // Predicated region
        $region73: #{tpu_custom_call.1} parent=47 // pred_check
          %p5270 = pneg %p5269
        $region74: #{tpu_custom_call.1} parent=47 // pred_check_branch
          %5272 = sbr.rel (%p5270) target = $region76
        $region75: #{tpu_custom_call.1} parent=47 // pred_region
          %v5273 = vld [vmem:[%s356] sm:$0xff]
          %v5274 = vld [vmem:[%s356 + $0x8] sm:$0xff]
          %v5275 = vld [vmem:[%s356 + $0x10] sm:$0xff]
          %v5276 = vld [vmem:[%s356 + $0x18] sm:$0xff]
          %v5277 = vld [vmem:[%s356 + $0x20] sm:$0xff]
          %v5278 = vld [vmem:[%s356 + $0x28] sm:$0xff]
          %v5279 = vld [vmem:[%s356 + $0x30] sm:$0xff]
          %v5280 = vld [vmem:[%s356 + $0x38] sm:$0xff]
          %v5281 = vld [vmem:[%s356 + $0x40] sm:$0xff]
          %v5282 = vld [vmem:[%s356 + $0x48] sm:$0xff]
          %v5283 = vld [vmem:[%s356 + $0x50] sm:$0xff]
          %v5284 = vld [vmem:[%s356 + $0x58] sm:$0xff]
          %v5285 = vld [vmem:[%s356 + $0x60] sm:$0xff]
          %v5286 = vld [vmem:[%s356 + $0x68] sm:$0xff]
          %v5287 = vld [vmem:[%s356 + $0x70] sm:$0xff]
          %v5288 = vld [vmem:[%s356 + $0x78] sm:$0xff]
          %v5289 = vld [vmem:[%s356 + $0x80] sm:$0xff]
          %v5290 = vld [vmem:[%s356 + $0x88] sm:$0xff]
          %v5291 = vld [vmem:[%s356 + $0x90] sm:$0xff]
          %v5292 = vld [vmem:[%s356 + $0x98] sm:$0xff]
          %v5293 = vld [vmem:[%s356 + $0xa0] sm:$0xff]
          %v5294 = vld [vmem:[%s356 + $0xa8] sm:$0xff]
          %v5295 = vld [vmem:[%s356 + $0xb0] sm:$0xff]
          %v5296 = vld [vmem:[%s356 + $0xb8] sm:$0xff]
          %v5297 = vld [vmem:[%s356 + $0xc0] sm:$0xff]
          %v5298 = vld [vmem:[%s356 + $0xc8] sm:$0xff]
          %v5299 = vld [vmem:[%s356 + $0xd0] sm:$0xff]
          %v5300 = vld [vmem:[%s356 + $0xd8] sm:$0xff]
          %v5301 = vld [vmem:[%s356 + $0xe0] sm:$0xff]
          %v5302 = vld [vmem:[%s356 + $0xe8] sm:$0xff]
          %v5303 = vld [vmem:[%s356 + $0xf0] sm:$0xff]
          %v5304 = vld [vmem:[%s356 + $0xf8] sm:$0xff]
          %v5305 = vadd.f32 %v5273, %v5202
          %v5306 = vadd.f32 %v5274, %v5203
          %v5307 = vadd.f32 %v5275, %v5204
          %v5308 = vadd.f32 %v5276, %v5205
          %v5309 = vadd.f32 %v5277, %v5206
          %v5310 = vadd.f32 %v5278, %v5207
          %v5311 = vadd.f32 %v5279, %v5208
          %v5312 = vadd.f32 %v5280, %v5209
          %v5313 = vadd.f32 %v5281, %v5210
          %v5314 = vadd.f32 %v5282, %v5211
          %v5315 = vadd.f32 %v5283, %v5212
          %v5316 = vadd.f32 %v5284, %v5213
          %v5317 = vadd.f32 %v5285, %v5214
          %v5318 = vadd.f32 %v5286, %v5215
          %v5319 = vadd.f32 %v5287, %v5216
          %v5320 = vadd.f32 %v5288, %v5217
          %v5321 = vadd.f32 %v5289, %v5218
          %v5322 = vadd.f32 %v5290, %v5219
          %v5323 = vadd.f32 %v5291, %v5220
          %v5324 = vadd.f32 %v5292, %v5221
          %v5325 = vadd.f32 %v5293, %v5222
          %v5326 = vadd.f32 %v5294, %v5223
          %v5327 = vadd.f32 %v5295, %v5224
          %v5328 = vadd.f32 %v5296, %v5225
          %v5329 = vadd.f32 %v5297, %v5226
          %v5330 = vadd.f32 %v5298, %v5227
          %v5331 = vadd.f32 %v5299, %v5228
          %v5332 = vadd.f32 %v5300, %v5229
          %v5333 = vadd.f32 %v5301, %v5230
          %v5334 = vadd.f32 %v5302, %v5231
          %v5335 = vadd.f32 %v5303, %v5232
          %v5336 = vadd.f32 %v5304, %v5233
          %5337 = vst [vmem:[%s356] sm:$0xff] %v5305
          %5338 = vst [vmem:[%s356 + $0x8] sm:$0xff] %v5306
          %5339 = vst [vmem:[%s356 + $0x10] sm:$0xff] %v5307
          %5340 = vst [vmem:[%s356 + $0x18] sm:$0xff] %v5308
          %5341 = vst [vmem:[%s356 + $0x20] sm:$0xff] %v5309
          %5342 = vst [vmem:[%s356 + $0x28] sm:$0xff] %v5310
          %5343 = vst [vmem:[%s356 + $0x30] sm:$0xff] %v5311
          %5344 = vst [vmem:[%s356 + $0x38] sm:$0xff] %v5312
          %5345 = vst [vmem:[%s356 + $0x40] sm:$0xff] %v5313
          %5346 = vst [vmem:[%s356 + $0x48] sm:$0xff] %v5314
          %5347 = vst [vmem:[%s356 + $0x50] sm:$0xff] %v5315
          %5348 = vst [vmem:[%s356 + $0x58] sm:$0xff] %v5316
          %5349 = vst [vmem:[%s356 + $0x60] sm:$0xff] %v5317
          %5350 = vst [vmem:[%s356 + $0x68] sm:$0xff] %v5318
          %5351 = vst [vmem:[%s356 + $0x70] sm:$0xff] %v5319
          %5352 = vst [vmem:[%s356 + $0x78] sm:$0xff] %v5320
          %5353 = vst [vmem:[%s356 + $0x80] sm:$0xff] %v5321
          %5354 = vst [vmem:[%s356 + $0x88] sm:$0xff] %v5322
          %5355 = vst [vmem:[%s356 + $0x90] sm:$0xff] %v5323
          %5356 = vst [vmem:[%s356 + $0x98] sm:$0xff] %v5324
          %5357 = vst [vmem:[%s356 + $0xa0] sm:$0xff] %v5325
          %5358 = vst [vmem:[%s356 + $0xa8] sm:$0xff] %v5326
          %5359 = vst [vmem:[%s356 + $0xb0] sm:$0xff] %v5327
          %5360 = vst [vmem:[%s356 + $0xb8] sm:$0xff] %v5328
          %5361 = vst [vmem:[%s356 + $0xc0] sm:$0xff] %v5329
          %5362 = vst [vmem:[%s356 + $0xc8] sm:$0xff] %v5330
          %5363 = vst [vmem:[%s356 + $0xd0] sm:$0xff] %v5331
          %5364 = vst [vmem:[%s356 + $0xd8] sm:$0xff] %v5332
          %5365 = vst [vmem:[%s356 + $0xe0] sm:$0xff] %v5333
          %5366 = vst [vmem:[%s356 + $0xe8] sm:$0xff] %v5334
          %5367 = vst [vmem:[%s356 + $0xf0] sm:$0xff] %v5335
          %5368 = vst [vmem:[%s356 + $0xf8] sm:$0xff] %v5336
        $region76: #{tpu_custom_call.1} parent=47 // pred_fallthru
          _
        %s5369 = sand.u32 %s200, 1
        %s5370 = scalar_lea.sflag [#allocation5], %s5369
        %s5371 = sand.u32 %s200, 1
        %s5372 = smul.addr %s5371, 256
        %s5373 = scalar_lea.vmem [#allocation11], %s5372
        // Predicated region
        $region77: #{tpu_custom_call.1} parent=47 // pred_check
          %p5374 = pneg %p210
        $region78: #{tpu_custom_call.1} parent=47 // pred_check_branch
          %5376 = sbr.rel (%p5374) target = $region80
        $region79: #{tpu_custom_call.1} parent=47 // pred_region
          %s5378 = ssub.s32 4096, 4096
          %5379 = vsyncadd %s5370, %s5378
          %s5380 = smul.addr %s30, 32
          %s5381 = smul.addr %s5380, 128
          %s5382 = scalar_lea.hbm %s7, %s5381
          %s5383 = sshll.u32 %s5373, 4
          %s5384 = int_to_ptr.vmem [resolvable:$true] %s5383
          %5389 = dma.vmem_to_hbm [thread:$0]  %s5384, 4096, %s5382, %s5370, 128, 128, 8
        $region80: #{tpu_custom_call.1} parent=47 // pred_fallthru
          _
      $region48: #{tpu_custom_call.1} parent=5 // pred_fallthru
        _
      %p5390 = scmp.le.s32.totalorder 2, %s21
      // Predicated region
      $region81: #{tpu_custom_call.1} parent=5 // pred_check
        %p5391 = pneg %p5390
      $region82: #{tpu_custom_call.1} parent=5 // pred_check_branch
        %5393 = sbr.rel (%p5391) target = $region84
      $region83: #{tpu_custom_call.1} parent=5 // pred_region
        %s5394 = ssub.s32 %s21, 2
        // Predicated region
        $region85: #{tpu_custom_call.1} parent=83 // pred_check
          %p5395 = pneg %p216
        $region86: #{tpu_custom_call.1} parent=83 // pred_check_branch
          %5397 = sbr.rel (%p5395) target = $region88
        $region87: #{tpu_custom_call.1} parent=83 // pred_region
          %s5398 = sand.u32 %s201, 1
          %s5399 = scalar_lea.sflag [#allocation5], %s5398
          %s5400 = sand.u32 %s201, 1
          %s5401 = smul.addr %s5400, 256
          %s5402 = scalar_lea.vmem [#allocation11], %s5401
          %5403 = dma.done %s5399, 4096
        $region88: #{tpu_custom_call.1} parent=83 // pred_fallthru
          _
      $region84: #{tpu_custom_call.1} parent=5 // pred_fallthru
        _
    $region6: #{tpu_custom_call.1} parent=1 // loop_footer
      %s25 = sadd.s32 1, %s21
    $region7: #{tpu_custom_call.1} parent=1 // loop_footer_branch
      %20 = sbr.rel target = $region3
    $region8: #{tpu_custom_call.1} parent=1 // loop_exit
      _
    %5404 = vsyncpa [#allocation4], 1
    %s5405 = scalar_lea.sflag [#allocation4], 1
    %5406 = vsyncpa %s5405, 1
    %5407 = vsyncpa [#allocation7], 1
    %5408 = vsyncpa [#allocation10], 1
    %5409 = vsyncpa [#allocation5], 1
    %s5410 = scalar_lea.sflag [#allocation5], 1
    %5411 = vsyncpa %s5410, 1

</llo_original>
